<compile_context>
chip_gen: v7x
topology: tpu7x:2x2x1
jax: 0.10.0
libtpu: 0.0.40
codegen_flags: <defaults>
</compile_context>

<pallas_src>
import jax
import jax.numpy as jnp
from jax.experimental import pallas as pl
from jax.experimental.pallas import tpu as pltpu

EPS = 1e-5  # nn.BatchNorm2d default

_VMEM = pl.BlockSpec(memory_space=pltpu.MemorySpace.VMEM)


# ----------------------------- small helpers ----------------------------------

def _conv_out_size(size, k, stride, pad):
    return (size + 2 * pad - k) // stride + 1


def _patch(ref, kh, kw, ho, wo, stride):
    """(N, ho, wo, C) window of a (padded) NHWC ref at tap (kh, kw) with stride."""
    if stride == 1:
        return ref[:, kh:kh + ho, kw:kw + wo, :]
    return ref[:, pl.ds(kh, ho, stride), pl.ds(kw, wo, stride), :]


def _im2col(pad_ref, KH, KW, ho, wo, stride, n, c):
    """Concatenate all KH*KW shifted/strided taps on the lane (channel) axis."""
    m = n * ho * wo
    cols = [_patch(pad_ref, kh, kw, ho, wo, stride).reshape(m, c)
            for kh in range(KH) for kw in range(KW)]
    return cols[0] if len(cols) == 1 else jnp.concatenate(cols, axis=-1)


def _bn_relu(h, gamma, beta):
    """Training-mode BatchNorm (biased batch variance) + ReLU on an (M, C) f32 slab.

    Per-channel sums use the MXU (ones-vector matmuls); variance is the two-pass
    centered form to avoid E[x^2]-mean^2 cancellation.
    """
    m = h.shape[0]
    ones = jnp.ones((1, m), jnp.float32)
    mean = jnp.dot(ones, h, preferred_element_type=jnp.float32) * (1.0 / m)
    centered = h - mean
    var = jnp.dot(ones, centered * centered,
                  preferred_element_type=jnp.float32) * (1.0 / m)
    inv = jax.lax.rsqrt(var + EPS)
    return jnp.maximum(centered * (inv * gamma) + beta, 0.0)


# ----------------------------- fused Pallas kernel -----------------------------

def _make_residual_block_kernel(N, H, W, Cin, Cout, KH, KW, stride, pad,
                                Ho, Wo, H2, W2, has_ds, cdtype):
    """conv1 -> BN -> ReLU -> conv2 -> (+ 1x1 strided downsample) -> BN -> ReLU."""

    def kernel(x_ref, w1_ref, w2_ref, *rest):
        if has_ds:
            wds_ref, g_ref, b_ref, o_ref, xpad_ref, fpad_ref = rest
        else:
            g_ref, b_ref, o_ref, xpad_ref, fpad_ref = rest

        gamma = g_ref[...]
        beta = b_ref[...]

        # ---- conv1 (stride folded into the patch gather) + BN + ReLU ---------
        xpad_ref[...] = jnp.zeros_like(xpad_ref)          # zero-fill halo once
        xpad_ref[:, pad:pad + H, pad:pad + W, :] = x_ref[...]

        cols1 = _im2col(xpad_ref, KH, KW, Ho, Wo, stride, N, Cin)   # (M1, KH*KW*Cin)
        h1 = jnp.dot(cols1.astype(cdtype), w1_ref[...],
                     preferred_element_type=jnp.float32)            # (M1, Cout) f32
        f = _bn_relu(h1, gamma, beta)                               # (M1, Cout) f32

        # ---- conv2 (stride 1) on f, still entirely in VMEM -------------------
        fpad_ref[...] = jnp.zeros_like(fpad_ref)
        fpad_ref[:, pad:pad + Ho, pad:pad + Wo, :] = f.reshape(N, Ho, Wo, Cout)

        cols2 = _im2col(fpad_ref, KH, KW, H2, W2, 1, N, Cout)       # (M2, KH*KW*Cout)
        h2 = jnp.dot(cols2.astype(cdtype), w2_ref[...],
                     preferred_element_type=jnp.float32)            # (M2, Cout) f32

        # ---- identity path: 1x1 strided downsample (or plain skip) -----------
        m2 = N * H2 * W2
        if has_ds:
            xs = _patch(x_ref, 0, 0, H2, W2, stride).reshape(m2, Cin)
            ident = jnp.dot(xs.astype(cdtype), wds_ref[...],
                            preferred_element_type=jnp.float32)
        else:  # Cin == Cout, same spatial size
            ident = x_ref[...].reshape(m2, Cin).astype(jnp.float32)

        # ---- residual add + final BN + ReLU ----------------------------------
        o_ref[...] = _bn_relu(h2 + ident, gamma, beta)

    return kernel


# ----------------------------- forward wrappers --------------------------------

def _oihw_to_matrix(w):
    """PyTorch OIHW conv weight -> (KH*KW*I, O) matrix matching the im2col order."""
    o, i, kh, kw = w.shape
    return jnp.transpose(w, (2, 3, 1, 0)).reshape(kh * kw * i, o)


def residual_block_forward_nhwc(x, w1_oihw, w2_oihw, gamma, beta, wds_oihw=None,
                                *, stride, padding, compute_dtype=jnp.bfloat16):
    """x: (N, H, W, Cin) float32 NHWC.  Returns (N, H2, W2, Cout) float32 NHWC."""
    N, H, W, Cin = x.shape
    Cout, _, KH, KW = w1_oihw.shape

    Ho = _conv_out_size(H, KH, stride, padding)
    Wo = _conv_out_size(W, KW, stride, padding)
    H2 = _conv_out_size(Ho, KH, 1, padding)
    W2 = _conv_out_size(Wo, KW, 1, padding)
    has_ds = stride != 1
    if has_ds:
        assert wds_oihw is not None
        assert ((H - 1) // stride + 1, (W - 1) // stride + 1) == (H2, W2)
    else:
        assert (H, W) == (H2, W2) and Cin == Cout

    x = x.astype(jnp.float32)
    w1m = _oihw_to_matrix(w1_oihw).astype(compute_dtype)
    w2m = _oihw_to_matrix(w2_oihw).astype(compute_dtype)
    g = gamma.reshape(1, Cout).astype(jnp.float32)
    b = beta.reshape(1, Cout).astype(jnp.float32)

    args = [x, w1m, w2m]
    if has_ds:
        args.append(_oihw_to_matrix(wds_oihw).astype(compute_dtype))  # (Cin, Cout)
    args += [g, b]

    out_flat = pl.pallas_call(
        _make_residual_block_kernel(N, H, W, Cin, Cout, KH, KW, stride, padding,
                                    Ho, Wo, H2, W2, has_ds, compute_dtype),
        out_shape=jax.ShapeDtypeStruct((N * H2 * W2, Cout), jnp.float32),
        in_specs=[_VMEM] * len(args),
        out_specs=_VMEM,
        scratch_shapes=[
            pltpu.VMEM((N, H + 2 * padding, W + 2 * padding, Cin), jnp.float32),
            pltpu.VMEM((N, Ho + 2 * padding, Wo + 2 * padding, Cout), jnp.float32),
        ],
    )(*args)
    return out_flat.reshape(N, H2, W2, Cout)   # row-major reshape, no data movement


def residual_block_forward(x_nchw, w1_oihw, w2_oihw, gamma, beta, wds_oihw=None,
                           *, stride, padding, compute_dtype=jnp.bfloat16):
    """PyTorch-facing NCHW wrapper (layout transposed only at the module boundary)."""
    x = jnp.transpose(x_nchw, (0, 2, 3, 1))
    out = residual_block_forward_nhwc(x, w1_oihw, w2_oihw, gamma, beta, wds_oihw,
                                      stride=stride, padding=padding,
                                      compute_dtype=compute_dtype)
    return jnp.transpose(out, (0, 3, 1, 2))


# ----------------------------- pure-JAX reference ------------------------------

def reference_forward(x, w1_oihw, w2_oihw, gamma, beta, wds_oihw, *, stride, padding):
    dn = ('NCHW', 'OIHW', 'NCHW')
    conv = lambda inp, w, s, p: jax.lax.conv_general_dilated(
        inp, w, (s, s), [(p, p), (p, p)], dimension_numbers=dn,
        precision=jax.lax.Precision.HIGHEST)

    def bn(h):
        m = h.mean(axis=(0, 2, 3), keepdims=True)
        v = ((h - m) ** 2).mean(axis=(0, 2, 3), keepdims=True)
        return (h - m) / jnp.sqrt(v + EPS) * gamma.reshape(1, -1, 1, 1) \
               + beta.reshape(1, -1, 1, 1)

    out1 = conv(x, w1_oihw, stride, padding)
    f = jax.nn.relu(bn(out1))
    f = conv(f, w2_oihw, 1, padding)
    ident = conv(x, wds_oihw, stride, 0) if stride != 1 else x
    return jax.nn.relu(bn(f + ident))


# ----------------------------- demo ---------------------------------------------

if __name__ == "__main__":
    # ResidualBlock(in_channels=4, out_channels=8, kernel_size=3, stride=2, padding=1)
    N, Cin, Cout, H, W = 2, 4, 8, 16, 16
    K, stride, padding = 3, 2, 1

    key = jax.random.PRNGKey(0)
    kx, k1, k2, kg, kb, kd = jax.random.split(key, 6)

    x = jax.random.normal(kx, (N, Cin, H, W), jnp.float32)
    w1 = 0.1 * jax.random.normal(k1, (Cout, Cin, K, K), jnp.float32)     # OIHW
    w2 = 0.1 * jax.random.normal(k2, (Cout, Cout, K, K), jnp.float32)    # OIHW
    wds = 0.1 * jax.random.normal(kd, (Cout, Cin, 1, 1), jnp.float32)    # OIHW
    gamma = 1.0 + 0.1 * jax.random.normal(kg, (Cout,), jnp.float32)
    beta = 0.1 * jax.random.normal(kb, (Cout,), jnp.float32)

    ref = reference_forward(x, w1, w2, gamma, beta, wds, stride=stride, padding=padding)

    # bf16 MXU operands (default fast path).  Tolerance set for bf16 operand rounding
    # through two convs + batch-norm normalization.
    out = residual_block_forward(x, w1, w2, gamma, beta, wds,
                                 stride=stride, padding=padding,
                                 compute_dtype=jnp.bfloat16)
    out = jax.block_until_ready(out)
    assert out.shape == ref.shape == (N, Cout, H // stride, W // stride)
    assert jnp.allclose(out, ref, atol=5e-2, rtol=5e-2), \
        f"bf16 max abs err = {float(jnp.max(jnp.abs(out - ref)))}"

    # f32 operands: tighter validation of the kernel math itself.
    out32 = residual_block_forward(x, w1, w2, gamma, beta, wds,
                                   stride=stride, padding=padding,
                                   compute_dtype=jnp.float32)
    out32 = jax.block_until_ready(out32)
    assert jnp.allclose(out32, ref, atol=2e-2, rtol=2e-2), \
        f"f32 max abs err = {float(jnp.max(jnp.abs(out32 - ref)))}"

    print("KERNEL_OK")
</pallas_src>

<mosaic_0001>
module attributes {stable_mosaic.version = 11 : i64} {
  func.func @kernel(%arg0: memref<2x16x16x4xf32, #tpu.memory_space<vmem>>, %arg1: memref<36x8xbf16, #tpu.memory_space<vmem>>, %arg2: memref<72x8xbf16, #tpu.memory_space<vmem>>, %arg3: memref<4x8xbf16, #tpu.memory_space<vmem>>, %arg4: memref<1x8xf32, #tpu.memory_space<vmem>>, %arg5: memref<1x8xf32, #tpu.memory_space<vmem>>, %arg6: memref<128x8xf32, #tpu.memory_space<vmem>>, %arg7: memref<2x18x18x4xf32, #tpu.memory_space<vmem>>, %arg8: memref<2x10x10x8xf32, #tpu.memory_space<vmem>>) attributes {dimension_semantics = [], scalar_prefetch = 0 : i64, scratch_operands = 2 : i64, tpu.core_type = #tpu.core_type<tc>} {
    %c0 = arith.constant 0 : index
    %c0_0 = arith.constant 0 : index
    %0 = vector.load %arg4[%c0, %c0_0] : memref<1x8xf32, #tpu.memory_space<vmem>>, vector<1x8xf32>
    %c0_1 = arith.constant 0 : index
    %c0_2 = arith.constant 0 : index
    %1 = vector.load %arg5[%c0_1, %c0_2] : memref<1x8xf32, #tpu.memory_space<vmem>>, vector<1x8xf32>
    %cst = arith.constant 0.000000e+00 : f32
    %2 = vector.broadcast %cst : f32 to vector<2x18x18x4xf32>
    %c0_3 = arith.constant 0 : index
    %c0_4 = arith.constant 0 : index
    %c0_5 = arith.constant 0 : index
    %c0_6 = arith.constant 0 : index
    %3 = vector.load %arg7[%c0_3, %c0_4, %c0_5, %c0_6] : memref<2x18x18x4xf32, #tpu.memory_space<vmem>>, vector<2x18x18x4xf32>
    tpu.vector_store %arg7[%c0_3, %c0_4, %c0_5, %c0_6], %2 {strides = array<i32>} : memref<2x18x18x4xf32, #tpu.memory_space<vmem>>, vector<2x18x18x4xf32>,
    %c0_7 = arith.constant 0 : index
    %c0_8 = arith.constant 0 : index
    %c0_9 = arith.constant 0 : index
    %c0_10 = arith.constant 0 : index
    %4 = vector.load %arg0[%c0_7, %c0_8, %c0_9, %c0_10] : memref<2x16x16x4xf32, #tpu.memory_space<vmem>>, vector<2x16x16x4xf32>
    %c0_11 = arith.constant 0 : index
    %c1 = arith.constant 1 : index
    %c1_12 = arith.constant 1 : index
    %c0_13 = arith.constant 0 : index
    %5 = vector.load %arg7[%c0_11, %c1, %c1_12, %c0_13] : memref<2x18x18x4xf32, #tpu.memory_space<vmem>>, vector<2x16x16x4xf32>
    tpu.vector_store %arg7[%c0_11, %c1, %c1_12, %c0_13], %4 {strides = array<i32>} : memref<2x18x18x4xf32, #tpu.memory_space<vmem>>, vector<2x16x16x4xf32>,
    %c0_14 = arith.constant 0 : index
    %c0_15 = arith.constant 0 : index
    %c0_16 = arith.constant 0 : index
    %c0_17 = arith.constant 0 : index
    %6 = tpu.strided_load %arg7[%c0_14, %c0_15, %c0_16, %c0_17] {strides = array<i32: 1, 2, 2, 1>} : memref<2x18x18x4xf32, #tpu.memory_space<vmem>>, vector<2x8x8x4xf32>
    %7 = vector.shape_cast %6 : vector<2x8x8x4xf32> to vector<128x4xf32>
    %c0_18 = arith.constant 0 : index
    %c0_19 = arith.constant 0 : index
    %c1_20 = arith.constant 1 : index
    %c0_21 = arith.constant 0 : index
    %8 = tpu.strided_load %arg7[%c0_18, %c0_19, %c1_20, %c0_21] {strides = array<i32: 1, 2, 2, 1>} : memref<2x18x18x4xf32, #tpu.memory_space<vmem>>, vector<2x8x8x4xf32>
    %9 = vector.shape_cast %8 : vector<2x8x8x4xf32> to vector<128x4xf32>
    %c0_22 = arith.constant 0 : index
    %c0_23 = arith.constant 0 : index
    %c2 = arith.constant 2 : index
    %c0_24 = arith.constant 0 : index
    %10 = tpu.strided_load %arg7[%c0_22, %c0_23, %c2, %c0_24] {strides = array<i32: 1, 2, 2, 1>} : memref<2x18x18x4xf32, #tpu.memory_space<vmem>>, vector<2x8x8x4xf32>
    %11 = vector.shape_cast %10 : vector<2x8x8x4xf32> to vector<128x4xf32>
    %c0_25 = arith.constant 0 : index
    %c1_26 = arith.constant 1 : index
    %c0_27 = arith.constant 0 : index
    %c0_28 = arith.constant 0 : index
    %12 = tpu.strided_load %arg7[%c0_25, %c1_26, %c0_27, %c0_28] {strides = array<i32: 1, 2, 2, 1>} : memref<2x18x18x4xf32, #tpu.memory_space<vmem>>, vector<2x8x8x4xf32>
    %13 = vector.shape_cast %12 : vector<2x8x8x4xf32> to vector<128x4xf32>
    %c0_29 = arith.constant 0 : index
    %c1_30 = arith.constant 1 : index
    %c1_31 = arith.constant 1 : index
    %c0_32 = arith.constant 0 : index
    %14 = tpu.strided_load %arg7[%c0_29, %c1_30, %c1_31, %c0_32] {strides = array<i32: 1, 2, 2, 1>} : memref<2x18x18x4xf32, #tpu.memory_space<vmem>>, vector<2x8x8x4xf32>
    %15 = vector.shape_cast %14 : vector<2x8x8x4xf32> to vector<128x4xf32>
    %c0_33 = arith.constant 0 : index
    %c1_34 = arith.constant 1 : index
    %c2_35 = arith.constant 2 : index
    %c0_36 = arith.constant 0 : index
    %16 = tpu.strided_load %arg7[%c0_33, %c1_34, %c2_35, %c0_36] {strides = array<i32: 1, 2, 2, 1>} : memref<2x18x18x4xf32, #tpu.memory_space<vmem>>, vector<2x8x8x4xf32>
    %17 = vector.shape_cast %16 : vector<2x8x8x4xf32> to vector<128x4xf32>
    %c0_37 = arith.constant 0 : index
    %c2_38 = arith.constant 2 : index
    %c0_39 = arith.constant 0 : index
    %c0_40 = arith.constant 0 : index
    %18 = tpu.strided_load %arg7[%c0_37, %c2_38, %c0_39, %c0_40] {strides = array<i32: 1, 2, 2, 1>} : memref<2x18x18x4xf32, #tpu.memory_space<vmem>>, vector<2x8x8x4xf32>
    %19 = vector.shape_cast %18 : vector<2x8x8x4xf32> to vector<128x4xf32>
    %c0_41 = arith.constant 0 : index
    %c2_42 = arith.constant 2 : index
    %c1_43 = arith.constant 1 : index
    %c0_44 = arith.constant 0 : index
    %20 = tpu.strided_load %arg7[%c0_41, %c2_42, %c1_43, %c0_44] {strides = array<i32: 1, 2, 2, 1>} : memref<2x18x18x4xf32, #tpu.memory_space<vmem>>, vector<2x8x8x4xf32>
    %21 = vector.shape_cast %20 : vector<2x8x8x4xf32> to vector<128x4xf32>
    %c0_45 = arith.constant 0 : index
    %c2_46 = arith.constant 2 : index
    %c2_47 = arith.constant 2 : index
    %c0_48 = arith.constant 0 : index
    %22 = tpu.strided_load %arg7[%c0_45, %c2_46, %c2_47, %c0_48] {strides = array<i32: 1, 2, 2, 1>} : memref<2x18x18x4xf32, #tpu.memory_space<vmem>>, vector<2x8x8x4xf32>
    %23 = vector.shape_cast %22 : vector<2x8x8x4xf32> to vector<128x4xf32>
    %24 = tpu.concatenate %7, %9, %11, %13, %15, %17, %19, %21, %23 in 1 : vector<128x4xf32>, vector<128x4xf32>, vector<128x4xf32>, vector<128x4xf32>, vector<128x4xf32>, vector<128x4xf32>, vector<128x4xf32>, vector<128x4xf32>, vector<128x4xf32> -> vector<128x36xf32>
    %25 = arith.truncf %24 : vector<128x36xf32> to vector<128x36xbf16>
    %c0_49 = arith.constant 0 : index
    %c0_50 = arith.constant 0 : index
    %26 = vector.load %arg1[%c0_49, %c0_50] : memref<36x8xbf16, #tpu.memory_space<vmem>>, vector<36x8xbf16>
    %cst_51 = arith.constant dense<0.000000e+00> : vector<128x8xf32>
    %27 = tpu.matmul %25, %26, %cst_51 {dimension_numbers = #tpu.dot_dimension_numbers<[1], [0], [0], [1], [0, 0, 1, 1], [], []>} : vector<128x36xbf16>, vector<36x8xbf16>, vector<128x8xf32> -> vector<128x8xf32>
    %cst_52 = arith.constant 1.000000e+00 : f32
    %28 = vector.broadcast %cst_52 : f32 to vector<1x128xf32>
    %cst_53 = arith.constant dense<0.000000e+00> : vector<1x8xf32>
    %29 = tpu.matmul %28, %27, %cst_53 {dimension_numbers = #tpu.dot_dimension_numbers<[1], [0], [0], [1], [0, 0, 1, 1], [], []>} : vector<1x128xf32>, vector<128x8xf32>, vector<1x8xf32> -> vector<1x8xf32>
    %cst_54 = arith.constant 7.812500e-03 : f32
    %30 = vector.broadcast %cst_54 : f32 to vector<1x8xf32>
    %31 = arith.mulf %29, %30 : vector<1x8xf32>
    %32 = vector.broadcast %31 : vector<1x8xf32> to vector<128x8xf32>
    %33 = arith.subf %27, %32 : vector<128x8xf32>
    %34 = arith.mulf %33, %33 : vector<128x8xf32>
    %cst_55 = arith.constant dense<0.000000e+00> : vector<1x8xf32>
    %35 = tpu.matmul %28, %34, %cst_55 {dimension_numbers = #tpu.dot_dimension_numbers<[1], [0], [0], [1], [0, 0, 1, 1], [], []>} : vector<1x128xf32>, vector<128x8xf32>, vector<1x8xf32> -> vector<1x8xf32>
    %cst_56 = arith.constant 7.812500e-03 : f32
    %36 = vector.broadcast %cst_56 : f32 to vector<1x8xf32>
    %37 = arith.mulf %35, %36 : vector<1x8xf32>
    %cst_57 = arith.constant 9.99999974E-6 : f32
    %38 = vector.broadcast %cst_57 : f32 to vector<1x8xf32>
    %39 = arith.addf %37, %38 : vector<1x8xf32>
    %40 = math.rsqrt %39 : vector<1x8xf32>
    %41 = arith.mulf %40, %0 : vector<1x8xf32>
    %42 = vector.broadcast %41 : vector<1x8xf32> to vector<128x8xf32>
    %43 = arith.mulf %33, %42 : vector<128x8xf32>
    %44 = vector.broadcast %1 : vector<1x8xf32> to vector<128x8xf32>
    %45 = arith.addf %43, %44 : vector<128x8xf32>
    %cst_58 = arith.constant 0.000000e+00 : f32
    %46 = vector.broadcast %cst_58 : f32 to vector<128x8xf32>
    %47 = arith.maximumf %45, %46 : vector<128x8xf32>
    %cst_59 = arith.constant 0.000000e+00 : f32
    %48 = vector.broadcast %cst_59 : f32 to vector<2x10x10x8xf32>
    %c0_60 = arith.constant 0 : index
    %c0_61 = arith.constant 0 : index
    %c0_62 = arith.constant 0 : index
    %c0_63 = arith.constant 0 : index
    %49 = vector.load %arg8[%c0_60, %c0_61, %c0_62, %c0_63] : memref<2x10x10x8xf32, #tpu.memory_space<vmem>>, vector<2x10x10x8xf32>
    tpu.vector_store %arg8[%c0_60, %c0_61, %c0_62, %c0_63], %48 {strides = array<i32>} : memref<2x10x10x8xf32, #tpu.memory_space<vmem>>, vector<2x10x10x8xf32>,
    %50 = vector.shape_cast %47 : vector<128x8xf32> to vector<2x8x8x8xf32>
    %c0_64 = arith.constant 0 : index
    %c1_65 = arith.constant 1 : index
    %c1_66 = arith.constant 1 : index
    %c0_67 = arith.constant 0 : index
    %51 = vector.load %arg8[%c0_64, %c1_65, %c1_66, %c0_67] : memref<2x10x10x8xf32, #tpu.memory_space<vmem>>, vector<2x8x8x8xf32>
    tpu.vector_store %arg8[%c0_64, %c1_65, %c1_66, %c0_67], %50 {strides = array<i32>} : memref<2x10x10x8xf32, #tpu.memory_space<vmem>>, vector<2x8x8x8xf32>,
    %c0_68 = arith.constant 0 : index
    %c0_69 = arith.constant 0 : index
    %c0_70 = arith.constant 0 : index
    %c0_71 = arith.constant 0 : index
    %52 = vector.load %arg8[%c0_68, %c0_69, %c0_70, %c0_71] : memref<2x10x10x8xf32, #tpu.memory_space<vmem>>, vector<2x8x8x8xf32>
    %53 = vector.shape_cast %52 : vector<2x8x8x8xf32> to vector<128x8xf32>
    %c0_72 = arith.constant 0 : index
    %c0_73 = arith.constant 0 : index
    %c1_74 = arith.constant 1 : index
    %c0_75 = arith.constant 0 : index
    %54 = vector.load %arg8[%c0_72, %c0_73, %c1_74, %c0_75] : memref<2x10x10x8xf32, #tpu.memory_space<vmem>>, vector<2x8x8x8xf32>
    %55 = vector.shape_cast %54 : vector<2x8x8x8xf32> to vector<128x8xf32>
    %c0_76 = arith.constant 0 : index
    %c0_77 = arith.constant 0 : index
    %c2_78 = arith.constant 2 : index
    %c0_79 = arith.constant 0 : index
    %56 = vector.load %arg8[%c0_76, %c0_77, %c2_78, %c0_79] : memref<2x10x10x8xf32, #tpu.memory_space<vmem>>, vector<2x8x8x8xf32>
    %57 = vector.shape_cast %56 : vector<2x8x8x8xf32> to vector<128x8xf32>
    %c0_80 = arith.constant 0 : index
    %c1_81 = arith.constant 1 : index
    %c0_82 = arith.constant 0 : index
    %c0_83 = arith.constant 0 : index
    %58 = vector.load %arg8[%c0_80, %c1_81, %c0_82, %c0_83] : memref<2x10x10x8xf32, #tpu.memory_space<vmem>>, vector<2x8x8x8xf32>
    %59 = vector.shape_cast %58 : vector<2x8x8x8xf32> to vector<128x8xf32>
    %c0_84 = arith.constant 0 : index
    %c1_85 = arith.constant 1 : index
    %c1_86 = arith.constant 1 : index
    %c0_87 = arith.constant 0 : index
    %60 = vector.load %arg8[%c0_84, %c1_85, %c1_86, %c0_87] : memref<2x10x10x8xf32, #tpu.memory_space<vmem>>, vector<2x8x8x8xf32>
    %61 = vector.shape_cast %60 : vector<2x8x8x8xf32> to vector<128x8xf32>
    %c0_88 = arith.constant 0 : index
    %c1_89 = arith.constant 1 : index
    %c2_90 = arith.constant 2 : index
    %c0_91 = arith.constant 0 : index
    %62 = vector.load %arg8[%c0_88, %c1_89, %c2_90, %c0_91] : memref<2x10x10x8xf32, #tpu.memory_space<vmem>>, vector<2x8x8x8xf32>
    %63 = vector.shape_cast %62 : vector<2x8x8x8xf32> to vector<128x8xf32>
    %c0_92 = arith.constant 0 : index
    %c2_93 = arith.constant 2 : index
    %c0_94 = arith.constant 0 : index
    %c0_95 = arith.constant 0 : index
    %64 = vector.load %arg8[%c0_92, %c2_93, %c0_94, %c0_95] : memref<2x10x10x8xf32, #tpu.memory_space<vmem>>, vector<2x8x8x8xf32>
    %65 = vector.shape_cast %64 : vector<2x8x8x8xf32> to vector<128x8xf32>
    %c0_96 = arith.constant 0 : index
    %c2_97 = arith.constant 2 : index
    %c1_98 = arith.constant 1 : index
    %c0_99 = arith.constant 0 : index
    %66 = vector.load %arg8[%c0_96, %c2_97, %c1_98, %c0_99] : memref<2x10x10x8xf32, #tpu.memory_space<vmem>>, vector<2x8x8x8xf32>
    %67 = vector.shape_cast %66 : vector<2x8x8x8xf32> to vector<128x8xf32>
    %c0_100 = arith.constant 0 : index
    %c2_101 = arith.constant 2 : index
    %c2_102 = arith.constant 2 : index
    %c0_103 = arith.constant 0 : index
    %68 = vector.load %arg8[%c0_100, %c2_101, %c2_102, %c0_103] : memref<2x10x10x8xf32, #tpu.memory_space<vmem>>, vector<2x8x8x8xf32>
    %69 = vector.shape_cast %68 : vector<2x8x8x8xf32> to vector<128x8xf32>
    %70 = tpu.concatenate %53, %55, %57, %59, %61, %63, %65, %67, %69 in 1 : vector<128x8xf32>, vector<128x8xf32>, vector<128x8xf32>, vector<128x8xf32>, vector<128x8xf32>, vector<128x8xf32>, vector<128x8xf32>, vector<128x8xf32>, vector<128x8xf32> -> vector<128x72xf32>
    %71 = arith.truncf %70 : vector<128x72xf32> to vector<128x72xbf16>
    %c0_104 = arith.constant 0 : index
    %c0_105 = arith.constant 0 : index
    %72 = vector.load %arg2[%c0_104, %c0_105] : memref<72x8xbf16, #tpu.memory_space<vmem>>, vector<72x8xbf16>
    %cst_106 = arith.constant dense<0.000000e+00> : vector<128x8xf32>
    %73 = tpu.matmul %71, %72, %cst_106 {dimension_numbers = #tpu.dot_dimension_numbers<[1], [0], [0], [1], [0, 0, 1, 1], [], []>} : vector<128x72xbf16>, vector<72x8xbf16>, vector<128x8xf32> -> vector<128x8xf32>
    %c0_107 = arith.constant 0 : index
    %c0_108 = arith.constant 0 : index
    %c0_109 = arith.constant 0 : index
    %c0_110 = arith.constant 0 : index
    %74 = tpu.strided_load %arg0[%c0_107, %c0_108, %c0_109, %c0_110] {strides = array<i32: 1, 2, 2, 1>} : memref<2x16x16x4xf32, #tpu.memory_space<vmem>>, vector<2x8x8x4xf32>
    %75 = vector.shape_cast %74 : vector<2x8x8x4xf32> to vector<128x4xf32>
    %76 = arith.truncf %75 : vector<128x4xf32> to vector<128x4xbf16>
    %c0_111 = arith.constant 0 : index
    %c0_112 = arith.constant 0 : index
    %77 = vector.load %arg3[%c0_111, %c0_112] : memref<4x8xbf16, #tpu.memory_space<vmem>>, vector<4x8xbf16>
    %cst_113 = arith.constant dense<0.000000e+00> : vector<128x8xf32>
    %78 = tpu.matmul %76, %77, %cst_113 {dimension_numbers = #tpu.dot_dimension_numbers<[1], [0], [0], [1], [0, 0, 1, 1], [], []>} : vector<128x4xbf16>, vector<4x8xbf16>, vector<128x8xf32> -> vector<128x8xf32>
    %79 = arith.addf %73, %78 : vector<128x8xf32>
    %cst_114 = arith.constant 1.000000e+00 : f32
    %80 = vector.broadcast %cst_114 : f32 to vector<1x128xf32>
    %cst_115 = arith.constant dense<0.000000e+00> : vector<1x8xf32>
    %81 = tpu.matmul %80, %79, %cst_115 {dimension_numbers = #tpu.dot_dimension_numbers<[1], [0], [0], [1], [0, 0, 1, 1], [], []>} : vector<1x128xf32>, vector<128x8xf32>, vector<1x8xf32> -> vector<1x8xf32>
    %cst_116 = arith.constant 7.812500e-03 : f32
    %82 = vector.broadcast %cst_116 : f32 to vector<1x8xf32>
    %83 = arith.mulf %81, %82 : vector<1x8xf32>
    %84 = vector.broadcast %83 : vector<1x8xf32> to vector<128x8xf32>
    %85 = arith.subf %79, %84 : vector<128x8xf32>
    %86 = arith.mulf %85, %85 : vector<128x8xf32>
    %cst_117 = arith.constant dense<0.000000e+00> : vector<1x8xf32>
    %87 = tpu.matmul %80, %86, %cst_117 {dimension_numbers = #tpu.dot_dimension_numbers<[1], [0], [0], [1], [0, 0, 1, 1], [], []>} : vector<1x128xf32>, vector<128x8xf32>, vector<1x8xf32> -> vector<1x8xf32>
    %cst_118 = arith.constant 7.812500e-03 : f32
    %88 = vector.broadcast %cst_118 : f32 to vector<1x8xf32>
    %89 = arith.mulf %87, %88 : vector<1x8xf32>
    %cst_119 = arith.constant 9.99999974E-6 : f32
    %90 = vector.broadcast %cst_119 : f32 to vector<1x8xf32>
    %91 = arith.addf %89, %90 : vector<1x8xf32>
    %92 = math.rsqrt %91 : vector<1x8xf32>
    %93 = arith.mulf %92, %0 : vector<1x8xf32>
    %94 = vector.broadcast %93 : vector<1x8xf32> to vector<128x8xf32>
    %95 = arith.mulf %85, %94 : vector<128x8xf32>
    %96 = vector.broadcast %1 : vector<1x8xf32> to vector<128x8xf32>
    %97 = arith.addf %95, %96 : vector<128x8xf32>
    %cst_120 = arith.constant 0.000000e+00 : f32
    %98 = vector.broadcast %cst_120 : f32 to vector<128x8xf32>
    %99 = arith.maximumf %97, %98 : vector<128x8xf32>
    %c0_121 = arith.constant 0 : index
    %c0_122 = arith.constant 0 : index
    %100 = vector.load %arg6[%c0_121, %c0_122] : memref<128x8xf32, #tpu.memory_space<vmem>>, vector<128x8xf32>
    tpu.vector_store %arg6[%c0_121, %c0_122], %99 {strides = array<i32>} : memref<128x8xf32, #tpu.memory_space<vmem>>, vector<128x8xf32>,
    return
  }
}

</mosaic_0001>

<llo_original>
// kernel: tpu_custom_call.1
$region0: #{tpu_custom_call.1}
  #allocation0 [shape = 'u32[]', space=smem, size = 0x4, offset = 0x4, fixed_abs, tag = 'smem constant byte address 0x4 - core index']
  #allocation1 [shape = 'u32[144,128]{1,0:T(1,128)}', space=vmem, size = 0x12000, scoped, tag = 'internal scratch']
  #allocation2 [shape = 'f32[2,18,18,4]{3,2,1,0:T(8,128)}', space=vmem, size = 0x6c000, scoped, tag = 'scratch operand']
  #allocation3 [shape = 'f32[2,10,10,8]{3,2,1,0:T(8,128)}', space=vmem, size = 0x28000, scoped, tag = 'scratch operand']
  %s0 = inlined_call_operand.vmem [shape: f32[2,16,16,4], index: 0, kind: input, shape index: {}]
  %s1 = inlined_call_operand.vmem [shape: bf16[36,8], index: 1, kind: input, shape index: {}]
  %s2 = inlined_call_operand.vmem [shape: bf16[72,8], index: 2, kind: input, shape index: {}]
  %s3 = inlined_call_operand.vmem [shape: bf16[4,8], index: 3, kind: input, shape index: {}]
  %s4 = inlined_call_operand.vmem [shape: f32[1,8], index: 4, kind: input, shape index: {}]
  %s5 = inlined_call_operand.vmem [shape: f32[1,8], index: 5, kind: input, shape index: {}]
  %s6 = inlined_call_operand.vmem [shape: f32[128,8], index: 6, kind: output, shape index: {}]
  %s7 = sld [smem:[#allocation0]]
  $region34: #{tpu_custom_call.1} parent=0
    _
  %s9 = ssub.s32 1, %s7
  %s10 = scalar_select 0, %s9, %s7
  // Predicated region
  $region2: #{tpu_custom_call.1} parent=0 // pred_check
    _
  $region3: #{tpu_custom_call.1} parent=0 // pred_check_branch
    %12 = sbr.rel (0) target = $region5
  $region4: #{tpu_custom_call.1} parent=0 // pred_region
    _
  $region5: #{tpu_custom_call.1} parent=0 // pred_fallthru
    _
  // Predicated region
  $region6: #{tpu_custom_call.1} parent=0 // pred_check
    _
  $region7: #{tpu_custom_call.1} parent=0 // pred_check_branch
    %14 = sbr.rel (0) target = $region9
  $region8: #{tpu_custom_call.1} parent=0 // pred_region
    _
  $region9: #{tpu_custom_call.1} parent=0 // pred_fallthru
    _
  // Predicated region
  $region10: #{tpu_custom_call.1} parent=0 // pred_check
    _
  $region11: #{tpu_custom_call.1} parent=0 // pred_check_branch
    %16 = sbr.rel (0) target = $region13
  $region12: #{tpu_custom_call.1} parent=0 // pred_region
    _
  $region13: #{tpu_custom_call.1} parent=0 // pred_fallthru
    _
  // Predicated region
  $region14: #{tpu_custom_call.1} parent=0 // pred_check
    _
  $region15: #{tpu_custom_call.1} parent=0 // pred_check_branch
    %18 = sbr.rel (0) target = $region17
  $region16: #{tpu_custom_call.1} parent=0 // pred_region
    _
  $region17: #{tpu_custom_call.1} parent=0 // pred_fallthru
    _
  // Predicated region
  $region18: #{tpu_custom_call.1} parent=0 // pred_check
    _
  $region19: #{tpu_custom_call.1} parent=0 // pred_check_branch
    %20 = sbr.rel (0) target = $region21
  $region20: #{tpu_custom_call.1} parent=0 // pred_region
    _
  $region21: #{tpu_custom_call.1} parent=0 // pred_fallthru
    _
  // Predicated region
  $region22: #{tpu_custom_call.1} parent=0 // pred_check
    _
  $region23: #{tpu_custom_call.1} parent=0 // pred_check_branch
    %22 = sbr.rel (0) target = $region25
  $region24: #{tpu_custom_call.1} parent=0 // pred_region
    _
  $region25: #{tpu_custom_call.1} parent=0 // pred_fallthru
    _
  %v24 = vld [vmem:[%s4] sm:$0x1]
  %v25 = vld [vmem:[%s5] sm:$0x1]
  %vm26 = vcmask 31744
  %27 = vst.msk [vmem:[#allocation2] sm:$0xff] %vm26, 0.0
  %28 = vst.msk [vmem:[#allocation2 + $0x8] sm:$0xff] %vm26, 0.0
  %vm29 = vcmask 25600
  %30 = vst.msk [vmem:[#allocation2 + $0x10] sm:$0x3] %vm29, 0.0
  %31 = vst.msk [vmem:[#allocation2 + $0x18] sm:$0xff] %vm26, 0.0
  %32 = vst.msk [vmem:[#allocation2 + $0x20] sm:$0xff] %vm26, 0.0
  %33 = vst.msk [vmem:[#allocation2 + $0x28] sm:$0x3] %vm29, 0.0
  %34 = vst.msk [vmem:[#allocation2 + $0x30] sm:$0xff] %vm26, 0.0
  %35 = vst.msk [vmem:[#allocation2 + $0x38] sm:$0xff] %vm26, 0.0
  %36 = vst.msk [vmem:[#allocation2 + $0x40] sm:$0x3] %vm29, 0.0
  %37 = vst.msk [vmem:[#allocation2 + $0x48] sm:$0xff] %vm26, 0.0
  %38 = vst.msk [vmem:[#allocation2 + $0x50] sm:$0xff] %vm26, 0.0
  %39 = vst.msk [vmem:[#allocation2 + $0x58] sm:$0x3] %vm29, 0.0
  %40 = vst.msk [vmem:[#allocation2 + $0x60] sm:$0xff] %vm26, 0.0
  %41 = vst.msk [vmem:[#allocation2 + $0x68] sm:$0xff] %vm26, 0.0
  %42 = vst.msk [vmem:[#allocation2 + $0x70] sm:$0x3] %vm29, 0.0
  %43 = vst.msk [vmem:[#allocation2 + $0x78] sm:$0xff] %vm26, 0.0
  %44 = vst.msk [vmem:[#allocation2 + $0x80] sm:$0xff] %vm26, 0.0
  %45 = vst.msk [vmem:[#allocation2 + $0x88] sm:$0x3] %vm29, 0.0
  %46 = vst.msk [vmem:[#allocation2 + $0x90] sm:$0xff] %vm26, 0.0
  %47 = vst.msk [vmem:[#allocation2 + $0x98] sm:$0xff] %vm26, 0.0
  %48 = vst.msk [vmem:[#allocation2 + $0xa0] sm:$0x3] %vm29, 0.0
  %49 = vst.msk [vmem:[#allocation2 + $0xa8] sm:$0xff] %vm26, 0.0
  %50 = vst.msk [vmem:[#allocation2 + $0xb0] sm:$0xff] %vm26, 0.0
  %51 = vst.msk [vmem:[#allocation2 + $0xb8] sm:$0x3] %vm29, 0.0
  %52 = vst.msk [vmem:[#allocation2 + $0xc0] sm:$0xff] %vm26, 0.0
  %53 = vst.msk [vmem:[#allocation2 + $0xc8] sm:$0xff] %vm26, 0.0
  %54 = vst.msk [vmem:[#allocation2 + $0xd0] sm:$0x3] %vm29, 0.0
  %55 = vst.msk [vmem:[#allocation2 + $0xd8] sm:$0xff] %vm26, 0.0
  %56 = vst.msk [vmem:[#allocation2 + $0xe0] sm:$0xff] %vm26, 0.0
  %57 = vst.msk [vmem:[#allocation2 + $0xe8] sm:$0x3] %vm29, 0.0
  %58 = vst.msk [vmem:[#allocation2 + $0xf0] sm:$0xff] %vm26, 0.0
  %59 = vst.msk [vmem:[#allocation2 + $0xf8] sm:$0xff] %vm26, 0.0
  %60 = vst.msk [vmem:[#allocation2 + $0x100] sm:$0x3] %vm29, 0.0
  %61 = vst.msk [vmem:[#allocation2 + $0x108] sm:$0xff] %vm26, 0.0
  %62 = vst.msk [vmem:[#allocation2 + $0x110] sm:$0xff] %vm26, 0.0
  %63 = vst.msk [vmem:[#allocation2 + $0x118] sm:$0x3] %vm29, 0.0
  %64 = vst.msk [vmem:[#allocation2 + $0x120] sm:$0xff] %vm26, 0.0
  %65 = vst.msk [vmem:[#allocation2 + $0x128] sm:$0xff] %vm26, 0.0
  %66 = vst.msk [vmem:[#allocation2 + $0x130] sm:$0x3] %vm29, 0.0
  %67 = vst.msk [vmem:[#allocation2 + $0x138] sm:$0xff] %vm26, 0.0
  %68 = vst.msk [vmem:[#allocation2 + $0x140] sm:$0xff] %vm26, 0.0
  %69 = vst.msk [vmem:[#allocation2 + $0x148] sm:$0x3] %vm29, 0.0
  %70 = vst.msk [vmem:[#allocation2 + $0x150] sm:$0xff] %vm26, 0.0
  %71 = vst.msk [vmem:[#allocation2 + $0x158] sm:$0xff] %vm26, 0.0
  %72 = vst.msk [vmem:[#allocation2 + $0x160] sm:$0x3] %vm29, 0.0
  %73 = vst.msk [vmem:[#allocation2 + $0x168] sm:$0xff] %vm26, 0.0
  %74 = vst.msk [vmem:[#allocation2 + $0x170] sm:$0xff] %vm26, 0.0
  %75 = vst.msk [vmem:[#allocation2 + $0x178] sm:$0x3] %vm29, 0.0
  %76 = vst.msk [vmem:[#allocation2 + $0x180] sm:$0xff] %vm26, 0.0
  %77 = vst.msk [vmem:[#allocation2 + $0x188] sm:$0xff] %vm26, 0.0
  %78 = vst.msk [vmem:[#allocation2 + $0x190] sm:$0x3] %vm29, 0.0
  %79 = vst.msk [vmem:[#allocation2 + $0x198] sm:$0xff] %vm26, 0.0
  %80 = vst.msk [vmem:[#allocation2 + $0x1a0] sm:$0xff] %vm26, 0.0
  %81 = vst.msk [vmem:[#allocation2 + $0x1a8] sm:$0x3] %vm29, 0.0
  %82 = vst.msk [vmem:[#allocation2 + $0x1b0] sm:$0xff] %vm26, 0.0
  %83 = vst.msk [vmem:[#allocation2 + $0x1b8] sm:$0xff] %vm26, 0.0
  %84 = vst.msk [vmem:[#allocation2 + $0x1c0] sm:$0x3] %vm29, 0.0
  %85 = vst.msk [vmem:[#allocation2 + $0x1c8] sm:$0xff] %vm26, 0.0
  %86 = vst.msk [vmem:[#allocation2 + $0x1d0] sm:$0xff] %vm26, 0.0
  %87 = vst.msk [vmem:[#allocation2 + $0x1d8] sm:$0x3] %vm29, 0.0
  %88 = vst.msk [vmem:[#allocation2 + $0x1e0] sm:$0xff] %vm26, 0.0
  %89 = vst.msk [vmem:[#allocation2 + $0x1e8] sm:$0xff] %vm26, 0.0
  %90 = vst.msk [vmem:[#allocation2 + $0x1f0] sm:$0x3] %vm29, 0.0
  %91 = vst.msk [vmem:[#allocation2 + $0x1f8] sm:$0xff] %vm26, 0.0
  %92 = vst.msk [vmem:[#allocation2 + $0x200] sm:$0xff] %vm26, 0.0
  %93 = vst.msk [vmem:[#allocation2 + $0x208] sm:$0x3] %vm29, 0.0
  %94 = vst.msk [vmem:[#allocation2 + $0x210] sm:$0xff] %vm26, 0.0
  %95 = vst.msk [vmem:[#allocation2 + $0x218] sm:$0xff] %vm26, 0.0
  %96 = vst.msk [vmem:[#allocation2 + $0x220] sm:$0x3] %vm29, 0.0
  %97 = vst.msk [vmem:[#allocation2 + $0x228] sm:$0xff] %vm26, 0.0
  %98 = vst.msk [vmem:[#allocation2 + $0x230] sm:$0xff] %vm26, 0.0
  %99 = vst.msk [vmem:[#allocation2 + $0x238] sm:$0x3] %vm29, 0.0
  %100 = vst.msk [vmem:[#allocation2 + $0x240] sm:$0xff] %vm26, 0.0
  %101 = vst.msk [vmem:[#allocation2 + $0x248] sm:$0xff] %vm26, 0.0
  %102 = vst.msk [vmem:[#allocation2 + $0x250] sm:$0x3] %vm29, 0.0
  %103 = vst.msk [vmem:[#allocation2 + $0x258] sm:$0xff] %vm26, 0.0
  %104 = vst.msk [vmem:[#allocation2 + $0x260] sm:$0xff] %vm26, 0.0
  %105 = vst.msk [vmem:[#allocation2 + $0x268] sm:$0x3] %vm29, 0.0
  %106 = vst.msk [vmem:[#allocation2 + $0x270] sm:$0xff] %vm26, 0.0
  %107 = vst.msk [vmem:[#allocation2 + $0x278] sm:$0xff] %vm26, 0.0
  %108 = vst.msk [vmem:[#allocation2 + $0x280] sm:$0x3] %vm29, 0.0
  %109 = vst.msk [vmem:[#allocation2 + $0x288] sm:$0xff] %vm26, 0.0
  %110 = vst.msk [vmem:[#allocation2 + $0x290] sm:$0xff] %vm26, 0.0
  %111 = vst.msk [vmem:[#allocation2 + $0x298] sm:$0x3] %vm29, 0.0
  %112 = vst.msk [vmem:[#allocation2 + $0x2a0] sm:$0xff] %vm26, 0.0
  %113 = vst.msk [vmem:[#allocation2 + $0x2a8] sm:$0xff] %vm26, 0.0
  %114 = vst.msk [vmem:[#allocation2 + $0x2b0] sm:$0x3] %vm29, 0.0
  %115 = vst.msk [vmem:[#allocation2 + $0x2b8] sm:$0xff] %vm26, 0.0
  %116 = vst.msk [vmem:[#allocation2 + $0x2c0] sm:$0xff] %vm26, 0.0
  %117 = vst.msk [vmem:[#allocation2 + $0x2c8] sm:$0x3] %vm29, 0.0
  %118 = vst.msk [vmem:[#allocation2 + $0x2d0] sm:$0xff] %vm26, 0.0
  %119 = vst.msk [vmem:[#allocation2 + $0x2d8] sm:$0xff] %vm26, 0.0
  %120 = vst.msk [vmem:[#allocation2 + $0x2e0] sm:$0x3] %vm29, 0.0
  %121 = vst.msk [vmem:[#allocation2 + $0x2e8] sm:$0xff] %vm26, 0.0
  %122 = vst.msk [vmem:[#allocation2 + $0x2f0] sm:$0xff] %vm26, 0.0
  %123 = vst.msk [vmem:[#allocation2 + $0x2f8] sm:$0x3] %vm29, 0.0
  %124 = vst.msk [vmem:[#allocation2 + $0x300] sm:$0xff] %vm26, 0.0
  %125 = vst.msk [vmem:[#allocation2 + $0x308] sm:$0xff] %vm26, 0.0
  %126 = vst.msk [vmem:[#allocation2 + $0x310] sm:$0x3] %vm29, 0.0
  %127 = vst.msk [vmem:[#allocation2 + $0x318] sm:$0xff] %vm26, 0.0
  %128 = vst.msk [vmem:[#allocation2 + $0x320] sm:$0xff] %vm26, 0.0
  %129 = vst.msk [vmem:[#allocation2 + $0x328] sm:$0x3] %vm29, 0.0
  %130 = vst.msk [vmem:[#allocation2 + $0x330] sm:$0xff] %vm26, 0.0
  %131 = vst.msk [vmem:[#allocation2 + $0x338] sm:$0xff] %vm26, 0.0
  %132 = vst.msk [vmem:[#allocation2 + $0x340] sm:$0x3] %vm29, 0.0
  %133 = vst.msk [vmem:[#allocation2 + $0x348] sm:$0xff] %vm26, 0.0
  %134 = vst.msk [vmem:[#allocation2 + $0x350] sm:$0xff] %vm26, 0.0
  %135 = vst.msk [vmem:[#allocation2 + $0x358] sm:$0x3] %vm29, 0.0
  %v136 = vld [vmem:[%s0] sm:$0xff]
  %v137 = vld [vmem:[%s0 + $0x8] sm:$0xff]
  %v138 = vld [vmem:[%s0 + $0x10] sm:$0xff]
  %v139 = vld [vmem:[%s0 + $0x18] sm:$0xff]
  %v140 = vld [vmem:[%s0 + $0x20] sm:$0xff]
  %v141 = vld [vmem:[%s0 + $0x28] sm:$0xff]
  %v142 = vld [vmem:[%s0 + $0x30] sm:$0xff]
  %v143 = vld [vmem:[%s0 + $0x38] sm:$0xff]
  %v144 = vld [vmem:[%s0 + $0x40] sm:$0xff]
  %v145 = vld [vmem:[%s0 + $0x48] sm:$0xff]
  %v146 = vld [vmem:[%s0 + $0x50] sm:$0xff]
  %v147 = vld [vmem:[%s0 + $0x58] sm:$0xff]
  %v148 = vld [vmem:[%s0 + $0x60] sm:$0xff]
  %v149 = vld [vmem:[%s0 + $0x68] sm:$0xff]
  %v150 = vld [vmem:[%s0 + $0x70] sm:$0xff]
  %v151 = vld [vmem:[%s0 + $0x78] sm:$0xff]
  %v152 = vld [vmem:[%s0 + $0x80] sm:$0xff]
  %v153 = vld [vmem:[%s0 + $0x88] sm:$0xff]
  %v154 = vld [vmem:[%s0 + $0x90] sm:$0xff]
  %v155 = vld [vmem:[%s0 + $0x98] sm:$0xff]
  %v156 = vld [vmem:[%s0 + $0xa0] sm:$0xff]
  %v157 = vld [vmem:[%s0 + $0xa8] sm:$0xff]
  %v158 = vld [vmem:[%s0 + $0xb0] sm:$0xff]
  %v159 = vld [vmem:[%s0 + $0xb8] sm:$0xff]
  %v160 = vld [vmem:[%s0 + $0xc0] sm:$0xff]
  %v161 = vld [vmem:[%s0 + $0xc8] sm:$0xff]
  %v162 = vld [vmem:[%s0 + $0xd0] sm:$0xff]
  %v163 = vld [vmem:[%s0 + $0xd8] sm:$0xff]
  %v164 = vld [vmem:[%s0 + $0xe0] sm:$0xff]
  %v165 = vld [vmem:[%s0 + $0xe8] sm:$0xff]
  %v166 = vld [vmem:[%s0 + $0xf0] sm:$0xff]
  %v167 = vld [vmem:[%s0 + $0xf8] sm:$0xff]
  %v168 = vld [vmem:[%s0 + $0x100] sm:$0xff]
  %v169 = vld [vmem:[%s0 + $0x108] sm:$0xff]
  %v170 = vld [vmem:[%s0 + $0x110] sm:$0xff]
  %v171 = vld [vmem:[%s0 + $0x118] sm:$0xff]
  %v172 = vld [vmem:[%s0 + $0x120] sm:$0xff]
  %v173 = vld [vmem:[%s0 + $0x128] sm:$0xff]
  %v174 = vld [vmem:[%s0 + $0x130] sm:$0xff]
  %v175 = vld [vmem:[%s0 + $0x138] sm:$0xff]
  %v176 = vld [vmem:[%s0 + $0x140] sm:$0xff]
  %v177 = vld [vmem:[%s0 + $0x148] sm:$0xff]
  %v178 = vld [vmem:[%s0 + $0x150] sm:$0xff]
  %v179 = vld [vmem:[%s0 + $0x158] sm:$0xff]
  %v180 = vld [vmem:[%s0 + $0x160] sm:$0xff]
  %v181 = vld [vmem:[%s0 + $0x168] sm:$0xff]
  %v182 = vld [vmem:[%s0 + $0x170] sm:$0xff]
  %v183 = vld [vmem:[%s0 + $0x178] sm:$0xff]
  %v184 = vld [vmem:[%s0 + $0x180] sm:$0xff]
  %v185 = vld [vmem:[%s0 + $0x188] sm:$0xff]
  %v186 = vld [vmem:[%s0 + $0x190] sm:$0xff]
  %v187 = vld [vmem:[%s0 + $0x198] sm:$0xff]
  %v188 = vld [vmem:[%s0 + $0x1a0] sm:$0xff]
  %v189 = vld [vmem:[%s0 + $0x1a8] sm:$0xff]
  %v190 = vld [vmem:[%s0 + $0x1b0] sm:$0xff]
  %v191 = vld [vmem:[%s0 + $0x1b8] sm:$0xff]
  %v192 = vld [vmem:[%s0 + $0x1c0] sm:$0xff]
  %v193 = vld [vmem:[%s0 + $0x1c8] sm:$0xff]
  %v194 = vld [vmem:[%s0 + $0x1d0] sm:$0xff]
  %v195 = vld [vmem:[%s0 + $0x1d8] sm:$0xff]
  %v196 = vld [vmem:[%s0 + $0x1e0] sm:$0xff]
  %v197 = vld [vmem:[%s0 + $0x1e8] sm:$0xff]
  %v198 = vld [vmem:[%s0 + $0x1f0] sm:$0xff]
  %v199 = vld [vmem:[%s0 + $0x1f8] sm:$0xff]
  %s200 = scalar_lea.vmem [#allocation2], 24
  %201 = vst.msk [vmem:[%s200 + $0x1] sm:$0xff] %vm26, %v136
  %202 = vst.msk [vmem:[%s200 + $0x9] sm:$0xff] %vm26, %v137
  %203 = vst.msk [vmem:[%s200 + $0x19] sm:$0xff] %vm26, %v138
  %204 = vst.msk [vmem:[%s200 + $0x21] sm:$0xff] %vm26, %v139
  %205 = vst.msk [vmem:[%s200 + $0x31] sm:$0xff] %vm26, %v140
  %206 = vst.msk [vmem:[%s200 + $0x39] sm:$0xff] %vm26, %v141
  %207 = vst.msk [vmem:[%s200 + $0x49] sm:$0xff] %vm26, %v142
  %208 = vst.msk [vmem:[%s200 + $0x51] sm:$0xff] %vm26, %v143
  %209 = vst.msk [vmem:[%s200 + $0x61] sm:$0xff] %vm26, %v144
  %210 = vst.msk [vmem:[%s200 + $0x69] sm:$0xff] %vm26, %v145
  %211 = vst.msk [vmem:[%s200 + $0x79] sm:$0xff] %vm26, %v146
  %212 = vst.msk [vmem:[%s200 + $0x81] sm:$0xff] %vm26, %v147
  %213 = vst.msk [vmem:[%s200 + $0x91] sm:$0xff] %vm26, %v148
  %214 = vst.msk [vmem:[%s200 + $0x99] sm:$0xff] %vm26, %v149
  %215 = vst.msk [vmem:[%s200 + $0xa9] sm:$0xff] %vm26, %v150
  %216 = vst.msk [vmem:[%s200 + $0xb1] sm:$0xff] %vm26, %v151
  %217 = vst.msk [vmem:[%s200 + $0xc1] sm:$0xff] %vm26, %v152
  %218 = vst.msk [vmem:[%s200 + $0xc9] sm:$0xff] %vm26, %v153
  %219 = vst.msk [vmem:[%s200 + $0xd9] sm:$0xff] %vm26, %v154
  %220 = vst.msk [vmem:[%s200 + $0xe1] sm:$0xff] %vm26, %v155
  %221 = vst.msk [vmem:[%s200 + $0xf1] sm:$0xff] %vm26, %v156
  %222 = vst.msk [vmem:[%s200 + $0xf9] sm:$0xff] %vm26, %v157
  %223 = vst.msk [vmem:[%s200 + $0x109] sm:$0xff] %vm26, %v158
  %224 = vst.msk [vmem:[%s200 + $0x111] sm:$0xff] %vm26, %v159
  %225 = vst.msk [vmem:[%s200 + $0x121] sm:$0xff] %vm26, %v160
  %226 = vst.msk [vmem:[%s200 + $0x129] sm:$0xff] %vm26, %v161
  %227 = vst.msk [vmem:[%s200 + $0x139] sm:$0xff] %vm26, %v162
  %228 = vst.msk [vmem:[%s200 + $0x141] sm:$0xff] %vm26, %v163
  %229 = vst.msk [vmem:[%s200 + $0x151] sm:$0xff] %vm26, %v164
  %230 = vst.msk [vmem:[%s200 + $0x159] sm:$0xff] %vm26, %v165
  %231 = vst.msk [vmem:[%s200 + $0x169] sm:$0xff] %vm26, %v166
  %232 = vst.msk [vmem:[%s200 + $0x171] sm:$0xff] %vm26, %v167
  %233 = vst.msk [vmem:[%s200 + $0x1b1] sm:$0xff] %vm26, %v168
  %234 = vst.msk [vmem:[%s200 + $0x1b9] sm:$0xff] %vm26, %v169
  %235 = vst.msk [vmem:[%s200 + $0x1c9] sm:$0xff] %vm26, %v170
  %236 = vst.msk [vmem:[%s200 + $0x1d1] sm:$0xff] %vm26, %v171
  %237 = vst.msk [vmem:[%s200 + $0x1e1] sm:$0xff] %vm26, %v172
  %238 = vst.msk [vmem:[%s200 + $0x1e9] sm:$0xff] %vm26, %v173
  %239 = vst.msk [vmem:[%s200 + $0x1f9] sm:$0xff] %vm26, %v174
  %240 = vst.msk [vmem:[%s200 + $0x201] sm:$0xff] %vm26, %v175
  %241 = vst.msk [vmem:[%s200 + $0x211] sm:$0xff] %vm26, %v176
  %242 = vst.msk [vmem:[%s200 + $0x219] sm:$0xff] %vm26, %v177
  %243 = vst.msk [vmem:[%s200 + $0x229] sm:$0xff] %vm26, %v178
  %244 = vst.msk [vmem:[%s200 + $0x231] sm:$0xff] %vm26, %v179
  %245 = vst.msk [vmem:[%s200 + $0x241] sm:$0xff] %vm26, %v180
  %246 = vst.msk [vmem:[%s200 + $0x249] sm:$0xff] %vm26, %v181
  %247 = vst.msk [vmem:[%s200 + $0x259] sm:$0xff] %vm26, %v182
  %248 = vst.msk [vmem:[%s200 + $0x261] sm:$0xff] %vm26, %v183
  %249 = vst.msk [vmem:[%s200 + $0x271] sm:$0xff] %vm26, %v184
  %250 = vst.msk [vmem:[%s200 + $0x279] sm:$0xff] %vm26, %v185
  %251 = vst.msk [vmem:[%s200 + $0x289] sm:$0xff] %vm26, %v186
  %252 = vst.msk [vmem:[%s200 + $0x291] sm:$0xff] %vm26, %v187
  %253 = vst.msk [vmem:[%s200 + $0x2a1] sm:$0xff] %vm26, %v188
  %254 = vst.msk [vmem:[%s200 + $0x2a9] sm:$0xff] %vm26, %v189
  %255 = vst.msk [vmem:[%s200 + $0x2b9] sm:$0xff] %vm26, %v190
  %256 = vst.msk [vmem:[%s200 + $0x2c1] sm:$0xff] %vm26, %v191
  %257 = vst.msk [vmem:[%s200 + $0x2d1] sm:$0xff] %vm26, %v192
  %258 = vst.msk [vmem:[%s200 + $0x2d9] sm:$0xff] %vm26, %v193
  %259 = vst.msk [vmem:[%s200 + $0x2e9] sm:$0xff] %vm26, %v194
  %260 = vst.msk [vmem:[%s200 + $0x2f1] sm:$0xff] %vm26, %v195
  %261 = vst.msk [vmem:[%s200 + $0x301] sm:$0xff] %vm26, %v196
  %262 = vst.msk [vmem:[%s200 + $0x309] sm:$0xff] %vm26, %v197
  %263 = vst.msk [vmem:[%s200 + $0x319] sm:$0xff] %vm26, %v198
  %264 = vst.msk [vmem:[%s200 + $0x321] sm:$0xff] %vm26, %v199
  %v265 = vld [vmem:[#allocation2] ss:$2 sm:$0xff]
  %s266 = scalar_lea.vmem [#allocation2], 48
  %v267 = vld [vmem:[%s266] ss:$2 sm:$0xff]
  %s268 = scalar_lea.vmem [#allocation2], 96
  %v269 = vld [vmem:[%s268] ss:$2 sm:$0xff]
  %s270 = scalar_lea.vmem [#allocation2], 144
  %v271 = vld [vmem:[%s270] ss:$2 sm:$0xff]
  %s272 = scalar_lea.vmem [#allocation2], 192
  %v273 = vld [vmem:[%s272] ss:$2 sm:$0xff]
  %s274 = scalar_lea.vmem [#allocation2], 240
  %v275 = vld [vmem:[%s274] ss:$2 sm:$0xff]
  %s276 = scalar_lea.vmem [#allocation2], 288
  %v277 = vld [vmem:[%s276] ss:$2 sm:$0xff]
  %s278 = scalar_lea.vmem [#allocation2], 336
  %v279 = vld [vmem:[%s278] ss:$2 sm:$0xff]
  %s280 = scalar_lea.vmem [#allocation2], 432
  %v281 = vld [vmem:[%s280] ss:$2 sm:$0xff]
  %s282 = scalar_lea.vmem [#allocation2], 480
  %v283 = vld [vmem:[%s282] ss:$2 sm:$0xff]
  %s284 = scalar_lea.vmem [#allocation2], 528
  %v285 = vld [vmem:[%s284] ss:$2 sm:$0xff]
  %s286 = scalar_lea.vmem [#allocation2], 576
  %v287 = vld [vmem:[%s286] ss:$2 sm:$0xff]
  %s288 = scalar_lea.vmem [#allocation2], 624
  %v289 = vld [vmem:[%s288] ss:$2 sm:$0xff]
  %s290 = scalar_lea.vmem [#allocation2], 672
  %v291 = vld [vmem:[%s290] ss:$2 sm:$0xff]
  %s292 = scalar_lea.vmem [#allocation2], 720
  %v293 = vld [vmem:[%s292] ss:$2 sm:$0xff]
  %s294 = scalar_lea.vmem [#allocation2], 768
  %v295 = vld [vmem:[%s294] ss:$2 sm:$0xff]
  %s296 = scalar_lea.vmem [#allocation2], 1
  %v297 = vld [vmem:[%s296] ss:$2 sm:$0xff]
  %s298 = scalar_lea.vmem [#allocation2], 49
  %v299 = vld [vmem:[%s298] ss:$2 sm:$0xff]
  %s300 = scalar_lea.vmem [#allocation2], 97
  %v301 = vld [vmem:[%s300] ss:$2 sm:$0xff]
  %s302 = scalar_lea.vmem [#allocation2], 145
  %v303 = vld [vmem:[%s302] ss:$2 sm:$0xff]
  %s304 = scalar_lea.vmem [#allocation2], 193
  %v305 = vld [vmem:[%s304] ss:$2 sm:$0xff]
  %s306 = scalar_lea.vmem [#allocation2], 241
  %v307 = vld [vmem:[%s306] ss:$2 sm:$0xff]
  %s308 = scalar_lea.vmem [#allocation2], 289
  %v309 = vld [vmem:[%s308] ss:$2 sm:$0xff]
  %s310 = scalar_lea.vmem [#allocation2], 337
  %v311 = vld [vmem:[%s310] ss:$2 sm:$0xff]
  %s312 = scalar_lea.vmem [#allocation2], 433
  %v313 = vld [vmem:[%s312] ss:$2 sm:$0xff]
  %s314 = scalar_lea.vmem [#allocation2], 481
  %v315 = vld [vmem:[%s314] ss:$2 sm:$0xff]
  %s316 = scalar_lea.vmem [#allocation2], 529
  %v317 = vld [vmem:[%s316] ss:$2 sm:$0xff]
  %s318 = scalar_lea.vmem [#allocation2], 577
  %v319 = vld [vmem:[%s318] ss:$2 sm:$0xff]
  %s320 = scalar_lea.vmem [#allocation2], 625
  %v321 = vld [vmem:[%s320] ss:$2 sm:$0xff]
  %s322 = scalar_lea.vmem [#allocation2], 673
  %v323 = vld [vmem:[%s322] ss:$2 sm:$0xff]
  %s324 = scalar_lea.vmem [#allocation2], 721
  %v325 = vld [vmem:[%s324] ss:$2 sm:$0xff]
  %s326 = scalar_lea.vmem [#allocation2], 769
  %v327 = vld [vmem:[%s326] ss:$2 sm:$0xff]
  %s328 = scalar_lea.vmem [#allocation2], 2
  %v329 = vld [vmem:[%s328] ss:$2 sm:$0xff]
  %s330 = scalar_lea.vmem [#allocation2], 50
  %v331 = vld [vmem:[%s330] ss:$2 sm:$0xff]
  %s332 = scalar_lea.vmem [#allocation2], 98
  %v333 = vld [vmem:[%s332] ss:$2 sm:$0xff]
  %s334 = scalar_lea.vmem [#allocation2], 146
  %v335 = vld [vmem:[%s334] ss:$2 sm:$0xff]
  %s336 = scalar_lea.vmem [#allocation2], 194
  %v337 = vld [vmem:[%s336] ss:$2 sm:$0xff]
  %s338 = scalar_lea.vmem [#allocation2], 242
  %v339 = vld [vmem:[%s338] ss:$2 sm:$0xff]
  %s340 = scalar_lea.vmem [#allocation2], 290
  %v341 = vld [vmem:[%s340] ss:$2 sm:$0xff]
  %s342 = scalar_lea.vmem [#allocation2], 338
  %v343 = vld [vmem:[%s342] ss:$2 sm:$0xff]
  %s344 = scalar_lea.vmem [#allocation2], 434
  %v345 = vld [vmem:[%s344] ss:$2 sm:$0xff]
  %s346 = scalar_lea.vmem [#allocation2], 482
  %v347 = vld [vmem:[%s346] ss:$2 sm:$0xff]
  %s348 = scalar_lea.vmem [#allocation2], 530
  %v349 = vld [vmem:[%s348] ss:$2 sm:$0xff]
  %s350 = scalar_lea.vmem [#allocation2], 578
  %v351 = vld [vmem:[%s350] ss:$2 sm:$0xff]
  %s352 = scalar_lea.vmem [#allocation2], 626
  %v353 = vld [vmem:[%s352] ss:$2 sm:$0xff]
  %s354 = scalar_lea.vmem [#allocation2], 674
  %v355 = vld [vmem:[%s354] ss:$2 sm:$0xff]
  %s356 = scalar_lea.vmem [#allocation2], 722
  %v357 = vld [vmem:[%s356] ss:$2 sm:$0xff]
  %s358 = scalar_lea.vmem [#allocation2], 770
  %v359 = vld [vmem:[%s358] ss:$2 sm:$0xff]
  %v360 = vld [vmem:[%s200] ss:$2 sm:$0xff]
  %s361 = scalar_lea.vmem %s200, 48 [#allocation2]
  %v362 = vld [vmem:[%s361] ss:$2 sm:$0xff]
  %s363 = scalar_lea.vmem %s200, 96 [#allocation2]
  %v364 = vld [vmem:[%s363] ss:$2 sm:$0xff]
  %s365 = scalar_lea.vmem %s200, 144 [#allocation2]
  %v366 = vld [vmem:[%s365] ss:$2 sm:$0xff]
  %s367 = scalar_lea.vmem %s200, 192 [#allocation2]
  %v368 = vld [vmem:[%s367] ss:$2 sm:$0xff]
  %s369 = scalar_lea.vmem %s200, 240 [#allocation2]
  %v370 = vld [vmem:[%s369] ss:$2 sm:$0xff]
  %s371 = scalar_lea.vmem %s200, 288 [#allocation2]
  %v372 = vld [vmem:[%s371] ss:$2 sm:$0xff]
  %s373 = scalar_lea.vmem %s200, 336 [#allocation2]
  %v374 = vld [vmem:[%s373] ss:$2 sm:$0xff]
  %s375 = scalar_lea.vmem %s200, 432 [#allocation2]
  %v376 = vld [vmem:[%s375] ss:$2 sm:$0xff]
  %s377 = scalar_lea.vmem %s200, 480 [#allocation2]
  %v378 = vld [vmem:[%s377] ss:$2 sm:$0xff]
  %s379 = scalar_lea.vmem %s200, 528 [#allocation2]
  %v380 = vld [vmem:[%s379] ss:$2 sm:$0xff]
  %s381 = scalar_lea.vmem %s200, 576 [#allocation2]
  %v382 = vld [vmem:[%s381] ss:$2 sm:$0xff]
  %s383 = scalar_lea.vmem %s200, 624 [#allocation2]
  %v384 = vld [vmem:[%s383] ss:$2 sm:$0xff]
  %s385 = scalar_lea.vmem %s200, 672 [#allocation2]
  %v386 = vld [vmem:[%s385] ss:$2 sm:$0xff]
  %s387 = scalar_lea.vmem %s200, 720 [#allocation2]
  %v388 = vld [vmem:[%s387] ss:$2 sm:$0xff]
  %s389 = scalar_lea.vmem %s200, 768 [#allocation2]
  %v390 = vld [vmem:[%s389] ss:$2 sm:$0xff]
  %s391 = scalar_lea.vmem %s200, 1 [#allocation2]
  %v392 = vld [vmem:[%s391] ss:$2 sm:$0xff]
  %s393 = scalar_lea.vmem %s200, 49 [#allocation2]
  %v394 = vld [vmem:[%s393] ss:$2 sm:$0xff]
  %s395 = scalar_lea.vmem %s200, 97 [#allocation2]
  %v396 = vld [vmem:[%s395] ss:$2 sm:$0xff]
  %s397 = scalar_lea.vmem %s200, 145 [#allocation2]
  %v398 = vld [vmem:[%s397] ss:$2 sm:$0xff]
  %s399 = scalar_lea.vmem %s200, 193 [#allocation2]
  %v400 = vld [vmem:[%s399] ss:$2 sm:$0xff]
  %s401 = scalar_lea.vmem %s200, 241 [#allocation2]
  %v402 = vld [vmem:[%s401] ss:$2 sm:$0xff]
  %s403 = scalar_lea.vmem %s200, 289 [#allocation2]
  %v404 = vld [vmem:[%s403] ss:$2 sm:$0xff]
  %s405 = scalar_lea.vmem %s200, 337 [#allocation2]
  %v406 = vld [vmem:[%s405] ss:$2 sm:$0xff]
  %s407 = scalar_lea.vmem %s200, 433 [#allocation2]
  %v408 = vld [vmem:[%s407] ss:$2 sm:$0xff]
  %s409 = scalar_lea.vmem %s200, 481 [#allocation2]
  %v410 = vld [vmem:[%s409] ss:$2 sm:$0xff]
  %s411 = scalar_lea.vmem %s200, 529 [#allocation2]
  %v412 = vld [vmem:[%s411] ss:$2 sm:$0xff]
  %s413 = scalar_lea.vmem %s200, 577 [#allocation2]
  %v414 = vld [vmem:[%s413] ss:$2 sm:$0xff]
  %s415 = scalar_lea.vmem %s200, 625 [#allocation2]
  %v416 = vld [vmem:[%s415] ss:$2 sm:$0xff]
  %s417 = scalar_lea.vmem %s200, 673 [#allocation2]
  %v418 = vld [vmem:[%s417] ss:$2 sm:$0xff]
  %s419 = scalar_lea.vmem %s200, 721 [#allocation2]
  %v420 = vld [vmem:[%s419] ss:$2 sm:$0xff]
  %s421 = scalar_lea.vmem %s200, 769 [#allocation2]
  %v422 = vld [vmem:[%s421] ss:$2 sm:$0xff]
  %s423 = scalar_lea.vmem %s200, 2 [#allocation2]
  %v424 = vld [vmem:[%s423] ss:$2 sm:$0xff]
  %s425 = scalar_lea.vmem %s200, 50 [#allocation2]
  %v426 = vld [vmem:[%s425] ss:$2 sm:$0xff]
  %s427 = scalar_lea.vmem %s200, 98 [#allocation2]
  %v428 = vld [vmem:[%s427] ss:$2 sm:$0xff]
  %s429 = scalar_lea.vmem %s200, 146 [#allocation2]
  %v430 = vld [vmem:[%s429] ss:$2 sm:$0xff]
  %s431 = scalar_lea.vmem %s200, 194 [#allocation2]
  %v432 = vld [vmem:[%s431] ss:$2 sm:$0xff]
  %s433 = scalar_lea.vmem %s200, 242 [#allocation2]
  %v434 = vld [vmem:[%s433] ss:$2 sm:$0xff]
  %s435 = scalar_lea.vmem %s200, 290 [#allocation2]
  %v436 = vld [vmem:[%s435] ss:$2 sm:$0xff]
  %s437 = scalar_lea.vmem %s200, 338 [#allocation2]
  %v438 = vld [vmem:[%s437] ss:$2 sm:$0xff]
  %s439 = scalar_lea.vmem %s200, 434 [#allocation2]
  %v440 = vld [vmem:[%s439] ss:$2 sm:$0xff]
  %s441 = scalar_lea.vmem %s200, 482 [#allocation2]
  %v442 = vld [vmem:[%s441] ss:$2 sm:$0xff]
  %s443 = scalar_lea.vmem %s200, 530 [#allocation2]
  %v444 = vld [vmem:[%s443] ss:$2 sm:$0xff]
  %s445 = scalar_lea.vmem %s200, 578 [#allocation2]
  %v446 = vld [vmem:[%s445] ss:$2 sm:$0xff]
  %s447 = scalar_lea.vmem %s200, 626 [#allocation2]
  %v448 = vld [vmem:[%s447] ss:$2 sm:$0xff]
  %s449 = scalar_lea.vmem %s200, 674 [#allocation2]
  %v450 = vld [vmem:[%s449] ss:$2 sm:$0xff]
  %s451 = scalar_lea.vmem %s200, 722 [#allocation2]
  %v452 = vld [vmem:[%s451] ss:$2 sm:$0xff]
  %s453 = scalar_lea.vmem %s200, 770 [#allocation2]
  %v454 = vld [vmem:[%s453] ss:$2 sm:$0xff]
  %s455 = scalar_lea.vmem [#allocation2], 48
  %v456 = vld [vmem:[%s455] ss:$2 sm:$0xff]
  %s457 = scalar_lea.vmem %s455, 48 [#allocation2]
  %v458 = vld [vmem:[%s457] ss:$2 sm:$0xff]
  %s459 = scalar_lea.vmem %s455, 96 [#allocation2]
  %v460 = vld [vmem:[%s459] ss:$2 sm:$0xff]
  %s461 = scalar_lea.vmem %s455, 144 [#allocation2]
  %v462 = vld [vmem:[%s461] ss:$2 sm:$0xff]
  %s463 = scalar_lea.vmem %s455, 192 [#allocation2]
  %v464 = vld [vmem:[%s463] ss:$2 sm:$0xff]
  %s465 = scalar_lea.vmem %s455, 240 [#allocation2]
  %v466 = vld [vmem:[%s465] ss:$2 sm:$0xff]
  %s467 = scalar_lea.vmem %s455, 288 [#allocation2]
  %v468 = vld [vmem:[%s467] ss:$2 sm:$0xff]
  %s469 = scalar_lea.vmem %s455, 336 [#allocation2]
  %v470 = vld [vmem:[%s469] ss:$2 sm:$0xff]
  %s471 = scalar_lea.vmem %s455, 432 [#allocation2]
  %v472 = vld [vmem:[%s471] ss:$2 sm:$0xff]
  %s473 = scalar_lea.vmem %s455, 480 [#allocation2]
  %v474 = vld [vmem:[%s473] ss:$2 sm:$0xff]
  %s475 = scalar_lea.vmem %s455, 528 [#allocation2]
  %v476 = vld [vmem:[%s475] ss:$2 sm:$0xff]
  %s477 = scalar_lea.vmem %s455, 576 [#allocation2]
  %v478 = vld [vmem:[%s477] ss:$2 sm:$0xff]
  %s479 = scalar_lea.vmem %s455, 624 [#allocation2]
  %v480 = vld [vmem:[%s479] ss:$2 sm:$0xff]
  %s481 = scalar_lea.vmem %s455, 672 [#allocation2]
  %v482 = vld [vmem:[%s481] ss:$2 sm:$0xff]
  %s483 = scalar_lea.vmem %s455, 720 [#allocation2]
  %v484 = vld [vmem:[%s483] ss:$2 sm:$0xff]
  %s485 = scalar_lea.vmem %s455, 768 [#allocation2]
  %v486 = vld [vmem:[%s485] ss:$2 sm:$0xff]
  %s487 = scalar_lea.vmem %s455, 1 [#allocation2]
  %v488 = vld [vmem:[%s487] ss:$2 sm:$0xff]
  %s489 = scalar_lea.vmem %s455, 49 [#allocation2]
  %v490 = vld [vmem:[%s489] ss:$2 sm:$0xff]
  %s491 = scalar_lea.vmem %s455, 97 [#allocation2]
  %v492 = vld [vmem:[%s491] ss:$2 sm:$0xff]
  %s493 = scalar_lea.vmem %s455, 145 [#allocation2]
  %v494 = vld [vmem:[%s493] ss:$2 sm:$0xff]
  %s495 = scalar_lea.vmem %s455, 193 [#allocation2]
  %v496 = vld [vmem:[%s495] ss:$2 sm:$0xff]
  %s497 = scalar_lea.vmem %s455, 241 [#allocation2]
  %v498 = vld [vmem:[%s497] ss:$2 sm:$0xff]
  %s499 = scalar_lea.vmem %s455, 289 [#allocation2]
  %v500 = vld [vmem:[%s499] ss:$2 sm:$0xff]
  %s501 = scalar_lea.vmem %s455, 337 [#allocation2]
  %v502 = vld [vmem:[%s501] ss:$2 sm:$0xff]
  %s503 = scalar_lea.vmem %s455, 433 [#allocation2]
  %v504 = vld [vmem:[%s503] ss:$2 sm:$0xff]
  %s505 = scalar_lea.vmem %s455, 481 [#allocation2]
  %v506 = vld [vmem:[%s505] ss:$2 sm:$0xff]
  %s507 = scalar_lea.vmem %s455, 529 [#allocation2]
  %v508 = vld [vmem:[%s507] ss:$2 sm:$0xff]
  %s509 = scalar_lea.vmem %s455, 577 [#allocation2]
  %v510 = vld [vmem:[%s509] ss:$2 sm:$0xff]
  %s511 = scalar_lea.vmem %s455, 625 [#allocation2]
  %v512 = vld [vmem:[%s511] ss:$2 sm:$0xff]
  %s513 = scalar_lea.vmem %s455, 673 [#allocation2]
  %v514 = vld [vmem:[%s513] ss:$2 sm:$0xff]
  %s515 = scalar_lea.vmem %s455, 721 [#allocation2]
  %v516 = vld [vmem:[%s515] ss:$2 sm:$0xff]
  %s517 = scalar_lea.vmem %s455, 769 [#allocation2]
  %v518 = vld [vmem:[%s517] ss:$2 sm:$0xff]
  %s519 = scalar_lea.vmem %s455, 2 [#allocation2]
  %v520 = vld [vmem:[%s519] ss:$2 sm:$0xff]
  %s521 = scalar_lea.vmem %s455, 50 [#allocation2]
  %v522 = vld [vmem:[%s521] ss:$2 sm:$0xff]
  %s523 = scalar_lea.vmem %s455, 98 [#allocation2]
  %v524 = vld [vmem:[%s523] ss:$2 sm:$0xff]
  %s525 = scalar_lea.vmem %s455, 146 [#allocation2]
  %v526 = vld [vmem:[%s525] ss:$2 sm:$0xff]
  %s527 = scalar_lea.vmem %s455, 194 [#allocation2]
  %v528 = vld [vmem:[%s527] ss:$2 sm:$0xff]
  %s529 = scalar_lea.vmem %s455, 242 [#allocation2]
  %v530 = vld [vmem:[%s529] ss:$2 sm:$0xff]
  %s531 = scalar_lea.vmem %s455, 290 [#allocation2]
  %v532 = vld [vmem:[%s531] ss:$2 sm:$0xff]
  %s533 = scalar_lea.vmem %s455, 338 [#allocation2]
  %v534 = vld [vmem:[%s533] ss:$2 sm:$0xff]
  %s535 = scalar_lea.vmem %s455, 434 [#allocation2]
  %v536 = vld [vmem:[%s535] ss:$2 sm:$0xff]
  %s537 = scalar_lea.vmem %s455, 482 [#allocation2]
  %v538 = vld [vmem:[%s537] ss:$2 sm:$0xff]
  %s539 = scalar_lea.vmem %s455, 530 [#allocation2]
  %v540 = vld [vmem:[%s539] ss:$2 sm:$0xff]
  %s541 = scalar_lea.vmem %s455, 578 [#allocation2]
  %v542 = vld [vmem:[%s541] ss:$2 sm:$0xff]
  %s543 = scalar_lea.vmem %s455, 626 [#allocation2]
  %v544 = vld [vmem:[%s543] ss:$2 sm:$0xff]
  %s545 = scalar_lea.vmem %s455, 674 [#allocation2]
  %v546 = vld [vmem:[%s545] ss:$2 sm:$0xff]
  %s547 = scalar_lea.vmem %s455, 722 [#allocation2]
  %v548 = vld [vmem:[%s547] ss:$2 sm:$0xff]
  %s549 = scalar_lea.vmem %s455, 770 [#allocation2]
  %v550 = vld [vmem:[%s549] ss:$2 sm:$0xff]
  %567 = vrot.lane.b32.xlu0 %v297, 4
  %v568 = vpop.permute.xlu0 %567
  %569 = vrot.lane.b32.xlu0 %v299, 4
  %v570 = vpop.permute.xlu0 %569
  %571 = vrot.lane.b32.xlu0 %v301, 4
  %v572 = vpop.permute.xlu0 %571
  %573 = vrot.lane.b32.xlu0 %v303, 4
  %v574 = vpop.permute.xlu0 %573
  %575 = vrot.lane.b32.xlu0 %v305, 4
  %v576 = vpop.permute.xlu0 %575
  %577 = vrot.lane.b32.xlu0 %v307, 4
  %v578 = vpop.permute.xlu0 %577
  %579 = vrot.lane.b32.xlu0 %v309, 4
  %v580 = vpop.permute.xlu0 %579
  %581 = vrot.lane.b32.xlu0 %v311, 4
  %v582 = vpop.permute.xlu0 %581
  %583 = vrot.lane.b32.xlu0 %v313, 4
  %v584 = vpop.permute.xlu0 %583
  %585 = vrot.lane.b32.xlu0 %v315, 4
  %v586 = vpop.permute.xlu0 %585
  %587 = vrot.lane.b32.xlu0 %v317, 4
  %v588 = vpop.permute.xlu0 %587
  %589 = vrot.lane.b32.xlu0 %v319, 4
  %v590 = vpop.permute.xlu0 %589
  %591 = vrot.lane.b32.xlu0 %v321, 4
  %v592 = vpop.permute.xlu0 %591
  %593 = vrot.lane.b32.xlu0 %v323, 4
  %v594 = vpop.permute.xlu0 %593
  %595 = vrot.lane.b32.xlu0 %v325, 4
  %v596 = vpop.permute.xlu0 %595
  %597 = vrot.lane.b32.xlu0 %v327, 4
  %v598 = vpop.permute.xlu0 %597
  %631 = vrot.lane.b32.xlu0 %v329, 8
  %v632 = vpop.permute.xlu0 %631
  %633 = vrot.lane.b32.xlu0 %v331, 8
  %v634 = vpop.permute.xlu0 %633
  %635 = vrot.lane.b32.xlu0 %v333, 8
  %v636 = vpop.permute.xlu0 %635
  %637 = vrot.lane.b32.xlu0 %v335, 8
  %v638 = vpop.permute.xlu0 %637
  %639 = vrot.lane.b32.xlu0 %v337, 8
  %v640 = vpop.permute.xlu0 %639
  %641 = vrot.lane.b32.xlu0 %v339, 8
  %v642 = vpop.permute.xlu0 %641
  %643 = vrot.lane.b32.xlu0 %v341, 8
  %v644 = vpop.permute.xlu0 %643
  %645 = vrot.lane.b32.xlu0 %v343, 8
  %v646 = vpop.permute.xlu0 %645
  %647 = vrot.lane.b32.xlu0 %v345, 8
  %v648 = vpop.permute.xlu0 %647
  %649 = vrot.lane.b32.xlu0 %v347, 8
  %v650 = vpop.permute.xlu0 %649
  %651 = vrot.lane.b32.xlu0 %v349, 8
  %v652 = vpop.permute.xlu0 %651
  %653 = vrot.lane.b32.xlu0 %v351, 8
  %v654 = vpop.permute.xlu0 %653
  %655 = vrot.lane.b32.xlu0 %v353, 8
  %v656 = vpop.permute.xlu0 %655
  %657 = vrot.lane.b32.xlu0 %v355, 8
  %v658 = vpop.permute.xlu0 %657
  %659 = vrot.lane.b32.xlu0 %v357, 8
  %v660 = vpop.permute.xlu0 %659
  %661 = vrot.lane.b32.xlu0 %v359, 8
  %v662 = vpop.permute.xlu0 %661
  %695 = vrot.lane.b32.xlu0 %v360, 12
  %v696 = vpop.permute.xlu0 %695
  %697 = vrot.lane.b32.xlu0 %v362, 12
  %v698 = vpop.permute.xlu0 %697
  %699 = vrot.lane.b32.xlu0 %v364, 12
  %v700 = vpop.permute.xlu0 %699
  %701 = vrot.lane.b32.xlu0 %v366, 12
  %v702 = vpop.permute.xlu0 %701
  %703 = vrot.lane.b32.xlu0 %v368, 12
  %v704 = vpop.permute.xlu0 %703
  %705 = vrot.lane.b32.xlu0 %v370, 12
  %v706 = vpop.permute.xlu0 %705
  %707 = vrot.lane.b32.xlu0 %v372, 12
  %v708 = vpop.permute.xlu0 %707
  %709 = vrot.lane.b32.xlu0 %v374, 12
  %v710 = vpop.permute.xlu0 %709
  %711 = vrot.lane.b32.xlu0 %v376, 12
  %v712 = vpop.permute.xlu0 %711
  %713 = vrot.lane.b32.xlu0 %v378, 12
  %v714 = vpop.permute.xlu0 %713
  %715 = vrot.lane.b32.xlu0 %v380, 12
  %v716 = vpop.permute.xlu0 %715
  %717 = vrot.lane.b32.xlu0 %v382, 12
  %v718 = vpop.permute.xlu0 %717
  %719 = vrot.lane.b32.xlu0 %v384, 12
  %v720 = vpop.permute.xlu0 %719
  %721 = vrot.lane.b32.xlu0 %v386, 12
  %v722 = vpop.permute.xlu0 %721
  %723 = vrot.lane.b32.xlu0 %v388, 12
  %v724 = vpop.permute.xlu0 %723
  %725 = vrot.lane.b32.xlu0 %v390, 12
  %v726 = vpop.permute.xlu0 %725
  %759 = vrot.lane.b32.xlu0 %v392, 16
  %v760 = vpop.permute.xlu0 %759
  %761 = vrot.lane.b32.xlu0 %v394, 16
  %v762 = vpop.permute.xlu0 %761
  %763 = vrot.lane.b32.xlu0 %v396, 16
  %v764 = vpop.permute.xlu0 %763
  %765 = vrot.lane.b32.xlu0 %v398, 16
  %v766 = vpop.permute.xlu0 %765
  %767 = vrot.lane.b32.xlu0 %v400, 16
  %v768 = vpop.permute.xlu0 %767
  %769 = vrot.lane.b32.xlu0 %v402, 16
  %v770 = vpop.permute.xlu0 %769
  %771 = vrot.lane.b32.xlu0 %v404, 16
  %v772 = vpop.permute.xlu0 %771
  %773 = vrot.lane.b32.xlu0 %v406, 16
  %v774 = vpop.permute.xlu0 %773
  %775 = vrot.lane.b32.xlu0 %v408, 16
  %v776 = vpop.permute.xlu0 %775
  %777 = vrot.lane.b32.xlu0 %v410, 16
  %v778 = vpop.permute.xlu0 %777
  %779 = vrot.lane.b32.xlu0 %v412, 16
  %v780 = vpop.permute.xlu0 %779
  %781 = vrot.lane.b32.xlu0 %v414, 16
  %v782 = vpop.permute.xlu0 %781
  %783 = vrot.lane.b32.xlu0 %v416, 16
  %v784 = vpop.permute.xlu0 %783
  %785 = vrot.lane.b32.xlu0 %v418, 16
  %v786 = vpop.permute.xlu0 %785
  %787 = vrot.lane.b32.xlu0 %v420, 16
  %v788 = vpop.permute.xlu0 %787
  %789 = vrot.lane.b32.xlu0 %v422, 16
  %v790 = vpop.permute.xlu0 %789
  %823 = vrot.lane.b32.xlu0 %v424, 20
  %v824 = vpop.permute.xlu0 %823
  %825 = vrot.lane.b32.xlu0 %v426, 20
  %v826 = vpop.permute.xlu0 %825
  %827 = vrot.lane.b32.xlu0 %v428, 20
  %v828 = vpop.permute.xlu0 %827
  %829 = vrot.lane.b32.xlu0 %v430, 20
  %v830 = vpop.permute.xlu0 %829
  %831 = vrot.lane.b32.xlu0 %v432, 20
  %v832 = vpop.permute.xlu0 %831
  %833 = vrot.lane.b32.xlu0 %v434, 20
  %v834 = vpop.permute.xlu0 %833
  %835 = vrot.lane.b32.xlu0 %v436, 20
  %v836 = vpop.permute.xlu0 %835
  %837 = vrot.lane.b32.xlu0 %v438, 20
  %v838 = vpop.permute.xlu0 %837
  %839 = vrot.lane.b32.xlu0 %v440, 20
  %v840 = vpop.permute.xlu0 %839
  %841 = vrot.lane.b32.xlu0 %v442, 20
  %v842 = vpop.permute.xlu0 %841
  %843 = vrot.lane.b32.xlu0 %v444, 20
  %v844 = vpop.permute.xlu0 %843
  %845 = vrot.lane.b32.xlu0 %v446, 20
  %v846 = vpop.permute.xlu0 %845
  %847 = vrot.lane.b32.xlu0 %v448, 20
  %v848 = vpop.permute.xlu0 %847
  %849 = vrot.lane.b32.xlu0 %v450, 20
  %v850 = vpop.permute.xlu0 %849
  %851 = vrot.lane.b32.xlu0 %v452, 20
  %v852 = vpop.permute.xlu0 %851
  %853 = vrot.lane.b32.xlu0 %v454, 20
  %v854 = vpop.permute.xlu0 %853
  %887 = vrot.lane.b32.xlu0 %v456, 24
  %v888 = vpop.permute.xlu0 %887
  %889 = vrot.lane.b32.xlu0 %v458, 24
  %v890 = vpop.permute.xlu0 %889
  %891 = vrot.lane.b32.xlu0 %v460, 24
  %v892 = vpop.permute.xlu0 %891
  %893 = vrot.lane.b32.xlu0 %v462, 24
  %v894 = vpop.permute.xlu0 %893
  %895 = vrot.lane.b32.xlu0 %v464, 24
  %v896 = vpop.permute.xlu0 %895
  %897 = vrot.lane.b32.xlu0 %v466, 24
  %v898 = vpop.permute.xlu0 %897
  %899 = vrot.lane.b32.xlu0 %v468, 24
  %v900 = vpop.permute.xlu0 %899
  %901 = vrot.lane.b32.xlu0 %v470, 24
  %v902 = vpop.permute.xlu0 %901
  %903 = vrot.lane.b32.xlu0 %v472, 24
  %v904 = vpop.permute.xlu0 %903
  %905 = vrot.lane.b32.xlu0 %v474, 24
  %v906 = vpop.permute.xlu0 %905
  %907 = vrot.lane.b32.xlu0 %v476, 24
  %v908 = vpop.permute.xlu0 %907
  %909 = vrot.lane.b32.xlu0 %v478, 24
  %v910 = vpop.permute.xlu0 %909
  %911 = vrot.lane.b32.xlu0 %v480, 24
  %v912 = vpop.permute.xlu0 %911
  %913 = vrot.lane.b32.xlu0 %v482, 24
  %v914 = vpop.permute.xlu0 %913
  %915 = vrot.lane.b32.xlu0 %v484, 24
  %v916 = vpop.permute.xlu0 %915
  %917 = vrot.lane.b32.xlu0 %v486, 24
  %v918 = vpop.permute.xlu0 %917
  %951 = vrot.lane.b32.xlu0 %v488, 28
  %v952 = vpop.permute.xlu0 %951
  %953 = vrot.lane.b32.xlu0 %v490, 28
  %v954 = vpop.permute.xlu0 %953
  %955 = vrot.lane.b32.xlu0 %v492, 28
  %v956 = vpop.permute.xlu0 %955
  %957 = vrot.lane.b32.xlu0 %v494, 28
  %v958 = vpop.permute.xlu0 %957
  %959 = vrot.lane.b32.xlu0 %v496, 28
  %v960 = vpop.permute.xlu0 %959
  %961 = vrot.lane.b32.xlu0 %v498, 28
  %v962 = vpop.permute.xlu0 %961
  %963 = vrot.lane.b32.xlu0 %v500, 28
  %v964 = vpop.permute.xlu0 %963
  %965 = vrot.lane.b32.xlu0 %v502, 28
  %v966 = vpop.permute.xlu0 %965
  %967 = vrot.lane.b32.xlu0 %v504, 28
  %v968 = vpop.permute.xlu0 %967
  %969 = vrot.lane.b32.xlu0 %v506, 28
  %v970 = vpop.permute.xlu0 %969
  %971 = vrot.lane.b32.xlu0 %v508, 28
  %v972 = vpop.permute.xlu0 %971
  %973 = vrot.lane.b32.xlu0 %v510, 28
  %v974 = vpop.permute.xlu0 %973
  %975 = vrot.lane.b32.xlu0 %v512, 28
  %v976 = vpop.permute.xlu0 %975
  %977 = vrot.lane.b32.xlu0 %v514, 28
  %v978 = vpop.permute.xlu0 %977
  %979 = vrot.lane.b32.xlu0 %v516, 28
  %v980 = vpop.permute.xlu0 %979
  %981 = vrot.lane.b32.xlu0 %v518, 28
  %v982 = vpop.permute.xlu0 %981
  %1015 = vrot.lane.b32.xlu0 %v520, 32
  %v1016 = vpop.permute.xlu0 %1015
  %1017 = vrot.lane.b32.xlu0 %v522, 32
  %v1018 = vpop.permute.xlu0 %1017
  %1019 = vrot.lane.b32.xlu0 %v524, 32
  %v1020 = vpop.permute.xlu0 %1019
  %1021 = vrot.lane.b32.xlu0 %v526, 32
  %v1022 = vpop.permute.xlu0 %1021
  %1023 = vrot.lane.b32.xlu0 %v528, 32
  %v1024 = vpop.permute.xlu0 %1023
  %1025 = vrot.lane.b32.xlu0 %v530, 32
  %v1026 = vpop.permute.xlu0 %1025
  %1027 = vrot.lane.b32.xlu0 %v532, 32
  %v1028 = vpop.permute.xlu0 %1027
  %1029 = vrot.lane.b32.xlu0 %v534, 32
  %v1030 = vpop.permute.xlu0 %1029
  %1031 = vrot.lane.b32.xlu0 %v536, 32
  %v1032 = vpop.permute.xlu0 %1031
  %1033 = vrot.lane.b32.xlu0 %v538, 32
  %v1034 = vpop.permute.xlu0 %1033
  %1035 = vrot.lane.b32.xlu0 %v540, 32
  %v1036 = vpop.permute.xlu0 %1035
  %1037 = vrot.lane.b32.xlu0 %v542, 32
  %v1038 = vpop.permute.xlu0 %1037
  %1039 = vrot.lane.b32.xlu0 %v544, 32
  %v1040 = vpop.permute.xlu0 %1039
  %1041 = vrot.lane.b32.xlu0 %v546, 32
  %v1042 = vpop.permute.xlu0 %1041
  %1043 = vrot.lane.b32.xlu0 %v548, 32
  %v1044 = vpop.permute.xlu0 %1043
  %1045 = vrot.lane.b32.xlu0 %v550, 32
  %v1046 = vpop.permute.xlu0 %1045
  %v1063 = vsel %vm26, %v265, %v568
  %v1064 = vsel %vm26, %v267, %v570
  %v1065 = vsel %vm26, %v269, %v572
  %v1066 = vsel %vm26, %v271, %v574
  %v1067 = vsel %vm26, %v273, %v576
  %v1068 = vsel %vm26, %v275, %v578
  %v1069 = vsel %vm26, %v277, %v580
  %v1070 = vsel %vm26, %v279, %v582
  %v1071 = vsel %vm26, %v281, %v584
  %v1072 = vsel %vm26, %v283, %v586
  %v1073 = vsel %vm26, %v285, %v588
  %v1074 = vsel %vm26, %v287, %v590
  %v1075 = vsel %vm26, %v289, %v592
  %v1076 = vsel %vm26, %v291, %v594
  %v1077 = vsel %vm26, %v293, %v596
  %v1078 = vsel %vm26, %v295, %v598
  %vm1079 = vcmask 64512
  %v1080 = vsel %vm1079, %v1063, %v632
  %v1081 = vsel %vm1079, %v1064, %v634
  %v1082 = vsel %vm1079, %v1065, %v636
  %v1083 = vsel %vm1079, %v1066, %v638
  %v1084 = vsel %vm1079, %v1067, %v640
  %v1085 = vsel %vm1079, %v1068, %v642
  %v1086 = vsel %vm1079, %v1069, %v644
  %v1087 = vsel %vm1079, %v1070, %v646
  %v1088 = vsel %vm1079, %v1071, %v648
  %v1089 = vsel %vm1079, %v1072, %v650
  %v1090 = vsel %vm1079, %v1073, %v652
  %v1091 = vsel %vm1079, %v1074, %v654
  %v1092 = vsel %vm1079, %v1075, %v656
  %v1093 = vsel %vm1079, %v1076, %v658
  %v1094 = vsel %vm1079, %v1077, %v660
  %v1095 = vsel %vm1079, %v1078, %v662
  %vm1096 = vcmask 97280
  %v1097 = vsel %vm1096, %v1080, %v696
  %v1098 = vsel %vm1096, %v1081, %v698
  %v1099 = vsel %vm1096, %v1082, %v700
  %v1100 = vsel %vm1096, %v1083, %v702
  %v1101 = vsel %vm1096, %v1084, %v704
  %v1102 = vsel %vm1096, %v1085, %v706
  %v1103 = vsel %vm1096, %v1086, %v708
  %v1104 = vsel %vm1096, %v1087, %v710
  %v1105 = vsel %vm1096, %v1088, %v712
  %v1106 = vsel %vm1096, %v1089, %v714
  %v1107 = vsel %vm1096, %v1090, %v716
  %v1108 = vsel %vm1096, %v1091, %v718
  %v1109 = vsel %vm1096, %v1092, %v720
  %v1110 = vsel %vm1096, %v1093, %v722
  %v1111 = vsel %vm1096, %v1094, %v724
  %v1112 = vsel %vm1096, %v1095, %v726
  %vm1113 = vcmask 130048
  %v1114 = vsel %vm1113, %v1097, %v760
  %v1115 = vsel %vm1113, %v1098, %v762
  %v1116 = vsel %vm1113, %v1099, %v764
  %v1117 = vsel %vm1113, %v1100, %v766
  %v1118 = vsel %vm1113, %v1101, %v768
  %v1119 = vsel %vm1113, %v1102, %v770
  %v1120 = vsel %vm1113, %v1103, %v772
  %v1121 = vsel %vm1113, %v1104, %v774
  %v1122 = vsel %vm1113, %v1105, %v776
  %v1123 = vsel %vm1113, %v1106, %v778
  %v1124 = vsel %vm1113, %v1107, %v780
  %v1125 = vsel %vm1113, %v1108, %v782
  %v1126 = vsel %vm1113, %v1109, %v784
  %v1127 = vsel %vm1113, %v1110, %v786
  %v1128 = vsel %vm1113, %v1111, %v788
  %v1129 = vsel %vm1113, %v1112, %v790
  %vm1130 = vcmask 162816
  %v1131 = vsel %vm1130, %v1114, %v824
  %v1132 = vsel %vm1130, %v1115, %v826
  %v1133 = vsel %vm1130, %v1116, %v828
  %v1134 = vsel %vm1130, %v1117, %v830
  %v1135 = vsel %vm1130, %v1118, %v832
  %v1136 = vsel %vm1130, %v1119, %v834
  %v1137 = vsel %vm1130, %v1120, %v836
  %v1138 = vsel %vm1130, %v1121, %v838
  %v1139 = vsel %vm1130, %v1122, %v840
  %v1140 = vsel %vm1130, %v1123, %v842
  %v1141 = vsel %vm1130, %v1124, %v844
  %v1142 = vsel %vm1130, %v1125, %v846
  %v1143 = vsel %vm1130, %v1126, %v848
  %v1144 = vsel %vm1130, %v1127, %v850
  %v1145 = vsel %vm1130, %v1128, %v852
  %v1146 = vsel %vm1130, %v1129, %v854
  %vm1147 = vcmask 195584
  %v1148 = vsel %vm1147, %v1131, %v888
  %v1149 = vsel %vm1147, %v1132, %v890
  %v1150 = vsel %vm1147, %v1133, %v892
  %v1151 = vsel %vm1147, %v1134, %v894
  %v1152 = vsel %vm1147, %v1135, %v896
  %v1153 = vsel %vm1147, %v1136, %v898
  %v1154 = vsel %vm1147, %v1137, %v900
  %v1155 = vsel %vm1147, %v1138, %v902
  %v1156 = vsel %vm1147, %v1139, %v904
  %v1157 = vsel %vm1147, %v1140, %v906
  %v1158 = vsel %vm1147, %v1141, %v908
  %v1159 = vsel %vm1147, %v1142, %v910
  %v1160 = vsel %vm1147, %v1143, %v912
  %v1161 = vsel %vm1147, %v1144, %v914
  %v1162 = vsel %vm1147, %v1145, %v916
  %v1163 = vsel %vm1147, %v1146, %v918
  %vm1164 = vcmask 228352
  %v1165 = vsel %vm1164, %v1148, %v952
  %v1166 = vsel %vm1164, %v1149, %v954
  %v1167 = vsel %vm1164, %v1150, %v956
  %v1168 = vsel %vm1164, %v1151, %v958
  %v1169 = vsel %vm1164, %v1152, %v960
  %v1170 = vsel %vm1164, %v1153, %v962
  %v1171 = vsel %vm1164, %v1154, %v964
  %v1172 = vsel %vm1164, %v1155, %v966
  %v1173 = vsel %vm1164, %v1156, %v968
  %v1174 = vsel %vm1164, %v1157, %v970
  %v1175 = vsel %vm1164, %v1158, %v972
  %v1176 = vsel %vm1164, %v1159, %v974
  %v1177 = vsel %vm1164, %v1160, %v976
  %v1178 = vsel %vm1164, %v1161, %v978
  %v1179 = vsel %vm1164, %v1162, %v980
  %v1180 = vsel %vm1164, %v1163, %v982
  %vm1181 = vcmask 261120
  %v1182 = vsel %vm1181, %v1165, %v1016
  %v1183 = vsel %vm1181, %v1166, %v1018
  %v1184 = vsel %vm1181, %v1167, %v1020
  %v1185 = vsel %vm1181, %v1168, %v1022
  %v1186 = vsel %vm1181, %v1169, %v1024
  %v1187 = vsel %vm1181, %v1170, %v1026
  %v1188 = vsel %vm1181, %v1171, %v1028
  %v1189 = vsel %vm1181, %v1172, %v1030
  %v1190 = vsel %vm1181, %v1173, %v1032
  %v1191 = vsel %vm1181, %v1174, %v1034
  %v1192 = vsel %vm1181, %v1175, %v1036
  %v1193 = vsel %vm1181, %v1176, %v1038
  %v1194 = vsel %vm1181, %v1177, %v1040
  %v1195 = vsel %vm1181, %v1178, %v1042
  %v1196 = vsel %vm1181, %v1179, %v1044
  %v1197 = vsel %vm1181, %v1180, %v1046
  %v1198 = vpack.c.bf16 %v1183, %v1182
  %v1199 = vpack.c.bf16 %v1185, %v1184
  %v1200 = vpack.c.bf16 %v1187, %v1186
  %v1201 = vpack.c.bf16 %v1189, %v1188
  %v1202 = vpack.c.bf16 %v1191, %v1190
  %v1203 = vpack.c.bf16 %v1193, %v1192
  %v1204 = vpack.c.bf16 %v1195, %v1194
  %v1205 = vpack.c.bf16 %v1197, %v1196
  %v1206 = vld [vmem:[%s1] sm:$0xf]
  %v1207 = vld [vmem:[%s1 + $0x4] sm:$0xf]
  %v1208 = vld [vmem:[%s1 + $0x8] sm:$0xf]
  %v1209 = vld [vmem:[%s1 + $0xc] sm:$0xf]
  %v1210 = vld [vmem:[%s1 + $0x10] sm:$0x3]
  %v1216 = vunpack.c.l.b16 %v1206
  %v1217 = vunpack.c.l.b16 %v1207
  %v1218 = vunpack.c.l.b16 %v1208
  %v1219 = vunpack.c.l.b16 %v1209
  %v1220 = vunpack.c.l.b16 %v1210
  %v1221 = vpack.c.b16 %v1217, %v1216
  %v1222 = vpack.c.b16 %v1219, %v1218
  %v1223 = vpack.c.b16 %v1220, %v1220
  %vm1226 = vcmask 293888
  %v1228 = vsel %vm1226, %v1198, 0
  %v1231 = vsel %vm1226, %v1199, 0
  %v1234 = vsel %vm1226, %v1200, 0
  %v1237 = vsel %vm1226, %v1201, 0
  %v1240 = vsel %vm1226, %v1202, 0
  %v1243 = vsel %vm1226, %v1203, 0
  %v1246 = vsel %vm1226, %v1204, 0
  %v1249 = vsel %vm1226, %v1205, 0
  %vm1251 = vcmask 1041408
  %v1253 = vsel %vm1251, %v1223, 0
  %1255 = vmatprep.subr.bf16.mxu0 0
  %1256 = vmatpush1.bf16.msra.mxu0 %v1221
  %1257 = vmatprep.subr.bf16.mxu0 0
  %1258 = vmatpush1.bf16.msra.mxu0 %v1222
  %1259 = vmatprep.subr.bf16.mxu0 0
  %1260 = vmatpush1.bf16.msra.mxu0 %v1253
  %1261 = vmatprep.subr.bf16.mxu0 0
  %1262 = vmatpush1.bf16.msra.mxu0 0
  %1263 = vmatprep.subr.bf16.mxu0 0
  %1264 = vmatpush1.bf16.msra.mxu0 0
  %1265 = vmatprep.subr.bf16.mxu0 0
  %1266 = vmatpush1.bf16.msra.mxu0 0
  %1267 = vmatprep.subr.bf16.mxu0 0
  %1268 = vmatpush1.bf16.msra.mxu0 0
  %1269 = vmatprep.subr.bf16.mxu0 0
  %1270 = vmatpush1.bf16.msra.mxu0 0
  %1271 = vmatprep.subr.bf16.mxu0 0
  %1272 = vmatpush1.bf16.msra.mxu0 0
  %1273 = vmatprep.subr.bf16.mxu0 0
  %1274 = vmatpush1.bf16.msra.mxu0 0
  %1275 = vmatprep.subr.bf16.mxu0 0
  %1276 = vmatpush1.bf16.msra.mxu0 0
  %1277 = vmatprep.subr.bf16.mxu0 0
  %1278 = vmatpush1.bf16.msra.mxu0 0
  %1279 = vmatprep.subr.bf16.mxu0 0
  %1280 = vmatpush1.bf16.msra.mxu0 0
  %1281 = vmatprep.subr.bf16.mxu0 0
  %1282 = vmatpush1.bf16.msra.mxu0 0
  %1283 = vmatprep.subr.bf16.mxu0 0
  %1284 = vmatpush1.bf16.msra.mxu0 0
  %1285 = vmatprep.subr.bf16.mxu0 0
  %1286 = vmatpush1.bf16.msra.mxu0 0
  %1287 = vmatprep.mubr.bf16.mxu0 0
  %1288 = vmatmul.mubr.bf16.gmra.mrb[0].mxu0 %v1228
  %v1289 = vpop.f32.mrb[0].mxu0
  %v1290 = vadd.f32 0.0, %v1289
  %v1291 = vpop.f32.mrb[0].mxu0
  %v1292 = vpop.f32.mrb[0].mxu0
  %v1293 = vadd.f32 0.0, %v1292
  %v1294 = vpop.f32.mrb[0].mxu0
  %1295 = vmatprep.mubr.bf16.mxu0 0
  %1296 = vmatmul.mubr.bf16.gmra.mrb[0].mxu0 %v1231
  %v1297 = vpop.f32.mrb[0].mxu0
  %v1298 = vadd.f32 0.0, %v1297
  %v1299 = vpop.f32.mrb[0].mxu0
  %v1300 = vpop.f32.mrb[0].mxu0
  %v1301 = vadd.f32 0.0, %v1300
  %v1302 = vpop.f32.mrb[0].mxu0
  %1303 = vmatprep.mubr.bf16.mxu0 0
  %1304 = vmatmul.mubr.bf16.gmra.mrb[0].mxu0 %v1234
  %v1305 = vpop.f32.mrb[0].mxu0
  %v1306 = vadd.f32 0.0, %v1305
  %v1307 = vpop.f32.mrb[0].mxu0
  %v1308 = vpop.f32.mrb[0].mxu0
  %v1309 = vadd.f32 0.0, %v1308
  %v1310 = vpop.f32.mrb[0].mxu0
  %1311 = vmatprep.mubr.bf16.mxu0 0
  %1312 = vmatmul.mubr.bf16.gmra.mrb[0].mxu0 %v1237
  %v1313 = vpop.f32.mrb[0].mxu0
  %v1314 = vadd.f32 0.0, %v1313
  %v1315 = vpop.f32.mrb[0].mxu0
  %v1316 = vpop.f32.mrb[0].mxu0
  %v1317 = vadd.f32 0.0, %v1316
  %v1318 = vpop.f32.mrb[0].mxu0
  %1319 = vmatprep.mubr.bf16.mxu0 0
  %1320 = vmatmul.mubr.bf16.gmra.mrb[0].mxu0 %v1240
  %v1321 = vpop.f32.mrb[0].mxu0
  %v1322 = vadd.f32 0.0, %v1321
  %v1323 = vpop.f32.mrb[0].mxu0
  %v1324 = vpop.f32.mrb[0].mxu0
  %v1325 = vadd.f32 0.0, %v1324
  %v1326 = vpop.f32.mrb[0].mxu0
  %1327 = vmatprep.mubr.bf16.mxu0 0
  %1328 = vmatmul.mubr.bf16.gmra.mrb[0].mxu0 %v1243
  %v1329 = vpop.f32.mrb[0].mxu0
  %v1330 = vadd.f32 0.0, %v1329
  %v1331 = vpop.f32.mrb[0].mxu0
  %v1332 = vpop.f32.mrb[0].mxu0
  %v1333 = vadd.f32 0.0, %v1332
  %v1334 = vpop.f32.mrb[0].mxu0
  %1335 = vmatprep.mubr.bf16.mxu0 0
  %1336 = vmatmul.mubr.bf16.gmra.mrb[0].mxu0 %v1246
  %v1337 = vpop.f32.mrb[0].mxu0
  %v1338 = vadd.f32 0.0, %v1337
  %v1339 = vpop.f32.mrb[0].mxu0
  %v1340 = vpop.f32.mrb[0].mxu0
  %v1341 = vadd.f32 0.0, %v1340
  %v1342 = vpop.f32.mrb[0].mxu0
  %1343 = vmatprep.mubr.bf16.mxu0 0
  %1344 = vmatmul.mubr.bf16.gmra.mrb[0].mxu0 %v1249
  %v1345 = vpop.f32.mrb[0].mxu0
  %v1346 = vadd.f32 0.0, %v1345
  %v1347 = vpop.f32.mrb[0].mxu0
  %v1348 = vpop.f32.mrb[0].mxu0
  %v1349 = vadd.f32 0.0, %v1348
  %v1350 = vpop.f32.mrb[0].mxu0
  %1351 = vdwg.mxu0
  %1352 = vmatprep.subr.mxu0 0.0
  %1353 = vmatpush1.msra.mxu0 %v1290
  %1354 = vmatprep.subr.mxu0 0.0
  %1355 = vmatpush1.msra.mxu0 %v1293
  %1356 = vmatprep.subr.mxu0 0.0
  %1357 = vmatpush1.msra.mxu0 %v1298
  %1358 = vmatprep.subr.mxu0 0.0
  %1359 = vmatpush1.msra.mxu0 %v1301
  %1360 = vmatprep.subr.mxu0 0.0
  %1361 = vmatpush1.msra.mxu0 %v1306
  %1362 = vmatprep.subr.mxu0 0.0
  %1363 = vmatpush1.msra.mxu0 %v1309
  %1364 = vmatprep.subr.mxu0 0.0
  %1365 = vmatpush1.msra.mxu0 %v1314
  %1366 = vmatprep.subr.mxu0 0.0
  %1367 = vmatpush1.msra.mxu0 %v1317
  %1368 = vmatprep.subr.mxu0 0.0
  %1369 = vmatpush1.msra.mxu0 %v1322
  %1370 = vmatprep.subr.mxu0 0.0
  %1371 = vmatpush1.msra.mxu0 %v1325
  %1372 = vmatprep.subr.mxu0 0.0
  %1373 = vmatpush1.msra.mxu0 %v1330
  %1374 = vmatprep.subr.mxu0 0.0
  %1375 = vmatpush1.msra.mxu0 %v1333
  %1376 = vmatprep.subr.mxu0 0.0
  %1377 = vmatpush1.msra.mxu0 %v1338
  %1378 = vmatprep.subr.mxu0 0.0
  %1379 = vmatpush1.msra.mxu0 %v1341
  %1380 = vmatprep.subr.mxu0 0.0
  %1381 = vmatpush1.msra.mxu0 %v1346
  %1382 = vmatprep.subr.mxu0 0.0
  %1383 = vmatpush1.msra.mxu0 %v1349
  %1384 = vmatprep.subr.mxu0 0.0
  %1385 = vmatpush1.msra.mxu0 0.0
  %1386 = vmatprep.subr.mxu0 0.0
  %1387 = vmatpush1.msra.mxu0 0.0
  %1388 = vmatprep.subr.mxu0 0.0
  %1389 = vmatpush1.msra.mxu0 0.0
  %1390 = vmatprep.subr.mxu0 0.0
  %1391 = vmatpush1.msra.mxu0 0.0
  %1392 = vmatprep.subr.mxu0 0.0
  %1393 = vmatpush1.msra.mxu0 0.0
  %1394 = vmatprep.subr.mxu0 0.0
  %1395 = vmatpush1.msra.mxu0 0.0
  %1396 = vmatprep.subr.mxu0 0.0
  %1397 = vmatpush1.msra.mxu0 0.0
  %1398 = vmatprep.subr.mxu0 0.0
  %1399 = vmatpush1.msra.mxu0 0.0
  %1400 = vmatprep.subr.mxu0 0.0
  %1401 = vmatpush1.msra.mxu0 0.0
  %1402 = vmatprep.subr.mxu0 0.0
  %1403 = vmatpush1.msra.mxu0 0.0
  %1404 = vmatprep.subr.mxu0 0.0
  %1405 = vmatpush1.msra.mxu0 0.0
  %1406 = vmatprep.subr.mxu0 0.0
  %1407 = vmatpush1.msra.mxu0 0.0
  %1408 = vmatprep.subr.mxu0 0.0
  %1409 = vmatpush1.msra.mxu0 0.0
  %1410 = vmatprep.subr.mxu0 0.0
  %1411 = vmatpush1.msra.mxu0 0.0
  %1412 = vmatprep.subr.mxu0 0.0
  %1413 = vmatpush1.msra.mxu0 0.0
  %1414 = vmatprep.subr.mxu0 0.0
  %1415 = vmatpush1.msra.mxu0 0.0
  %1416 = vmatprep.mubr.f32.mxu0 0.0
  %1417 = vmatmul.mubr.f32.gmra.mrb[0].mxu0 1.0
  %v1418 = vpop.f32.mrb[0].mxu0
  %v1419 = vadd.f32 0.0, %v1418
  %v1420 = vpop.f32.mrb[0].mxu0
  %1421 = vdwg.mxu0
  %v1422 = vmul.f32 %v1419, 0.0078125
  %v1423 = vlaneseq
  %v1424 = vshrl.u32 %v1423, 7
  %v1425 = vsub.s32 0, %v1424
  %v1426 = vrot.slane %v1422, %v1425
  %v1427 = vsub.f32 %v1290, %v1426
  %v1428 = vsub.f32 %v1293, %v1426
  %v1429 = vsub.f32 %v1298, %v1426
  %v1430 = vsub.f32 %v1301, %v1426
  %v1431 = vsub.f32 %v1306, %v1426
  %v1432 = vsub.f32 %v1309, %v1426
  %v1433 = vsub.f32 %v1314, %v1426
  %v1434 = vsub.f32 %v1317, %v1426
  %v1435 = vsub.f32 %v1322, %v1426
  %v1436 = vsub.f32 %v1325, %v1426
  %v1437 = vsub.f32 %v1330, %v1426
  %v1438 = vsub.f32 %v1333, %v1426
  %v1439 = vsub.f32 %v1338, %v1426
  %v1440 = vsub.f32 %v1341, %v1426
  %v1441 = vsub.f32 %v1346, %v1426
  %v1442 = vsub.f32 %v1349, %v1426
  %v1443 = vmul.f32 %v1427, %v1427
  %v1444 = vmul.f32 %v1428, %v1428
  %v1445 = vmul.f32 %v1429, %v1429
  %v1446 = vmul.f32 %v1430, %v1430
  %v1447 = vmul.f32 %v1431, %v1431
  %v1448 = vmul.f32 %v1432, %v1432
  %v1449 = vmul.f32 %v1433, %v1433
  %v1450 = vmul.f32 %v1434, %v1434
  %v1451 = vmul.f32 %v1435, %v1435
  %v1452 = vmul.f32 %v1436, %v1436
  %v1453 = vmul.f32 %v1437, %v1437
  %v1454 = vmul.f32 %v1438, %v1438
  %v1455 = vmul.f32 %v1439, %v1439
  %v1456 = vmul.f32 %v1440, %v1440
  %v1457 = vmul.f32 %v1441, %v1441
  %v1458 = vmul.f32 %v1442, %v1442
  %1459 = vmatprep.subr.mxu0 0.0
  %1460 = vmatpush1.msra.mxu0 %v1443
  %1461 = vmatprep.subr.mxu0 0.0
  %1462 = vmatpush1.msra.mxu0 %v1444
  %1463 = vmatprep.subr.mxu0 0.0
  %1464 = vmatpush1.msra.mxu0 %v1445
  %1465 = vmatprep.subr.mxu0 0.0
  %1466 = vmatpush1.msra.mxu0 %v1446
  %1467 = vmatprep.subr.mxu0 0.0
  %1468 = vmatpush1.msra.mxu0 %v1447
  %1469 = vmatprep.subr.mxu0 0.0
  %1470 = vmatpush1.msra.mxu0 %v1448
  %1471 = vmatprep.subr.mxu0 0.0
  %1472 = vmatpush1.msra.mxu0 %v1449
  %1473 = vmatprep.subr.mxu0 0.0
  %1474 = vmatpush1.msra.mxu0 %v1450
  %1475 = vmatprep.subr.mxu0 0.0
  %1476 = vmatpush1.msra.mxu0 %v1451
  %1477 = vmatprep.subr.mxu0 0.0
  %1478 = vmatpush1.msra.mxu0 %v1452
  %1479 = vmatprep.subr.mxu0 0.0
  %1480 = vmatpush1.msra.mxu0 %v1453
  %1481 = vmatprep.subr.mxu0 0.0
  %1482 = vmatpush1.msra.mxu0 %v1454
  %1483 = vmatprep.subr.mxu0 0.0
  %1484 = vmatpush1.msra.mxu0 %v1455
  %1485 = vmatprep.subr.mxu0 0.0
  %1486 = vmatpush1.msra.mxu0 %v1456
  %1487 = vmatprep.subr.mxu0 0.0
  %1488 = vmatpush1.msra.mxu0 %v1457
  %1489 = vmatprep.subr.mxu0 0.0
  %1490 = vmatpush1.msra.mxu0 %v1458
  %1491 = vmatprep.subr.mxu0 0.0
  %1492 = vmatpush1.msra.mxu0 0.0
  %1493 = vmatprep.subr.mxu0 0.0
  %1494 = vmatpush1.msra.mxu0 0.0
  %1495 = vmatprep.subr.mxu0 0.0
  %1496 = vmatpush1.msra.mxu0 0.0
  %1497 = vmatprep.subr.mxu0 0.0
  %1498 = vmatpush1.msra.mxu0 0.0
  %1499 = vmatprep.subr.mxu0 0.0
  %1500 = vmatpush1.msra.mxu0 0.0
  %1501 = vmatprep.subr.mxu0 0.0
  %1502 = vmatpush1.msra.mxu0 0.0
  %1503 = vmatprep.subr.mxu0 0.0
  %1504 = vmatpush1.msra.mxu0 0.0
  %1505 = vmatprep.subr.mxu0 0.0
  %1506 = vmatpush1.msra.mxu0 0.0
  %1507 = vmatprep.subr.mxu0 0.0
  %1508 = vmatpush1.msra.mxu0 0.0
  %1509 = vmatprep.subr.mxu0 0.0
  %1510 = vmatpush1.msra.mxu0 0.0
  %1511 = vmatprep.subr.mxu0 0.0
  %1512 = vmatpush1.msra.mxu0 0.0
  %1513 = vmatprep.subr.mxu0 0.0
  %1514 = vmatpush1.msra.mxu0 0.0
  %1515 = vmatprep.subr.mxu0 0.0
  %1516 = vmatpush1.msra.mxu0 0.0
  %1517 = vmatprep.subr.mxu0 0.0
  %1518 = vmatpush1.msra.mxu0 0.0
  %1519 = vmatprep.subr.mxu0 0.0
  %1520 = vmatpush1.msra.mxu0 0.0
  %1521 = vmatprep.subr.mxu0 0.0
  %1522 = vmatpush1.msra.mxu0 0.0
  %1523 = vmatprep.mubr.f32.mxu0 0.0
  %1524 = vmatmul.mubr.f32.gmra.mrb[0].mxu0 1.0
  %v1525 = vpop.f32.mrb[0].mxu0
  %v1526 = vadd.f32 0.0, %v1525
  %v1527 = vpop.f32.mrb[0].mxu0
  %1528 = vdwg.mxu0
  %v1529 = vmul.f32 %v1526, 0.0078125
  %v1530 = vadd.f32 %v1529, 1e-05
  %v1531 = vrsqrt.pop %v1530
  %v1532 = vmul.f32 %v1531, %v24
  %v1533 = vlaneseq
  %v1534 = vshrl.u32 %v1533, 7
  %v1535 = vsub.s32 0, %v1534
  %v1536 = vrot.slane %v1532, %v1535
  %v1537 = vmul.f32 %v1427, %v1536
  %v1538 = vmul.f32 %v1428, %v1536
  %v1539 = vmul.f32 %v1429, %v1536
  %v1540 = vmul.f32 %v1430, %v1536
  %v1541 = vmul.f32 %v1431, %v1536
  %v1542 = vmul.f32 %v1432, %v1536
  %v1543 = vmul.f32 %v1433, %v1536
  %v1544 = vmul.f32 %v1434, %v1536
  %v1545 = vmul.f32 %v1435, %v1536
  %v1546 = vmul.f32 %v1436, %v1536
  %v1547 = vmul.f32 %v1437, %v1536
  %v1548 = vmul.f32 %v1438, %v1536
  %v1549 = vmul.f32 %v1439, %v1536
  %v1550 = vmul.f32 %v1440, %v1536
  %v1551 = vmul.f32 %v1441, %v1536
  %v1552 = vmul.f32 %v1442, %v1536
  %v1554 = vlaneseq
  %v1555 = vshrl.u32 %v1554, 7
  %v1556 = vsub.s32 0, %v1555
  %v1557 = vrot.slane %v25, %v1556
  %v1559 = vadd.f32 %v1537, %v1557
  %v1560 = vadd.f32 %v1538, %v1557
  %v1561 = vadd.f32 %v1539, %v1557
  %v1562 = vadd.f32 %v1540, %v1557
  %v1563 = vadd.f32 %v1541, %v1557
  %v1564 = vadd.f32 %v1542, %v1557
  %v1565 = vadd.f32 %v1543, %v1557
  %v1566 = vadd.f32 %v1544, %v1557
  %v1567 = vadd.f32 %v1545, %v1557
  %v1568 = vadd.f32 %v1546, %v1557
  %v1569 = vadd.f32 %v1547, %v1557
  %v1570 = vadd.f32 %v1548, %v1557
  %v1571 = vadd.f32 %v1549, %v1557
  %v1572 = vadd.f32 %v1550, %v1557
  %v1573 = vadd.f32 %v1551, %v1557
  %v1574 = vadd.f32 %v1552, %v1557
  %v1575 = vmax.f32 %v1559, 0.0
  %v1576 = vmax.f32 %v1560, 0.0
  %v1577 = vmax.f32 %v1561, 0.0
  %v1578 = vmax.f32 %v1562, 0.0
  %v1579 = vmax.f32 %v1563, 0.0
  %v1580 = vmax.f32 %v1564, 0.0
  %v1581 = vmax.f32 %v1565, 0.0
  %v1582 = vmax.f32 %v1566, 0.0
  %v1583 = vmax.f32 %v1567, 0.0
  %v1584 = vmax.f32 %v1568, 0.0
  %v1585 = vmax.f32 %v1569, 0.0
  %v1586 = vmax.f32 %v1570, 0.0
  %v1587 = vmax.f32 %v1571, 0.0
  %v1588 = vmax.f32 %v1572, 0.0
  %v1589 = vmax.f32 %v1573, 0.0
  %v1590 = vmax.f32 %v1574, 0.0
  %1591 = vst.msk [vmem:[#allocation3] sm:$0xff] %vm1079, 0.0
  %vm1592 = vcmask 58368
  %1593 = vst.msk [vmem:[#allocation3 + $0x8] sm:$0x3] %vm1592, 0.0
  %1594 = vst.msk [vmem:[#allocation3 + $0x10] sm:$0xff] %vm1079, 0.0
  %1595 = vst.msk [vmem:[#allocation3 + $0x18] sm:$0x3] %vm1592, 0.0
  %1596 = vst.msk [vmem:[#allocation3 + $0x20] sm:$0xff] %vm1079, 0.0
  %1597 = vst.msk [vmem:[#allocation3 + $0x28] sm:$0x3] %vm1592, 0.0
  %1598 = vst.msk [vmem:[#allocation3 + $0x30] sm:$0xff] %vm1079, 0.0
  %1599 = vst.msk [vmem:[#allocation3 + $0x38] sm:$0x3] %vm1592, 0.0
  %1600 = vst.msk [vmem:[#allocation3 + $0x40] sm:$0xff] %vm1079, 0.0
  %1601 = vst.msk [vmem:[#allocation3 + $0x48] sm:$0x3] %vm1592, 0.0
  %1602 = vst.msk [vmem:[#allocation3 + $0x50] sm:$0xff] %vm1079, 0.0
  %1603 = vst.msk [vmem:[#allocation3 + $0x58] sm:$0x3] %vm1592, 0.0
  %1604 = vst.msk [vmem:[#allocation3 + $0x60] sm:$0xff] %vm1079, 0.0
  %1605 = vst.msk [vmem:[#allocation3 + $0x68] sm:$0x3] %vm1592, 0.0
  %1606 = vst.msk [vmem:[#allocation3 + $0x70] sm:$0xff] %vm1079, 0.0
  %1607 = vst.msk [vmem:[#allocation3 + $0x78] sm:$0x3] %vm1592, 0.0
  %1608 = vst.msk [vmem:[#allocation3 + $0x80] sm:$0xff] %vm1079, 0.0
  %1609 = vst.msk [vmem:[#allocation3 + $0x88] sm:$0x3] %vm1592, 0.0
  %1610 = vst.msk [vmem:[#allocation3 + $0x90] sm:$0xff] %vm1079, 0.0
  %1611 = vst.msk [vmem:[#allocation3 + $0x98] sm:$0x3] %vm1592, 0.0
  %1612 = vst.msk [vmem:[#allocation3 + $0xa0] sm:$0xff] %vm1079, 0.0
  %1613 = vst.msk [vmem:[#allocation3 + $0xa8] sm:$0x3] %vm1592, 0.0
  %1614 = vst.msk [vmem:[#allocation3 + $0xb0] sm:$0xff] %vm1079, 0.0
  %1615 = vst.msk [vmem:[#allocation3 + $0xb8] sm:$0x3] %vm1592, 0.0
  %1616 = vst.msk [vmem:[#allocation3 + $0xc0] sm:$0xff] %vm1079, 0.0
  %1617 = vst.msk [vmem:[#allocation3 + $0xc8] sm:$0x3] %vm1592, 0.0
  %1618 = vst.msk [vmem:[#allocation3 + $0xd0] sm:$0xff] %vm1079, 0.0
  %1619 = vst.msk [vmem:[#allocation3 + $0xd8] sm:$0x3] %vm1592, 0.0
  %1620 = vst.msk [vmem:[#allocation3 + $0xe0] sm:$0xff] %vm1079, 0.0
  %1621 = vst.msk [vmem:[#allocation3 + $0xe8] sm:$0x3] %vm1592, 0.0
  %1622 = vst.msk [vmem:[#allocation3 + $0xf0] sm:$0xff] %vm1079, 0.0
  %1623 = vst.msk [vmem:[#allocation3 + $0xf8] sm:$0x3] %vm1592, 0.0
  %1624 = vst.msk [vmem:[#allocation3 + $0x100] sm:$0xff] %vm1079, 0.0
  %1625 = vst.msk [vmem:[#allocation3 + $0x108] sm:$0x3] %vm1592, 0.0
  %1626 = vst.msk [vmem:[#allocation3 + $0x110] sm:$0xff] %vm1079, 0.0
  %1627 = vst.msk [vmem:[#allocation3 + $0x118] sm:$0x3] %vm1592, 0.0
  %1628 = vst.msk [vmem:[#allocation3 + $0x120] sm:$0xff] %vm1079, 0.0
  %1629 = vst.msk [vmem:[#allocation3 + $0x128] sm:$0x3] %vm1592, 0.0
  %1630 = vst.msk [vmem:[#allocation3 + $0x130] sm:$0xff] %vm1079, 0.0
  %1631 = vst.msk [vmem:[#allocation3 + $0x138] sm:$0x3] %vm1592, 0.0
  %s1632 = scalar_lea.vmem [#allocation3], 16
  %1633 = vst.msk [vmem:[%s1632 + $0x1] sm:$0xff] %vm1079, %v1575
  %1634 = vst.msk [vmem:[%s1632 + $0x11] sm:$0xff] %vm1079, %v1576
  %1635 = vst.msk [vmem:[%s1632 + $0x21] sm:$0xff] %vm1079, %v1577
  %1636 = vst.msk [vmem:[%s1632 + $0x31] sm:$0xff] %vm1079, %v1578
  %1637 = vst.msk [vmem:[%s1632 + $0x41] sm:$0xff] %vm1079, %v1579
  %1638 = vst.msk [vmem:[%s1632 + $0x51] sm:$0xff] %vm1079, %v1580
  %1639 = vst.msk [vmem:[%s1632 + $0x61] sm:$0xff] %vm1079, %v1581
  %1640 = vst.msk [vmem:[%s1632 + $0x71] sm:$0xff] %vm1079, %v1582
  %1641 = vst.msk [vmem:[%s1632 + $0xa1] sm:$0xff] %vm1079, %v1583
  %1642 = vst.msk [vmem:[%s1632 + $0xb1] sm:$0xff] %vm1079, %v1584
  %1643 = vst.msk [vmem:[%s1632 + $0xc1] sm:$0xff] %vm1079, %v1585
  %1644 = vst.msk [vmem:[%s1632 + $0xd1] sm:$0xff] %vm1079, %v1586
  %1645 = vst.msk [vmem:[%s1632 + $0xe1] sm:$0xff] %vm1079, %v1587
  %1646 = vst.msk [vmem:[%s1632 + $0xf1] sm:$0xff] %vm1079, %v1588
  %1647 = vst.msk [vmem:[%s1632 + $0x101] sm:$0xff] %vm1079, %v1589
  %1648 = vst.msk [vmem:[%s1632 + $0x111] sm:$0xff] %vm1079, %v1590
  %v1649 = vld [vmem:[#allocation3] sm:$0xff]
  %v1650 = vld [vmem:[#allocation3 + $0x10] sm:$0xff]
  %v1651 = vld [vmem:[#allocation3 + $0x20] sm:$0xff]
  %v1652 = vld [vmem:[#allocation3 + $0x30] sm:$0xff]
  %v1653 = vld [vmem:[#allocation3 + $0x40] sm:$0xff]
  %v1654 = vld [vmem:[#allocation3 + $0x50] sm:$0xff]
  %v1655 = vld [vmem:[#allocation3 + $0x60] sm:$0xff]
  %v1656 = vld [vmem:[#allocation3 + $0x70] sm:$0xff]
  %v1657 = vld [vmem:[#allocation3 + $0xa0] sm:$0xff]
  %v1658 = vld [vmem:[#allocation3 + $0xb0] sm:$0xff]
  %v1659 = vld [vmem:[#allocation3 + $0xc0] sm:$0xff]
  %v1660 = vld [vmem:[#allocation3 + $0xd0] sm:$0xff]
  %v1661 = vld [vmem:[#allocation3 + $0xe0] sm:$0xff]
  %v1662 = vld [vmem:[#allocation3 + $0xf0] sm:$0xff]
  %v1663 = vld [vmem:[#allocation3 + $0x100] sm:$0xff]
  %v1664 = vld [vmem:[#allocation3 + $0x110] sm:$0xff]
  %v1665 = vld [vmem:[#allocation3 + $0x1] sm:$0xff]
  %v1666 = vld [vmem:[#allocation3 + $0x11] sm:$0xff]
  %v1667 = vld [vmem:[#allocation3 + $0x21] sm:$0xff]
  %v1668 = vld [vmem:[#allocation3 + $0x31] sm:$0xff]
  %v1669 = vld [vmem:[#allocation3 + $0x41] sm:$0xff]
  %v1670 = vld [vmem:[#allocation3 + $0x51] sm:$0xff]
  %v1671 = vld [vmem:[#allocation3 + $0x61] sm:$0xff]
  %v1672 = vld [vmem:[#allocation3 + $0x71] sm:$0xff]
  %v1673 = vld [vmem:[#allocation3 + $0xa1] sm:$0xff]
  %v1674 = vld [vmem:[#allocation3 + $0xb1] sm:$0xff]
  %v1675 = vld [vmem:[#allocation3 + $0xc1] sm:$0xff]
  %v1676 = vld [vmem:[#allocation3 + $0xd1] sm:$0xff]
  %v1677 = vld [vmem:[#allocation3 + $0xe1] sm:$0xff]
  %v1678 = vld [vmem:[#allocation3 + $0xf1] sm:$0xff]
  %v1679 = vld [vmem:[#allocation3 + $0x101] sm:$0xff]
  %v1680 = vld [vmem:[#allocation3 + $0x111] sm:$0xff]
  %v1681 = vld [vmem:[#allocation3 + $0x2] sm:$0xff]
  %v1682 = vld [vmem:[#allocation3 + $0x12] sm:$0xff]
  %v1683 = vld [vmem:[#allocation3 + $0x22] sm:$0xff]
  %v1684 = vld [vmem:[#allocation3 + $0x32] sm:$0xff]
  %v1685 = vld [vmem:[#allocation3 + $0x42] sm:$0xff]
  %v1686 = vld [vmem:[#allocation3 + $0x52] sm:$0xff]
  %v1687 = vld [vmem:[#allocation3 + $0x62] sm:$0xff]
  %v1688 = vld [vmem:[#allocation3 + $0x72] sm:$0xff]
  %v1689 = vld [vmem:[#allocation3 + $0xa2] sm:$0xff]
  %v1690 = vld [vmem:[#allocation3 + $0xb2] sm:$0xff]
  %v1691 = vld [vmem:[#allocation3 + $0xc2] sm:$0xff]
  %v1692 = vld [vmem:[#allocation3 + $0xd2] sm:$0xff]
  %v1693 = vld [vmem:[#allocation3 + $0xe2] sm:$0xff]
  %v1694 = vld [vmem:[#allocation3 + $0xf2] sm:$0xff]
  %v1695 = vld [vmem:[#allocation3 + $0x102] sm:$0xff]
  %v1696 = vld [vmem:[#allocation3 + $0x112] sm:$0xff]
  %v1697 = vld [vmem:[%s1632] sm:$0xff]
  %v1698 = vld [vmem:[%s1632 + $0x10] sm:$0xff]
  %v1699 = vld [vmem:[%s1632 + $0x20] sm:$0xff]
  %v1700 = vld [vmem:[%s1632 + $0x30] sm:$0xff]
  %v1701 = vld [vmem:[%s1632 + $0x40] sm:$0xff]
  %v1702 = vld [vmem:[%s1632 + $0x50] sm:$0xff]
  %v1703 = vld [vmem:[%s1632 + $0x60] sm:$0xff]
  %v1704 = vld [vmem:[%s1632 + $0x70] sm:$0xff]
  %v1705 = vld [vmem:[%s1632 + $0xa0] sm:$0xff]
  %v1706 = vld [vmem:[%s1632 + $0xb0] sm:$0xff]
  %v1707 = vld [vmem:[%s1632 + $0xc0] sm:$0xff]
  %v1708 = vld [vmem:[%s1632 + $0xd0] sm:$0xff]
  %v1709 = vld [vmem:[%s1632 + $0xe0] sm:$0xff]
  %v1710 = vld [vmem:[%s1632 + $0xf0] sm:$0xff]
  %v1711 = vld [vmem:[%s1632 + $0x100] sm:$0xff]
  %v1712 = vld [vmem:[%s1632 + $0x110] sm:$0xff]
  %v1713 = vld [vmem:[%s1632 + $0x1] sm:$0xff]
  %v1714 = vld [vmem:[%s1632 + $0x11] sm:$0xff]
  %v1715 = vld [vmem:[%s1632 + $0x21] sm:$0xff]
  %v1716 = vld [vmem:[%s1632 + $0x31] sm:$0xff]
  %v1717 = vld [vmem:[%s1632 + $0x41] sm:$0xff]
  %v1718 = vld [vmem:[%s1632 + $0x51] sm:$0xff]
  %v1719 = vld [vmem:[%s1632 + $0x61] sm:$0xff]
  %v1720 = vld [vmem:[%s1632 + $0x71] sm:$0xff]
  %v1721 = vld [vmem:[%s1632 + $0xa1] sm:$0xff]
  %v1722 = vld [vmem:[%s1632 + $0xb1] sm:$0xff]
  %v1723 = vld [vmem:[%s1632 + $0xc1] sm:$0xff]
  %v1724 = vld [vmem:[%s1632 + $0xd1] sm:$0xff]
  %v1725 = vld [vmem:[%s1632 + $0xe1] sm:$0xff]
  %v1726 = vld [vmem:[%s1632 + $0xf1] sm:$0xff]
  %v1727 = vld [vmem:[%s1632 + $0x101] sm:$0xff]
  %v1728 = vld [vmem:[%s1632 + $0x111] sm:$0xff]
  %v1729 = vld [vmem:[%s1632 + $0x2] sm:$0xff]
  %v1730 = vld [vmem:[%s1632 + $0x12] sm:$0xff]
  %v1731 = vld [vmem:[%s1632 + $0x22] sm:$0xff]
  %v1732 = vld [vmem:[%s1632 + $0x32] sm:$0xff]
  %v1733 = vld [vmem:[%s1632 + $0x42] sm:$0xff]
  %v1734 = vld [vmem:[%s1632 + $0x52] sm:$0xff]
  %v1735 = vld [vmem:[%s1632 + $0x62] sm:$0xff]
  %v1736 = vld [vmem:[%s1632 + $0x72] sm:$0xff]
  %v1737 = vld [vmem:[%s1632 + $0xa2] sm:$0xff]
  %v1738 = vld [vmem:[%s1632 + $0xb2] sm:$0xff]
  %v1739 = vld [vmem:[%s1632 + $0xc2] sm:$0xff]
  %v1740 = vld [vmem:[%s1632 + $0xd2] sm:$0xff]
  %v1741 = vld [vmem:[%s1632 + $0xe2] sm:$0xff]
  %v1742 = vld [vmem:[%s1632 + $0xf2] sm:$0xff]
  %v1743 = vld [vmem:[%s1632 + $0x102] sm:$0xff]
  %v1744 = vld [vmem:[%s1632 + $0x112] sm:$0xff]
  %s1745 = scalar_lea.vmem [#allocation3], 32
  %v1746 = vld [vmem:[%s1745] sm:$0xff]
  %v1747 = vld [vmem:[%s1745 + $0x10] sm:$0xff]
  %v1748 = vld [vmem:[%s1745 + $0x20] sm:$0xff]
  %v1749 = vld [vmem:[%s1745 + $0x30] sm:$0xff]
  %v1750 = vld [vmem:[%s1745 + $0x40] sm:$0xff]
  %v1751 = vld [vmem:[%s1745 + $0x50] sm:$0xff]
  %v1752 = vld [vmem:[%s1745 + $0x60] sm:$0xff]
  %v1753 = vld [vmem:[%s1745 + $0x70] sm:$0xff]
  %v1754 = vld [vmem:[%s1745 + $0xa0] sm:$0xff]
  %v1755 = vld [vmem:[%s1745 + $0xb0] sm:$0xff]
  %v1756 = vld [vmem:[%s1745 + $0xc0] sm:$0xff]
  %v1757 = vld [vmem:[%s1745 + $0xd0] sm:$0xff]
  %v1758 = vld [vmem:[%s1745 + $0xe0] sm:$0xff]
  %v1759 = vld [vmem:[%s1745 + $0xf0] sm:$0xff]
  %v1760 = vld [vmem:[%s1745 + $0x100] sm:$0xff]
  %v1761 = vld [vmem:[%s1745 + $0x110] sm:$0xff]
  %v1762 = vld [vmem:[%s1745 + $0x1] sm:$0xff]
  %v1763 = vld [vmem:[%s1745 + $0x11] sm:$0xff]
  %v1764 = vld [vmem:[%s1745 + $0x21] sm:$0xff]
  %v1765 = vld [vmem:[%s1745 + $0x31] sm:$0xff]
  %v1766 = vld [vmem:[%s1745 + $0x41] sm:$0xff]
  %v1767 = vld [vmem:[%s1745 + $0x51] sm:$0xff]
  %v1768 = vld [vmem:[%s1745 + $0x61] sm:$0xff]
  %v1769 = vld [vmem:[%s1745 + $0x71] sm:$0xff]
  %v1770 = vld [vmem:[%s1745 + $0xa1] sm:$0xff]
  %v1771 = vld [vmem:[%s1745 + $0xb1] sm:$0xff]
  %v1772 = vld [vmem:[%s1745 + $0xc1] sm:$0xff]
  %v1773 = vld [vmem:[%s1745 + $0xd1] sm:$0xff]
  %v1774 = vld [vmem:[%s1745 + $0xe1] sm:$0xff]
  %v1775 = vld [vmem:[%s1745 + $0xf1] sm:$0xff]
  %v1776 = vld [vmem:[%s1745 + $0x101] sm:$0xff]
  %v1777 = vld [vmem:[%s1745 + $0x111] sm:$0xff]
  %v1778 = vld [vmem:[%s1745 + $0x2] sm:$0xff]
  %v1779 = vld [vmem:[%s1745 + $0x12] sm:$0xff]
  %v1780 = vld [vmem:[%s1745 + $0x22] sm:$0xff]
  %v1781 = vld [vmem:[%s1745 + $0x32] sm:$0xff]
  %v1782 = vld [vmem:[%s1745 + $0x42] sm:$0xff]
  %v1783 = vld [vmem:[%s1745 + $0x52] sm:$0xff]
  %v1784 = vld [vmem:[%s1745 + $0x62] sm:$0xff]
  %v1785 = vld [vmem:[%s1745 + $0x72] sm:$0xff]
  %v1786 = vld [vmem:[%s1745 + $0xa2] sm:$0xff]
  %v1787 = vld [vmem:[%s1745 + $0xb2] sm:$0xff]
  %v1788 = vld [vmem:[%s1745 + $0xc2] sm:$0xff]
  %v1789 = vld [vmem:[%s1745 + $0xd2] sm:$0xff]
  %v1790 = vld [vmem:[%s1745 + $0xe2] sm:$0xff]
  %v1791 = vld [vmem:[%s1745 + $0xf2] sm:$0xff]
  %v1792 = vld [vmem:[%s1745 + $0x102] sm:$0xff]
  %v1793 = vld [vmem:[%s1745 + $0x112] sm:$0xff]
  %1810 = vrot.lane.b32.xlu0 %v1665, 8
  %v1811 = vpop.permute.xlu0 %1810
  %1812 = vrot.lane.b32.xlu0 %v1666, 8
  %v1813 = vpop.permute.xlu0 %1812
  %1814 = vrot.lane.b32.xlu0 %v1667, 8
  %v1815 = vpop.permute.xlu0 %1814
  %1816 = vrot.lane.b32.xlu0 %v1668, 8
  %v1817 = vpop.permute.xlu0 %1816
  %1818 = vrot.lane.b32.xlu0 %v1669, 8
  %v1819 = vpop.permute.xlu0 %1818
  %1820 = vrot.lane.b32.xlu0 %v1670, 8
  %v1821 = vpop.permute.xlu0 %1820
  %1822 = vrot.lane.b32.xlu0 %v1671, 8
  %v1823 = vpop.permute.xlu0 %1822
  %1824 = vrot.lane.b32.xlu0 %v1672, 8
  %v1825 = vpop.permute.xlu0 %1824
  %1826 = vrot.lane.b32.xlu0 %v1673, 8
  %v1827 = vpop.permute.xlu0 %1826
  %1828 = vrot.lane.b32.xlu0 %v1674, 8
  %v1829 = vpop.permute.xlu0 %1828
  %1830 = vrot.lane.b32.xlu0 %v1675, 8
  %v1831 = vpop.permute.xlu0 %1830
  %1832 = vrot.lane.b32.xlu0 %v1676, 8
  %v1833 = vpop.permute.xlu0 %1832
  %1834 = vrot.lane.b32.xlu0 %v1677, 8
  %v1835 = vpop.permute.xlu0 %1834
  %1836 = vrot.lane.b32.xlu0 %v1678, 8
  %v1837 = vpop.permute.xlu0 %1836
  %1838 = vrot.lane.b32.xlu0 %v1679, 8
  %v1839 = vpop.permute.xlu0 %1838
  %1840 = vrot.lane.b32.xlu0 %v1680, 8
  %v1841 = vpop.permute.xlu0 %1840
  %1874 = vrot.lane.b32.xlu0 %v1681, 16
  %v1875 = vpop.permute.xlu0 %1874
  %1876 = vrot.lane.b32.xlu0 %v1682, 16
  %v1877 = vpop.permute.xlu0 %1876
  %1878 = vrot.lane.b32.xlu0 %v1683, 16
  %v1879 = vpop.permute.xlu0 %1878
  %1880 = vrot.lane.b32.xlu0 %v1684, 16
  %v1881 = vpop.permute.xlu0 %1880
  %1882 = vrot.lane.b32.xlu0 %v1685, 16
  %v1883 = vpop.permute.xlu0 %1882
  %1884 = vrot.lane.b32.xlu0 %v1686, 16
  %v1885 = vpop.permute.xlu0 %1884
  %1886 = vrot.lane.b32.xlu0 %v1687, 16
  %v1887 = vpop.permute.xlu0 %1886
  %1888 = vrot.lane.b32.xlu0 %v1688, 16
  %v1889 = vpop.permute.xlu0 %1888
  %1890 = vrot.lane.b32.xlu0 %v1689, 16
  %v1891 = vpop.permute.xlu0 %1890
  %1892 = vrot.lane.b32.xlu0 %v1690, 16
  %v1893 = vpop.permute.xlu0 %1892
  %1894 = vrot.lane.b32.xlu0 %v1691, 16
  %v1895 = vpop.permute.xlu0 %1894
  %1896 = vrot.lane.b32.xlu0 %v1692, 16
  %v1897 = vpop.permute.xlu0 %1896
  %1898 = vrot.lane.b32.xlu0 %v1693, 16
  %v1899 = vpop.permute.xlu0 %1898
  %1900 = vrot.lane.b32.xlu0 %v1694, 16
  %v1901 = vpop.permute.xlu0 %1900
  %1902 = vrot.lane.b32.xlu0 %v1695, 16
  %v1903 = vpop.permute.xlu0 %1902
  %1904 = vrot.lane.b32.xlu0 %v1696, 16
  %v1905 = vpop.permute.xlu0 %1904
  %1938 = vrot.lane.b32.xlu0 %v1697, 24
  %v1939 = vpop.permute.xlu0 %1938
  %1940 = vrot.lane.b32.xlu0 %v1698, 24
  %v1941 = vpop.permute.xlu0 %1940
  %1942 = vrot.lane.b32.xlu0 %v1699, 24
  %v1943 = vpop.permute.xlu0 %1942
  %1944 = vrot.lane.b32.xlu0 %v1700, 24
  %v1945 = vpop.permute.xlu0 %1944
  %1946 = vrot.lane.b32.xlu0 %v1701, 24
  %v1947 = vpop.permute.xlu0 %1946
  %1948 = vrot.lane.b32.xlu0 %v1702, 24
  %v1949 = vpop.permute.xlu0 %1948
  %1950 = vrot.lane.b32.xlu0 %v1703, 24
  %v1951 = vpop.permute.xlu0 %1950
  %1952 = vrot.lane.b32.xlu0 %v1704, 24
  %v1953 = vpop.permute.xlu0 %1952
  %1954 = vrot.lane.b32.xlu0 %v1705, 24
  %v1955 = vpop.permute.xlu0 %1954
  %1956 = vrot.lane.b32.xlu0 %v1706, 24
  %v1957 = vpop.permute.xlu0 %1956
  %1958 = vrot.lane.b32.xlu0 %v1707, 24
  %v1959 = vpop.permute.xlu0 %1958
  %1960 = vrot.lane.b32.xlu0 %v1708, 24
  %v1961 = vpop.permute.xlu0 %1960
  %1962 = vrot.lane.b32.xlu0 %v1709, 24
  %v1963 = vpop.permute.xlu0 %1962
  %1964 = vrot.lane.b32.xlu0 %v1710, 24
  %v1965 = vpop.permute.xlu0 %1964
  %1966 = vrot.lane.b32.xlu0 %v1711, 24
  %v1967 = vpop.permute.xlu0 %1966
  %1968 = vrot.lane.b32.xlu0 %v1712, 24
  %v1969 = vpop.permute.xlu0 %1968
  %2002 = vrot.lane.b32.xlu0 %v1713, 32
  %v2003 = vpop.permute.xlu0 %2002
  %2004 = vrot.lane.b32.xlu0 %v1714, 32
  %v2005 = vpop.permute.xlu0 %2004
  %2006 = vrot.lane.b32.xlu0 %v1715, 32
  %v2007 = vpop.permute.xlu0 %2006
  %2008 = vrot.lane.b32.xlu0 %v1716, 32
  %v2009 = vpop.permute.xlu0 %2008
  %2010 = vrot.lane.b32.xlu0 %v1717, 32
  %v2011 = vpop.permute.xlu0 %2010
  %2012 = vrot.lane.b32.xlu0 %v1718, 32
  %v2013 = vpop.permute.xlu0 %2012
  %2014 = vrot.lane.b32.xlu0 %v1719, 32
  %v2015 = vpop.permute.xlu0 %2014
  %2016 = vrot.lane.b32.xlu0 %v1720, 32
  %v2017 = vpop.permute.xlu0 %2016
  %2018 = vrot.lane.b32.xlu0 %v1721, 32
  %v2019 = vpop.permute.xlu0 %2018
  %2020 = vrot.lane.b32.xlu0 %v1722, 32
  %v2021 = vpop.permute.xlu0 %2020
  %2022 = vrot.lane.b32.xlu0 %v1723, 32
  %v2023 = vpop.permute.xlu0 %2022
  %2024 = vrot.lane.b32.xlu0 %v1724, 32
  %v2025 = vpop.permute.xlu0 %2024
  %2026 = vrot.lane.b32.xlu0 %v1725, 32
  %v2027 = vpop.permute.xlu0 %2026
  %2028 = vrot.lane.b32.xlu0 %v1726, 32
  %v2029 = vpop.permute.xlu0 %2028
  %2030 = vrot.lane.b32.xlu0 %v1727, 32
  %v2031 = vpop.permute.xlu0 %2030
  %2032 = vrot.lane.b32.xlu0 %v1728, 32
  %v2033 = vpop.permute.xlu0 %2032
  %2066 = vrot.lane.b32.xlu0 %v1729, 40
  %v2067 = vpop.permute.xlu0 %2066
  %2068 = vrot.lane.b32.xlu0 %v1730, 40
  %v2069 = vpop.permute.xlu0 %2068
  %2070 = vrot.lane.b32.xlu0 %v1731, 40
  %v2071 = vpop.permute.xlu0 %2070
  %2072 = vrot.lane.b32.xlu0 %v1732, 40
  %v2073 = vpop.permute.xlu0 %2072
  %2074 = vrot.lane.b32.xlu0 %v1733, 40
  %v2075 = vpop.permute.xlu0 %2074
  %2076 = vrot.lane.b32.xlu0 %v1734, 40
  %v2077 = vpop.permute.xlu0 %2076
  %2078 = vrot.lane.b32.xlu0 %v1735, 40
  %v2079 = vpop.permute.xlu0 %2078
  %2080 = vrot.lane.b32.xlu0 %v1736, 40
  %v2081 = vpop.permute.xlu0 %2080
  %2082 = vrot.lane.b32.xlu0 %v1737, 40
  %v2083 = vpop.permute.xlu0 %2082
  %2084 = vrot.lane.b32.xlu0 %v1738, 40
  %v2085 = vpop.permute.xlu0 %2084
  %2086 = vrot.lane.b32.xlu0 %v1739, 40
  %v2087 = vpop.permute.xlu0 %2086
  %2088 = vrot.lane.b32.xlu0 %v1740, 40
  %v2089 = vpop.permute.xlu0 %2088
  %2090 = vrot.lane.b32.xlu0 %v1741, 40
  %v2091 = vpop.permute.xlu0 %2090
  %2092 = vrot.lane.b32.xlu0 %v1742, 40
  %v2093 = vpop.permute.xlu0 %2092
  %2094 = vrot.lane.b32.xlu0 %v1743, 40
  %v2095 = vpop.permute.xlu0 %2094
  %2096 = vrot.lane.b32.xlu0 %v1744, 40
  %v2097 = vpop.permute.xlu0 %2096
  %2130 = vrot.lane.b32.xlu0 %v1746, 48
  %v2131 = vpop.permute.xlu0 %2130
  %2132 = vrot.lane.b32.xlu0 %v1747, 48
  %v2133 = vpop.permute.xlu0 %2132
  %2134 = vrot.lane.b32.xlu0 %v1748, 48
  %v2135 = vpop.permute.xlu0 %2134
  %2136 = vrot.lane.b32.xlu0 %v1749, 48
  %v2137 = vpop.permute.xlu0 %2136
  %2138 = vrot.lane.b32.xlu0 %v1750, 48
  %v2139 = vpop.permute.xlu0 %2138
  %2140 = vrot.lane.b32.xlu0 %v1751, 48
  %v2141 = vpop.permute.xlu0 %2140
  %2142 = vrot.lane.b32.xlu0 %v1752, 48
  %v2143 = vpop.permute.xlu0 %2142
  %2144 = vrot.lane.b32.xlu0 %v1753, 48
  %v2145 = vpop.permute.xlu0 %2144
  %2146 = vrot.lane.b32.xlu0 %v1754, 48
  %v2147 = vpop.permute.xlu0 %2146
  %2148 = vrot.lane.b32.xlu0 %v1755, 48
  %v2149 = vpop.permute.xlu0 %2148
  %2150 = vrot.lane.b32.xlu0 %v1756, 48
  %v2151 = vpop.permute.xlu0 %2150
  %2152 = vrot.lane.b32.xlu0 %v1757, 48
  %v2153 = vpop.permute.xlu0 %2152
  %2154 = vrot.lane.b32.xlu0 %v1758, 48
  %v2155 = vpop.permute.xlu0 %2154
  %2156 = vrot.lane.b32.xlu0 %v1759, 48
  %v2157 = vpop.permute.xlu0 %2156
  %2158 = vrot.lane.b32.xlu0 %v1760, 48
  %v2159 = vpop.permute.xlu0 %2158
  %2160 = vrot.lane.b32.xlu0 %v1761, 48
  %v2161 = vpop.permute.xlu0 %2160
  %2194 = vrot.lane.b32.xlu0 %v1762, 56
  %v2195 = vpop.permute.xlu0 %2194
  %2196 = vrot.lane.b32.xlu0 %v1763, 56
  %v2197 = vpop.permute.xlu0 %2196
  %2198 = vrot.lane.b32.xlu0 %v1764, 56
  %v2199 = vpop.permute.xlu0 %2198
  %2200 = vrot.lane.b32.xlu0 %v1765, 56
  %v2201 = vpop.permute.xlu0 %2200
  %2202 = vrot.lane.b32.xlu0 %v1766, 56
  %v2203 = vpop.permute.xlu0 %2202
  %2204 = vrot.lane.b32.xlu0 %v1767, 56
  %v2205 = vpop.permute.xlu0 %2204
  %2206 = vrot.lane.b32.xlu0 %v1768, 56
  %v2207 = vpop.permute.xlu0 %2206
  %2208 = vrot.lane.b32.xlu0 %v1769, 56
  %v2209 = vpop.permute.xlu0 %2208
  %2210 = vrot.lane.b32.xlu0 %v1770, 56
  %v2211 = vpop.permute.xlu0 %2210
  %2212 = vrot.lane.b32.xlu0 %v1771, 56
  %v2213 = vpop.permute.xlu0 %2212
  %2214 = vrot.lane.b32.xlu0 %v1772, 56
  %v2215 = vpop.permute.xlu0 %2214
  %2216 = vrot.lane.b32.xlu0 %v1773, 56
  %v2217 = vpop.permute.xlu0 %2216
  %2218 = vrot.lane.b32.xlu0 %v1774, 56
  %v2219 = vpop.permute.xlu0 %2218
  %2220 = vrot.lane.b32.xlu0 %v1775, 56
  %v2221 = vpop.permute.xlu0 %2220
  %2222 = vrot.lane.b32.xlu0 %v1776, 56
  %v2223 = vpop.permute.xlu0 %2222
  %2224 = vrot.lane.b32.xlu0 %v1777, 56
  %v2225 = vpop.permute.xlu0 %2224
  %2258 = vrot.lane.b32.xlu0 %v1778, 64
  %v2259 = vpop.permute.xlu0 %2258
  %2260 = vrot.lane.b32.xlu0 %v1779, 64
  %v2261 = vpop.permute.xlu0 %2260
  %2262 = vrot.lane.b32.xlu0 %v1780, 64
  %v2263 = vpop.permute.xlu0 %2262
  %2264 = vrot.lane.b32.xlu0 %v1781, 64
  %v2265 = vpop.permute.xlu0 %2264
  %2266 = vrot.lane.b32.xlu0 %v1782, 64
  %v2267 = vpop.permute.xlu0 %2266
  %2268 = vrot.lane.b32.xlu0 %v1783, 64
  %v2269 = vpop.permute.xlu0 %2268
  %2270 = vrot.lane.b32.xlu0 %v1784, 64
  %v2271 = vpop.permute.xlu0 %2270
  %2272 = vrot.lane.b32.xlu0 %v1785, 64
  %v2273 = vpop.permute.xlu0 %2272
  %2274 = vrot.lane.b32.xlu0 %v1786, 64
  %v2275 = vpop.permute.xlu0 %2274
  %2276 = vrot.lane.b32.xlu0 %v1787, 64
  %v2277 = vpop.permute.xlu0 %2276
  %2278 = vrot.lane.b32.xlu0 %v1788, 64
  %v2279 = vpop.permute.xlu0 %2278
  %2280 = vrot.lane.b32.xlu0 %v1789, 64
  %v2281 = vpop.permute.xlu0 %2280
  %2282 = vrot.lane.b32.xlu0 %v1790, 64
  %v2283 = vpop.permute.xlu0 %2282
  %2284 = vrot.lane.b32.xlu0 %v1791, 64
  %v2285 = vpop.permute.xlu0 %2284
  %2286 = vrot.lane.b32.xlu0 %v1792, 64
  %v2287 = vpop.permute.xlu0 %2286
  %2288 = vrot.lane.b32.xlu0 %v1793, 64
  %v2289 = vpop.permute.xlu0 %2288
  %v2306 = vsel %vm1079, %v1649, %v1811
  %v2307 = vsel %vm1079, %v1650, %v1813
  %v2308 = vsel %vm1079, %v1651, %v1815
  %v2309 = vsel %vm1079, %v1652, %v1817
  %v2310 = vsel %vm1079, %v1653, %v1819
  %v2311 = vsel %vm1079, %v1654, %v1821
  %v2312 = vsel %vm1079, %v1655, %v1823
  %v2313 = vsel %vm1079, %v1656, %v1825
  %v2314 = vsel %vm1079, %v1657, %v1827
  %v2315 = vsel %vm1079, %v1658, %v1829
  %v2316 = vsel %vm1079, %v1659, %v1831
  %v2317 = vsel %vm1079, %v1660, %v1833
  %v2318 = vsel %vm1079, %v1661, %v1835
  %v2319 = vsel %vm1079, %v1662, %v1837
  %v2320 = vsel %vm1079, %v1663, %v1839
  %v2321 = vsel %vm1079, %v1664, %v1841
  %v2322 = vsel %vm1113, %v2306, %v1875
  %v2323 = vsel %vm1113, %v2307, %v1877
  %v2324 = vsel %vm1113, %v2308, %v1879
  %v2325 = vsel %vm1113, %v2309, %v1881
  %v2326 = vsel %vm1113, %v2310, %v1883
  %v2327 = vsel %vm1113, %v2311, %v1885
  %v2328 = vsel %vm1113, %v2312, %v1887
  %v2329 = vsel %vm1113, %v2313, %v1889
  %v2330 = vsel %vm1113, %v2314, %v1891
  %v2331 = vsel %vm1113, %v2315, %v1893
  %v2332 = vsel %vm1113, %v2316, %v1895
  %v2333 = vsel %vm1113, %v2317, %v1897
  %v2334 = vsel %vm1113, %v2318, %v1899
  %v2335 = vsel %vm1113, %v2319, %v1901
  %v2336 = vsel %vm1113, %v2320, %v1903
  %v2337 = vsel %vm1113, %v2321, %v1905
  %v2338 = vsel %vm1147, %v2322, %v1939
  %v2339 = vsel %vm1147, %v2323, %v1941
  %v2340 = vsel %vm1147, %v2324, %v1943
  %v2341 = vsel %vm1147, %v2325, %v1945
  %v2342 = vsel %vm1147, %v2326, %v1947
  %v2343 = vsel %vm1147, %v2327, %v1949
  %v2344 = vsel %vm1147, %v2328, %v1951
  %v2345 = vsel %vm1147, %v2329, %v1953
  %v2346 = vsel %vm1147, %v2330, %v1955
  %v2347 = vsel %vm1147, %v2331, %v1957
  %v2348 = vsel %vm1147, %v2332, %v1959
  %v2349 = vsel %vm1147, %v2333, %v1961
  %v2350 = vsel %vm1147, %v2334, %v1963
  %v2351 = vsel %vm1147, %v2335, %v1965
  %v2352 = vsel %vm1147, %v2336, %v1967
  %v2353 = vsel %vm1147, %v2337, %v1969
  %v2354 = vsel %vm1181, %v2338, %v2003
  %v2355 = vsel %vm1181, %v2339, %v2005
  %v2356 = vsel %vm1181, %v2340, %v2007
  %v2357 = vsel %vm1181, %v2341, %v2009
  %v2358 = vsel %vm1181, %v2342, %v2011
  %v2359 = vsel %vm1181, %v2343, %v2013
  %v2360 = vsel %vm1181, %v2344, %v2015
  %v2361 = vsel %vm1181, %v2345, %v2017
  %v2362 = vsel %vm1181, %v2346, %v2019
  %v2363 = vsel %vm1181, %v2347, %v2021
  %v2364 = vsel %vm1181, %v2348, %v2023
  %v2365 = vsel %vm1181, %v2349, %v2025
  %v2366 = vsel %vm1181, %v2350, %v2027
  %v2367 = vsel %vm1181, %v2351, %v2029
  %v2368 = vsel %vm1181, %v2352, %v2031
  %v2369 = vsel %vm1181, %v2353, %v2033
  %vm2370 = vcmask 326656
  %v2371 = vsel %vm2370, %v2354, %v2067
  %v2372 = vsel %vm2370, %v2355, %v2069
  %v2373 = vsel %vm2370, %v2356, %v2071
  %v2374 = vsel %vm2370, %v2357, %v2073
  %v2375 = vsel %vm2370, %v2358, %v2075
  %v2376 = vsel %vm2370, %v2359, %v2077
  %v2377 = vsel %vm2370, %v2360, %v2079
  %v2378 = vsel %vm2370, %v2361, %v2081
  %v2379 = vsel %vm2370, %v2362, %v2083
  %v2380 = vsel %vm2370, %v2363, %v2085
  %v2381 = vsel %vm2370, %v2364, %v2087
  %v2382 = vsel %vm2370, %v2365, %v2089
  %v2383 = vsel %vm2370, %v2366, %v2091
  %v2384 = vsel %vm2370, %v2367, %v2093
  %v2385 = vsel %vm2370, %v2368, %v2095
  %v2386 = vsel %vm2370, %v2369, %v2097
  %vm2387 = vcmask 392192
  %v2388 = vsel %vm2387, %v2371, %v2131
  %v2389 = vsel %vm2387, %v2372, %v2133
  %v2390 = vsel %vm2387, %v2373, %v2135
  %v2391 = vsel %vm2387, %v2374, %v2137
  %v2392 = vsel %vm2387, %v2375, %v2139
  %v2393 = vsel %vm2387, %v2376, %v2141
  %v2394 = vsel %vm2387, %v2377, %v2143
  %v2395 = vsel %vm2387, %v2378, %v2145
  %v2396 = vsel %vm2387, %v2379, %v2147
  %v2397 = vsel %vm2387, %v2380, %v2149
  %v2398 = vsel %vm2387, %v2381, %v2151
  %v2399 = vsel %vm2387, %v2382, %v2153
  %v2400 = vsel %vm2387, %v2383, %v2155
  %v2401 = vsel %vm2387, %v2384, %v2157
  %v2402 = vsel %vm2387, %v2385, %v2159
  %v2403 = vsel %vm2387, %v2386, %v2161
  %vm2404 = vcmask 457728
  %v2405 = vsel %vm2404, %v2388, %v2195
  %v2406 = vsel %vm2404, %v2389, %v2197
  %v2407 = vsel %vm2404, %v2390, %v2199
  %v2408 = vsel %vm2404, %v2391, %v2201
  %v2409 = vsel %vm2404, %v2392, %v2203
  %v2410 = vsel %vm2404, %v2393, %v2205
  %v2411 = vsel %vm2404, %v2394, %v2207
  %v2412 = vsel %vm2404, %v2395, %v2209
  %v2413 = vsel %vm2404, %v2396, %v2211
  %v2414 = vsel %vm2404, %v2397, %v2213
  %v2415 = vsel %vm2404, %v2398, %v2215
  %v2416 = vsel %vm2404, %v2399, %v2217
  %v2417 = vsel %vm2404, %v2400, %v2219
  %v2418 = vsel %vm2404, %v2401, %v2221
  %v2419 = vsel %vm2404, %v2402, %v2223
  %v2420 = vsel %vm2404, %v2403, %v2225
  %vm2421 = vcmask 523264
  %v2422 = vsel %vm2421, %v2405, %v2259
  %v2423 = vsel %vm2421, %v2406, %v2261
  %v2424 = vsel %vm2421, %v2407, %v2263
  %v2425 = vsel %vm2421, %v2408, %v2265
  %v2426 = vsel %vm2421, %v2409, %v2267
  %v2427 = vsel %vm2421, %v2410, %v2269
  %v2428 = vsel %vm2421, %v2411, %v2271
  %v2429 = vsel %vm2421, %v2412, %v2273
  %v2430 = vsel %vm2421, %v2413, %v2275
  %v2431 = vsel %vm2421, %v2414, %v2277
  %v2432 = vsel %vm2421, %v2415, %v2279
  %v2433 = vsel %vm2421, %v2416, %v2281
  %v2434 = vsel %vm2421, %v2417, %v2283
  %v2435 = vsel %vm2421, %v2418, %v2285
  %v2436 = vsel %vm2421, %v2419, %v2287
  %v2437 = vsel %vm2421, %v2420, %v2289
  %v2438 = vpack.c.bf16 %v2423, %v2422
  %v2439 = vpack.c.bf16 %v2425, %v2424
  %v2440 = vpack.c.bf16 %v2427, %v2426
  %v2441 = vpack.c.bf16 %v2429, %v2428
  %v2442 = vpack.c.bf16 %v2431, %v2430
  %v2443 = vpack.c.bf16 %v2433, %v2432
  %v2444 = vpack.c.bf16 %v2435, %v2434
  %v2445 = vpack.c.bf16 %v2437, %v2436
  %v2446 = vld [vmem:[%s2] sm:$0xf]
  %v2447 = vld [vmem:[%s2 + $0x4] sm:$0xf]
  %v2448 = vld [vmem:[%s2 + $0x8] sm:$0xf]
  %v2449 = vld [vmem:[%s2 + $0xc] sm:$0xf]
  %v2450 = vld [vmem:[%s2 + $0x10] sm:$0xf]
  %v2451 = vld [vmem:[%s2 + $0x14] sm:$0xf]
  %v2452 = vld [vmem:[%s2 + $0x18] sm:$0xf]
  %v2453 = vld [vmem:[%s2 + $0x1c] sm:$0xf]
  %v2454 = vld [vmem:[%s2 + $0x20] sm:$0xf]
  %v2455 = vld [vmem:[%s0] ss:$2 sm:$0xff]
  %s2456 = scalar_lea.vmem %s0, 32
  %v2457 = vld [vmem:[%s2456] ss:$2 sm:$0xff]
  %s2458 = scalar_lea.vmem %s0, 64
  %v2459 = vld [vmem:[%s2458] ss:$2 sm:$0xff]
  %s2460 = scalar_lea.vmem %s0, 96
  %v2461 = vld [vmem:[%s2460] ss:$2 sm:$0xff]
  %s2462 = scalar_lea.vmem %s0, 128
  %v2463 = vld [vmem:[%s2462] ss:$2 sm:$0xff]
  %s2464 = scalar_lea.vmem %s0, 160
  %v2465 = vld [vmem:[%s2464] ss:$2 sm:$0xff]
  %s2466 = scalar_lea.vmem %s0, 192
  %v2467 = vld [vmem:[%s2466] ss:$2 sm:$0xff]
  %s2468 = scalar_lea.vmem %s0, 224
  %v2469 = vld [vmem:[%s2468] ss:$2 sm:$0xff]
  %s2470 = scalar_lea.vmem %s0, 256
  %v2471 = vld [vmem:[%s2470] ss:$2 sm:$0xff]
  %s2472 = scalar_lea.vmem %s0, 288
  %v2473 = vld [vmem:[%s2472] ss:$2 sm:$0xff]
  %s2474 = scalar_lea.vmem %s0, 320
  %v2475 = vld [vmem:[%s2474] ss:$2 sm:$0xff]
  %s2476 = scalar_lea.vmem %s0, 352
  %v2477 = vld [vmem:[%s2476] ss:$2 sm:$0xff]
  %s2478 = scalar_lea.vmem %s0, 384
  %v2479 = vld [vmem:[%s2478] ss:$2 sm:$0xff]
  %s2480 = scalar_lea.vmem %s0, 416
  %v2481 = vld [vmem:[%s2480] ss:$2 sm:$0xff]
  %s2482 = scalar_lea.vmem %s0, 448
  %v2483 = vld [vmem:[%s2482] ss:$2 sm:$0xff]
  %s2484 = scalar_lea.vmem %s0, 480
  %v2485 = vld [vmem:[%s2484] ss:$2 sm:$0xff]
  %v2486 = vpack.c.bf16 %v2457, %v2455
  %v2487 = vpack.c.bf16 %v2461, %v2459
  %v2488 = vpack.c.bf16 %v2465, %v2463
  %v2489 = vpack.c.bf16 %v2469, %v2467
  %v2490 = vpack.c.bf16 %v2473, %v2471
  %v2491 = vpack.c.bf16 %v2477, %v2475
  %v2492 = vpack.c.bf16 %v2481, %v2479
  %v2493 = vpack.c.bf16 %v2485, %v2483
  %v2494 = vld [vmem:[%s3] sm:$0x3]
  %v2496 = vsel %vm26, %v2486, 0
  %v2499 = vsel %vm26, %v2487, 0
  %v2502 = vsel %vm26, %v2488, 0
  %v2505 = vsel %vm26, %v2489, 0
  %v2508 = vsel %vm26, %v2490, 0
  %v2511 = vsel %vm26, %v2491, 0
  %v2514 = vsel %vm26, %v2492, 0
  %v2517 = vsel %vm26, %v2493, 0
  %v2520 = vsel %vm1251, %v2494, 0
  %2522 = vmatprep.subr.bf16.mxu0 0
  %2523 = vmatpush1.bf16.msra.mxu0 %v2520
  %2524 = vmatprep.subr.bf16.mxu0 0
  %2525 = vmatpush1.bf16.msra.mxu0 0
  %2526 = vmatprep.subr.bf16.mxu0 0
  %2527 = vmatpush1.bf16.msra.mxu0 0
  %2528 = vmatprep.subr.bf16.mxu0 0
  %2529 = vmatpush1.bf16.msra.mxu0 0
  %2530 = vmatprep.subr.bf16.mxu0 0
  %2531 = vmatpush1.bf16.msra.mxu0 0
  %2532 = vmatprep.subr.bf16.mxu0 0
  %2533 = vmatpush1.bf16.msra.mxu0 0
  %2534 = vmatprep.subr.bf16.mxu0 0
  %2535 = vmatpush1.bf16.msra.mxu0 0
  %2536 = vmatprep.subr.bf16.mxu0 0
  %2537 = vmatpush1.bf16.msra.mxu0 0
  %2538 = vmatprep.subr.bf16.mxu0 0
  %2539 = vmatpush1.bf16.msra.mxu0 0
  %2540 = vmatprep.subr.bf16.mxu0 0
  %2541 = vmatpush1.bf16.msra.mxu0 0
  %2542 = vmatprep.subr.bf16.mxu0 0
  %2543 = vmatpush1.bf16.msra.mxu0 0
  %2544 = vmatprep.subr.bf16.mxu0 0
  %2545 = vmatpush1.bf16.msra.mxu0 0
  %2546 = vmatprep.subr.bf16.mxu0 0
  %2547 = vmatpush1.bf16.msra.mxu0 0
  %2548 = vmatprep.subr.bf16.mxu0 0
  %2549 = vmatpush1.bf16.msra.mxu0 0
  %2550 = vmatprep.subr.bf16.mxu0 0
  %2551 = vmatpush1.bf16.msra.mxu0 0
  %2552 = vmatprep.subr.bf16.mxu0 0
  %2553 = vmatpush1.bf16.msra.mxu0 0
  %2554 = vmatprep.mubr.bf16.mxu0 0
  %2555 = vmatmul.mubr.bf16.gmra.mrb[0].mxu0 %v2496
  %v2556 = vpop.f32.mrb[0].mxu0
  %v2557 = vadd.f32 0.0, %v2556
  %v2558 = vpop.f32.mrb[0].mxu0
  %v2559 = vpop.f32.mrb[0].mxu0
  %v2560 = vadd.f32 0.0, %v2559
  %v2561 = vpop.f32.mrb[0].mxu0
  %2562 = vmatprep.mubr.bf16.mxu0 0
  %2563 = vmatmul.mubr.bf16.gmra.mrb[0].mxu0 %v2499
  %v2564 = vpop.f32.mrb[0].mxu0
  %v2565 = vadd.f32 0.0, %v2564
  %v2566 = vpop.f32.mrb[0].mxu0
  %v2567 = vpop.f32.mrb[0].mxu0
  %v2568 = vadd.f32 0.0, %v2567
  %v2569 = vpop.f32.mrb[0].mxu0
  %2570 = vmatprep.mubr.bf16.mxu0 0
  %2571 = vmatmul.mubr.bf16.gmra.mrb[0].mxu0 %v2502
  %v2572 = vpop.f32.mrb[0].mxu0
  %v2573 = vadd.f32 0.0, %v2572
  %v2574 = vpop.f32.mrb[0].mxu0
  %v2575 = vpop.f32.mrb[0].mxu0
  %v2576 = vadd.f32 0.0, %v2575
  %v2577 = vpop.f32.mrb[0].mxu0
  %2578 = vmatprep.mubr.bf16.mxu0 0
  %2579 = vmatmul.mubr.bf16.gmra.mrb[0].mxu0 %v2505
  %v2580 = vpop.f32.mrb[0].mxu0
  %v2581 = vadd.f32 0.0, %v2580
  %v2582 = vpop.f32.mrb[0].mxu0
  %v2583 = vpop.f32.mrb[0].mxu0
  %v2584 = vadd.f32 0.0, %v2583
  %v2585 = vpop.f32.mrb[0].mxu0
  %2586 = vmatprep.mubr.bf16.mxu0 0
  %2587 = vmatmul.mubr.bf16.gmra.mrb[0].mxu0 %v2508
  %v2588 = vpop.f32.mrb[0].mxu0
  %v2589 = vadd.f32 0.0, %v2588
  %v2590 = vpop.f32.mrb[0].mxu0
  %v2591 = vpop.f32.mrb[0].mxu0
  %v2592 = vadd.f32 0.0, %v2591
  %v2593 = vpop.f32.mrb[0].mxu0
  %2594 = vmatprep.mubr.bf16.mxu0 0
  %2595 = vmatmul.mubr.bf16.gmra.mrb[0].mxu0 %v2511
  %v2596 = vpop.f32.mrb[0].mxu0
  %v2597 = vadd.f32 0.0, %v2596
  %v2598 = vpop.f32.mrb[0].mxu0
  %v2599 = vpop.f32.mrb[0].mxu0
  %v2600 = vadd.f32 0.0, %v2599
  %v2601 = vpop.f32.mrb[0].mxu0
  %2602 = vmatprep.mubr.bf16.mxu0 0
  %2603 = vmatmul.mubr.bf16.gmra.mrb[0].mxu0 %v2514
  %v2604 = vpop.f32.mrb[0].mxu0
  %v2605 = vadd.f32 0.0, %v2604
  %v2606 = vpop.f32.mrb[0].mxu0
  %v2607 = vpop.f32.mrb[0].mxu0
  %v2608 = vadd.f32 0.0, %v2607
  %v2609 = vpop.f32.mrb[0].mxu0
  %2610 = vmatprep.mubr.bf16.mxu0 0
  %2611 = vmatmul.mubr.bf16.gmra.mrb[0].mxu0 %v2517
  %v2612 = vpop.f32.mrb[0].mxu0
  %v2613 = vadd.f32 0.0, %v2612
  %v2614 = vpop.f32.mrb[0].mxu0
  %v2615 = vpop.f32.mrb[0].mxu0
  %v2616 = vadd.f32 0.0, %v2615
  %v2617 = vpop.f32.mrb[0].mxu0
  %2618 = vdwg.mxu0
  %v2628 = vunpack.c.l.b16 %v2446
  %v2629 = vunpack.c.l.b16 %v2447
  %v2630 = vunpack.c.l.b16 %v2448
  %v2631 = vunpack.c.l.b16 %v2449
  %v2632 = vunpack.c.l.b16 %v2450
  %v2633 = vunpack.c.l.b16 %v2451
  %v2634 = vunpack.c.l.b16 %v2452
  %v2635 = vunpack.c.l.b16 %v2453
  %v2636 = vunpack.c.l.b16 %v2454
  %v2637 = vpack.c.b16 %v2629, %v2628
  %v2638 = vpack.c.b16 %v2631, %v2630
  %v2639 = vpack.c.b16 %v2633, %v2632
  %v2640 = vpack.c.b16 %v2635, %v2634
  %v2641 = vpack.c.b16 %v2636, %v2636
  %vm2646 = vcmask 588800
  %v2648 = vsel %vm2646, %v2438, 0
  %v2651 = vsel %vm2646, %v2439, 0
  %v2654 = vsel %vm2646, %v2440, 0
  %v2657 = vsel %vm2646, %v2441, 0
  %v2660 = vsel %vm2646, %v2442, 0
  %v2663 = vsel %vm2646, %v2443, 0
  %v2666 = vsel %vm2646, %v2444, 0
  %v2669 = vsel %vm2646, %v2445, 0
  %vm2671 = vcmask 1043456
  %v2673 = vsel %vm2671, %v2641, 0
  %2675 = vmatprep.subr.bf16.mxu0 0
  %2676 = vmatpush1.bf16.msra.mxu0 %v2637
  %2677 = vmatprep.subr.bf16.mxu0 0
  %2678 = vmatpush1.bf16.msra.mxu0 %v2638
  %2679 = vmatprep.subr.bf16.mxu0 0
  %2680 = vmatpush1.bf16.msra.mxu0 %v2639
  %2681 = vmatprep.subr.bf16.mxu0 0
  %2682 = vmatpush1.bf16.msra.mxu0 %v2640
  %2683 = vmatprep.subr.bf16.mxu0 0
  %2684 = vmatpush1.bf16.msra.mxu0 %v2673
  %2685 = vmatprep.subr.bf16.mxu0 0
  %2686 = vmatpush1.bf16.msra.mxu0 0
  %2687 = vmatprep.subr.bf16.mxu0 0
  %2688 = vmatpush1.bf16.msra.mxu0 0
  %2689 = vmatprep.subr.bf16.mxu0 0
  %2690 = vmatpush1.bf16.msra.mxu0 0
  %2691 = vmatprep.subr.bf16.mxu0 0
  %2692 = vmatpush1.bf16.msra.mxu0 0
  %2693 = vmatprep.subr.bf16.mxu0 0
  %2694 = vmatpush1.bf16.msra.mxu0 0
  %2695 = vmatprep.subr.bf16.mxu0 0
  %2696 = vmatpush1.bf16.msra.mxu0 0
  %2697 = vmatprep.subr.bf16.mxu0 0
  %2698 = vmatpush1.bf16.msra.mxu0 0
  %2699 = vmatprep.subr.bf16.mxu0 0
  %2700 = vmatpush1.bf16.msra.mxu0 0
  %2701 = vmatprep.subr.bf16.mxu0 0
  %2702 = vmatpush1.bf16.msra.mxu0 0
  %2703 = vmatprep.subr.bf16.mxu0 0
  %2704 = vmatpush1.bf16.msra.mxu0 0
  %2705 = vmatprep.subr.bf16.mxu0 0
  %2706 = vmatpush1.bf16.msra.mxu0 0
  %2707 = vmatprep.mubr.bf16.mxu0 0
  %2708 = vmatmul.mubr.bf16.gmra.mrb[0].mxu0 %v2648
  %v2709 = vpop.f32.mrb[0].mxu0
  %v2710 = vadd.f32 %v2557, %v2709
  %v2711 = vpop.f32.mrb[0].mxu0
  %v2712 = vpop.f32.mrb[0].mxu0
  %v2713 = vadd.f32 %v2560, %v2712
  %v2714 = vpop.f32.mrb[0].mxu0
  %2715 = vmatprep.mubr.bf16.mxu0 0
  %2716 = vmatmul.mubr.bf16.gmra.mrb[0].mxu0 %v2651
  %v2717 = vpop.f32.mrb[0].mxu0
  %v2718 = vadd.f32 %v2565, %v2717
  %v2719 = vpop.f32.mrb[0].mxu0
  %v2720 = vpop.f32.mrb[0].mxu0
  %v2721 = vadd.f32 %v2568, %v2720
  %v2722 = vpop.f32.mrb[0].mxu0
  %2723 = vmatprep.mubr.bf16.mxu0 0
  %2724 = vmatmul.mubr.bf16.gmra.mrb[0].mxu0 %v2654
  %v2725 = vpop.f32.mrb[0].mxu0
  %v2726 = vadd.f32 %v2573, %v2725
  %v2727 = vpop.f32.mrb[0].mxu0
  %v2728 = vpop.f32.mrb[0].mxu0
  %v2729 = vadd.f32 %v2576, %v2728
  %v2730 = vpop.f32.mrb[0].mxu0
  %2731 = vmatprep.mubr.bf16.mxu0 0
  %2732 = vmatmul.mubr.bf16.gmra.mrb[0].mxu0 %v2657
  %v2733 = vpop.f32.mrb[0].mxu0
  %v2734 = vadd.f32 %v2581, %v2733
  %v2735 = vpop.f32.mrb[0].mxu0
  %v2736 = vpop.f32.mrb[0].mxu0
  %v2737 = vadd.f32 %v2584, %v2736
  %v2738 = vpop.f32.mrb[0].mxu0
  %2739 = vmatprep.mubr.bf16.mxu0 0
  %2740 = vmatmul.mubr.bf16.gmra.mrb[0].mxu0 %v2660
  %v2741 = vpop.f32.mrb[0].mxu0
  %v2742 = vadd.f32 %v2589, %v2741
  %v2743 = vpop.f32.mrb[0].mxu0
  %v2744 = vpop.f32.mrb[0].mxu0
  %v2745 = vadd.f32 %v2592, %v2744
  %v2746 = vpop.f32.mrb[0].mxu0
  %2747 = vmatprep.mubr.bf16.mxu0 0
  %2748 = vmatmul.mubr.bf16.gmra.mrb[0].mxu0 %v2663
  %v2749 = vpop.f32.mrb[0].mxu0
  %v2750 = vadd.f32 %v2597, %v2749
  %v2751 = vpop.f32.mrb[0].mxu0
  %v2752 = vpop.f32.mrb[0].mxu0
  %v2753 = vadd.f32 %v2600, %v2752
  %v2754 = vpop.f32.mrb[0].mxu0
  %2755 = vmatprep.mubr.bf16.mxu0 0
  %2756 = vmatmul.mubr.bf16.gmra.mrb[0].mxu0 %v2666
  %v2757 = vpop.f32.mrb[0].mxu0
  %v2758 = vadd.f32 %v2605, %v2757
  %v2759 = vpop.f32.mrb[0].mxu0
  %v2760 = vpop.f32.mrb[0].mxu0
  %v2761 = vadd.f32 %v2608, %v2760
  %v2762 = vpop.f32.mrb[0].mxu0
  %2763 = vmatprep.mubr.bf16.mxu0 0
  %2764 = vmatmul.mubr.bf16.gmra.mrb[0].mxu0 %v2669
  %v2765 = vpop.f32.mrb[0].mxu0
  %v2766 = vadd.f32 %v2613, %v2765
  %v2767 = vpop.f32.mrb[0].mxu0
  %v2768 = vpop.f32.mrb[0].mxu0
  %v2769 = vadd.f32 %v2616, %v2768
  %v2770 = vpop.f32.mrb[0].mxu0
  %2771 = vdwg.mxu0
  %2772 = vmatprep.subr.mxu0 0.0
  %2773 = vmatpush1.msra.mxu0 %v2710
  %2774 = vmatprep.subr.mxu0 0.0
  %2775 = vmatpush1.msra.mxu0 %v2713
  %2776 = vmatprep.subr.mxu0 0.0
  %2777 = vmatpush1.msra.mxu0 %v2718
  %2778 = vmatprep.subr.mxu0 0.0
  %2779 = vmatpush1.msra.mxu0 %v2721
  %2780 = vmatprep.subr.mxu0 0.0
  %2781 = vmatpush1.msra.mxu0 %v2726
  %2782 = vmatprep.subr.mxu0 0.0
  %2783 = vmatpush1.msra.mxu0 %v2729
  %2784 = vmatprep.subr.mxu0 0.0
  %2785 = vmatpush1.msra.mxu0 %v2734
  %2786 = vmatprep.subr.mxu0 0.0
  %2787 = vmatpush1.msra.mxu0 %v2737
  %2788 = vmatprep.subr.mxu0 0.0
  %2789 = vmatpush1.msra.mxu0 %v2742
  %2790 = vmatprep.subr.mxu0 0.0
  %2791 = vmatpush1.msra.mxu0 %v2745
  %2792 = vmatprep.subr.mxu0 0.0
  %2793 = vmatpush1.msra.mxu0 %v2750
  %2794 = vmatprep.subr.mxu0 0.0
  %2795 = vmatpush1.msra.mxu0 %v2753
  %2796 = vmatprep.subr.mxu0 0.0
  %2797 = vmatpush1.msra.mxu0 %v2758
  %2798 = vmatprep.subr.mxu0 0.0
  %2799 = vmatpush1.msra.mxu0 %v2761
  %2800 = vmatprep.subr.mxu0 0.0
  %2801 = vmatpush1.msra.mxu0 %v2766
  %2802 = vmatprep.subr.mxu0 0.0
  %2803 = vmatpush1.msra.mxu0 %v2769
  %2804 = vmatprep.subr.mxu0 0.0
  %2805 = vmatpush1.msra.mxu0 0.0
  %2806 = vmatprep.subr.mxu0 0.0
  %2807 = vmatpush1.msra.mxu0 0.0
  %2808 = vmatprep.subr.mxu0 0.0
  %2809 = vmatpush1.msra.mxu0 0.0
  %2810 = vmatprep.subr.mxu0 0.0
  %2811 = vmatpush1.msra.mxu0 0.0
  %2812 = vmatprep.subr.mxu0 0.0
  %2813 = vmatpush1.msra.mxu0 0.0
  %2814 = vmatprep.subr.mxu0 0.0
  %2815 = vmatpush1.msra.mxu0 0.0
  %2816 = vmatprep.subr.mxu0 0.0
  %2817 = vmatpush1.msra.mxu0 0.0
  %2818 = vmatprep.subr.mxu0 0.0
  %2819 = vmatpush1.msra.mxu0 0.0
  %2820 = vmatprep.subr.mxu0 0.0
  %2821 = vmatpush1.msra.mxu0 0.0
  %2822 = vmatprep.subr.mxu0 0.0
  %2823 = vmatpush1.msra.mxu0 0.0
  %2824 = vmatprep.subr.mxu0 0.0
  %2825 = vmatpush1.msra.mxu0 0.0
  %2826 = vmatprep.subr.mxu0 0.0
  %2827 = vmatpush1.msra.mxu0 0.0
  %2828 = vmatprep.subr.mxu0 0.0
  %2829 = vmatpush1.msra.mxu0 0.0
  %2830 = vmatprep.subr.mxu0 0.0
  %2831 = vmatpush1.msra.mxu0 0.0
  %2832 = vmatprep.subr.mxu0 0.0
  %2833 = vmatpush1.msra.mxu0 0.0
  %2834 = vmatprep.subr.mxu0 0.0
  %2835 = vmatpush1.msra.mxu0 0.0
  %2836 = vmatprep.mubr.f32.mxu0 0.0
  %2837 = vmatmul.mubr.f32.gmra.mrb[0].mxu0 1.0
  %v2838 = vpop.f32.mrb[0].mxu0
  %v2839 = vadd.f32 0.0, %v2838
  %v2840 = vpop.f32.mrb[0].mxu0
  %2841 = vdwg.mxu0
  %v2842 = vmul.f32 %v2839, 0.0078125
  %v2843 = vlaneseq
  %v2844 = vshrl.u32 %v2843, 7
  %v2845 = vsub.s32 0, %v2844
  %v2846 = vrot.slane %v2842, %v2845
  %v2847 = vsub.f32 %v2710, %v2846
  %v2848 = vsub.f32 %v2713, %v2846
  %v2849 = vsub.f32 %v2718, %v2846
  %v2850 = vsub.f32 %v2721, %v2846
  %v2851 = vsub.f32 %v2726, %v2846
  %v2852 = vsub.f32 %v2729, %v2846
  %v2853 = vsub.f32 %v2734, %v2846
  %v2854 = vsub.f32 %v2737, %v2846
  %v2855 = vsub.f32 %v2742, %v2846
  %v2856 = vsub.f32 %v2745, %v2846
  %v2857 = vsub.f32 %v2750, %v2846
  %v2858 = vsub.f32 %v2753, %v2846
  %v2859 = vsub.f32 %v2758, %v2846
  %v2860 = vsub.f32 %v2761, %v2846
  %v2861 = vsub.f32 %v2766, %v2846
  %v2862 = vsub.f32 %v2769, %v2846
  %v2863 = vmul.f32 %v2847, %v2847
  %v2864 = vmul.f32 %v2848, %v2848
  %v2865 = vmul.f32 %v2849, %v2849
  %v2866 = vmul.f32 %v2850, %v2850
  %v2867 = vmul.f32 %v2851, %v2851
  %v2868 = vmul.f32 %v2852, %v2852
  %v2869 = vmul.f32 %v2853, %v2853
  %v2870 = vmul.f32 %v2854, %v2854
  %v2871 = vmul.f32 %v2855, %v2855
  %v2872 = vmul.f32 %v2856, %v2856
  %v2873 = vmul.f32 %v2857, %v2857
  %v2874 = vmul.f32 %v2858, %v2858
  %v2875 = vmul.f32 %v2859, %v2859
  %v2876 = vmul.f32 %v2860, %v2860
  %v2877 = vmul.f32 %v2861, %v2861
  %v2878 = vmul.f32 %v2862, %v2862
  %2879 = vmatprep.subr.mxu0 0.0
  %2880 = vmatpush1.msra.mxu0 %v2863
  %2881 = vmatprep.subr.mxu0 0.0
  %2882 = vmatpush1.msra.mxu0 %v2864
  %2883 = vmatprep.subr.mxu0 0.0
  %2884 = vmatpush1.msra.mxu0 %v2865
  %2885 = vmatprep.subr.mxu0 0.0
  %2886 = vmatpush1.msra.mxu0 %v2866
  %2887 = vmatprep.subr.mxu0 0.0
  %2888 = vmatpush1.msra.mxu0 %v2867
  %2889 = vmatprep.subr.mxu0 0.0
  %2890 = vmatpush1.msra.mxu0 %v2868
  %2891 = vmatprep.subr.mxu0 0.0
  %2892 = vmatpush1.msra.mxu0 %v2869
  %2893 = vmatprep.subr.mxu0 0.0
  %2894 = vmatpush1.msra.mxu0 %v2870
  %2895 = vmatprep.subr.mxu0 0.0
  %2896 = vmatpush1.msra.mxu0 %v2871
  %2897 = vmatprep.subr.mxu0 0.0
  %2898 = vmatpush1.msra.mxu0 %v2872
  %2899 = vmatprep.subr.mxu0 0.0
  %2900 = vmatpush1.msra.mxu0 %v2873
  %2901 = vmatprep.subr.mxu0 0.0
  %2902 = vmatpush1.msra.mxu0 %v2874
  %2903 = vmatprep.subr.mxu0 0.0
  %2904 = vmatpush1.msra.mxu0 %v2875
  %2905 = vmatprep.subr.mxu0 0.0
  %2906 = vmatpush1.msra.mxu0 %v2876
  %2907 = vmatprep.subr.mxu0 0.0
  %2908 = vmatpush1.msra.mxu0 %v2877
  %2909 = vmatprep.subr.mxu0 0.0
  %2910 = vmatpush1.msra.mxu0 %v2878
  %2911 = vmatprep.subr.mxu0 0.0
  %2912 = vmatpush1.msra.mxu0 0.0
  %2913 = vmatprep.subr.mxu0 0.0
  %2914 = vmatpush1.msra.mxu0 0.0
  %2915 = vmatprep.subr.mxu0 0.0
  %2916 = vmatpush1.msra.mxu0 0.0
  %2917 = vmatprep.subr.mxu0 0.0
  %2918 = vmatpush1.msra.mxu0 0.0
  %2919 = vmatprep.subr.mxu0 0.0
  %2920 = vmatpush1.msra.mxu0 0.0
  %2921 = vmatprep.subr.mxu0 0.0
  %2922 = vmatpush1.msra.mxu0 0.0
  %2923 = vmatprep.subr.mxu0 0.0
  %2924 = vmatpush1.msra.mxu0 0.0
  %2925 = vmatprep.subr.mxu0 0.0
  %2926 = vmatpush1.msra.mxu0 0.0
  %2927 = vmatprep.subr.mxu0 0.0
  %2928 = vmatpush1.msra.mxu0 0.0
  %2929 = vmatprep.subr.mxu0 0.0
  %2930 = vmatpush1.msra.mxu0 0.0
  %2931 = vmatprep.subr.mxu0 0.0
  %2932 = vmatpush1.msra.mxu0 0.0
  %2933 = vmatprep.subr.mxu0 0.0
  %2934 = vmatpush1.msra.mxu0 0.0
  %2935 = vmatprep.subr.mxu0 0.0
  %2936 = vmatpush1.msra.mxu0 0.0
  %2937 = vmatprep.subr.mxu0 0.0
  %2938 = vmatpush1.msra.mxu0 0.0
  %2939 = vmatprep.subr.mxu0 0.0
  %2940 = vmatpush1.msra.mxu0 0.0
  %2941 = vmatprep.subr.mxu0 0.0
  %2942 = vmatpush1.msra.mxu0 0.0
  %2943 = vmatprep.mubr.f32.mxu0 0.0
  %2944 = vmatmul.mubr.f32.gmra.mrb[0].mxu0 1.0
  %v2945 = vpop.f32.mrb[0].mxu0
  %v2946 = vadd.f32 0.0, %v2945
  %v2947 = vpop.f32.mrb[0].mxu0
  %2948 = vdwg.mxu0
  %v2949 = vmul.f32 %v2946, 0.0078125
  %v2950 = vadd.f32 %v2949, 1e-05
  %v2951 = vrsqrt.pop %v2950
  %v2952 = vmul.f32 %v2951, %v24
  %v2953 = vlaneseq
  %v2954 = vshrl.u32 %v2953, 7
  %v2955 = vsub.s32 0, %v2954
  %v2956 = vrot.slane %v2952, %v2955
  %v2957 = vmul.f32 %v2847, %v2956
  %v2958 = vmul.f32 %v2848, %v2956
  %v2959 = vmul.f32 %v2849, %v2956
  %v2960 = vmul.f32 %v2850, %v2956
  %v2961 = vmul.f32 %v2851, %v2956
  %v2962 = vmul.f32 %v2852, %v2956
  %v2963 = vmul.f32 %v2853, %v2956
  %v2964 = vmul.f32 %v2854, %v2956
  %v2965 = vmul.f32 %v2855, %v2956
  %v2966 = vmul.f32 %v2856, %v2956
  %v2967 = vmul.f32 %v2857, %v2956
  %v2968 = vmul.f32 %v2858, %v2956
  %v2969 = vmul.f32 %v2859, %v2956
  %v2970 = vmul.f32 %v2860, %v2956
  %v2971 = vmul.f32 %v2861, %v2956
  %v2972 = vmul.f32 %v2862, %v2956
  %v2973 = vadd.f32 %v2957, %v1557
  %v2974 = vadd.f32 %v2958, %v1557
  %v2975 = vadd.f32 %v2959, %v1557
  %v2976 = vadd.f32 %v2960, %v1557
  %v2977 = vadd.f32 %v2961, %v1557
  %v2978 = vadd.f32 %v2962, %v1557
  %v2979 = vadd.f32 %v2963, %v1557
  %v2980 = vadd.f32 %v2964, %v1557
  %v2981 = vadd.f32 %v2965, %v1557
  %v2982 = vadd.f32 %v2966, %v1557
  %v2983 = vadd.f32 %v2967, %v1557
  %v2984 = vadd.f32 %v2968, %v1557
  %v2985 = vadd.f32 %v2969, %v1557
  %v2986 = vadd.f32 %v2970, %v1557
  %v2987 = vadd.f32 %v2971, %v1557
  %v2988 = vadd.f32 %v2972, %v1557
  %v2989 = vmax.f32 %v2973, 0.0
  %v2990 = vmax.f32 %v2974, 0.0
  %v2991 = vmax.f32 %v2975, 0.0
  %v2992 = vmax.f32 %v2976, 0.0
  %v2993 = vmax.f32 %v2977, 0.0
  %v2994 = vmax.f32 %v2978, 0.0
  %v2995 = vmax.f32 %v2979, 0.0
  %v2996 = vmax.f32 %v2980, 0.0
  %v2997 = vmax.f32 %v2981, 0.0
  %v2998 = vmax.f32 %v2982, 0.0
  %v2999 = vmax.f32 %v2983, 0.0
  %v3000 = vmax.f32 %v2984, 0.0
  %v3001 = vmax.f32 %v2985, 0.0
  %v3002 = vmax.f32 %v2986, 0.0
  %v3003 = vmax.f32 %v2987, 0.0
  %v3004 = vmax.f32 %v2988, 0.0
  %3005 = vst.msk [vmem:[%s6] sm:$0xff] %vm1079, %v2989
  %3006 = vst.msk [vmem:[%s6 + $0x8] sm:$0xff] %vm1079, %v2990
  %3007 = vst.msk [vmem:[%s6 + $0x10] sm:$0xff] %vm1079, %v2991
  %3008 = vst.msk [vmem:[%s6 + $0x18] sm:$0xff] %vm1079, %v2992
  %3009 = vst.msk [vmem:[%s6 + $0x20] sm:$0xff] %vm1079, %v2993
  %3010 = vst.msk [vmem:[%s6 + $0x28] sm:$0xff] %vm1079, %v2994
  %3011 = vst.msk [vmem:[%s6 + $0x30] sm:$0xff] %vm1079, %v2995
  %3012 = vst.msk [vmem:[%s6 + $0x38] sm:$0xff] %vm1079, %v2996
  %3013 = vst.msk [vmem:[%s6 + $0x40] sm:$0xff] %vm1079, %v2997
  %3014 = vst.msk [vmem:[%s6 + $0x48] sm:$0xff] %vm1079, %v2998
  %3015 = vst.msk [vmem:[%s6 + $0x50] sm:$0xff] %vm1079, %v2999
  %3016 = vst.msk [vmem:[%s6 + $0x58] sm:$0xff] %vm1079, %v3000
  %3017 = vst.msk [vmem:[%s6 + $0x60] sm:$0xff] %vm1079, %v3001
  %3018 = vst.msk [vmem:[%s6 + $0x68] sm:$0xff] %vm1079, %v3002
  %3019 = vst.msk [vmem:[%s6 + $0x70] sm:$0xff] %vm1079, %v3003
  %3020 = vst.msk [vmem:[%s6 + $0x78] sm:$0xff] %vm1079, %v3004
  // Predicated region
  $region26: #{tpu_custom_call.1} parent=0 // pred_check
    _
  $region27: #{tpu_custom_call.1} parent=0 // pred_check_branch
    %3022 = sbr.rel (0) target = $region29
  $region28: #{tpu_custom_call.1} parent=0 // pred_region
    _
  $region29: #{tpu_custom_call.1} parent=0 // pred_fallthru
    _
  // Predicated region
  $region30: #{tpu_custom_call.1} parent=0 // pred_check
    _
  $region31: #{tpu_custom_call.1} parent=0 // pred_check_branch
    %3024 = sbr.rel (0) target = $region33
  $region32: #{tpu_custom_call.1} parent=0 // pred_region
    _
  $region33: #{tpu_custom_call.1} parent=0 // pred_fallthru
    _

</llo_original>
